<compile_context>
chip_gen: v7x
topology: tpu7x:2x2x1
jax: 0.10.0
libtpu: 0.0.40
codegen_flags: <defaults>
</compile_context>

<pallas_src>
import jax
import jax.numpy as jnp
from jax.experimental import pallas as pl
from jax.experimental.pallas import tpu as pltpu


# ------------------------------ fused kernel ---------------------------------

def _fused_kernel(x_ref, w1_ref, b1_ref, w2_ref, b2_ref, w3_ref, b3_ref,
                  fcw_ref, fcb_ref, out_ref):
    # x_ref : (1, 9, 9, 225)  [slice, t2, k, m]      (m = t3*25 + u*5 + v)
    # w1_ref: (32, 9)   b1_ref: (32, 1)
    # w2_ref: (9, 32, 32) [t2, cout, cin]   b2_ref: (32, 1)
    # w3_ref: (9, 64, 32) [t3, cout, cin]   b3_ref: (64, 1)
    # fcw_ref: (64, 25)  fcb_ref: (1, 1)    out_ref: (1, 1, 128)
    f32 = jnp.float32
    w1 = w1_ref[...]                                   # (32, 9)
    b1 = b1_ref[...]                                   # (32, 1)

    # conv1 (VPU 9-tap MAC, Cin=1) fused with conv2 (MXU), accumulating over conv2 taps.
    acc2 = jnp.zeros((32, 225), f32)
    for t2 in range(9):
        xt = x_ref[0, t2]                              # (9, 225)
        h1 = w1[:, 0:1] * xt[0:1, :]                   # lane-dense VPU multiply-adds
        for k in range(1, 9):
            h1 = h1 + w1[:, k:k + 1] * xt[k:k + 1, :]
        h1 = jnp.maximum(h1 + b1, 0.0)                 # conv1 output for tap t2 (32, 225)
        acc2 = acc2 + jnp.dot(w2_ref[t2], h1, preferred_element_type=f32)
    h2 = jnp.maximum(acc2 + b2_ref[...], 0.0)          # conv2 output (32, 225)

    # conv3 (MXU): columns of h2 are already grouped by conv3 tap t3.
    acc3 = jnp.zeros((64, 25), f32)
    for t3 in range(9):
        acc3 = acc3 + jnp.dot(w3_ref[t3], h2[:, t3 * 25:(t3 + 1) * 25],
                              preferred_element_type=f32)
    h3 = jnp.maximum(acc3 + b3_ref[...], 0.0)          # conv3 output (64, 25) == (64, 5, 5)

    # AdaptiveMaxPool2d((5, 5)) is the identity here (conv3 output is already 5x5).
    # Linear(1600, 1): VPU multiply + full reduce, folded into the epilogue.
    red = jnp.sum(h3 * fcw_ref[...], axis=(0, 1), keepdims=True)   # (1, 1)
    val = red + fcb_ref[...]                                       # (1, 1)
    out_ref[...] = jnp.broadcast_to(val, (1, 1, 128)).astype(out_ref.dtype)


# ------------------------------ forward wrapper -------------------------------

def _conv_stack_out_size(s):
    for _ in range(3):
        s = (s - 3) // 3 + 1
    return s


@jax.jit
def text_classifier2_forward(x, params):
    """x: (slices, 1, H, W) float32 (NCHW, like the PyTorch module). Returns (1, slices)."""
    if x.ndim == 4:
        x = x[:, 0, :, :]          # squeeze the channel axis only (safe for slices == 1)
    N, H, W = x.shape

    if _conv_stack_out_size(H) != 5 or _conv_stack_out_size(W) != 5:
        # TODO(synk): general AdaptiveMaxPool2d path when the conv stack output is not 5x5
        # (the pool is the identity for spatial sizes in [135, 161], which this kernel covers).
        raise NotImplementedError(
            "fused TextClassifier2 kernel requires input spatial dims in [135, 161]")

    # Single cheap rearrangement of the raw input (no per-layer im2col in HBM):
    #   x[n, 27u+9kh3+3kh2+a, 27v+9kw3+3kw2+b] -> xr[n, kh2*3+kw2, a*3+b, (kh3*3+kw3)*25+u*5+v]
    xr = (x[:, :135, :135]
          .reshape(N, 5, 3, 3, 3, 5, 3, 3, 3)          # (N, u, kh3, kh2, a, v, kw3, kw2, b)
          .transpose(0, 3, 7, 4, 8, 2, 6, 1, 5)        # (N, kh2, kw2, a, b, kh3, kw3, u, v)
          .reshape(N, 9, 9, 225))                      # (N, t2, k, m)

    # Weight layouts for the kernel (tiny transposes).
    w1k = params['w1'].reshape(32, 9)                                    # (cout, a*3+b)
    b1k = params['b1'].reshape(32, 1)
    w2k = jnp.transpose(params['w2'], (2, 3, 0, 1)).reshape(9, 32, 32)   # (t2, cout, cin)
    b2k = params['b2'].reshape(32, 1)
    w3k = jnp.transpose(params['w3'], (2, 3, 0, 1)).reshape(9, 64, 32)   # (t3, cout, cin)
    b3k = params['b3'].reshape(64, 1)
    fck = params['fc_w'].reshape(64, 25)                                 # (cout, u*5+v)
    fcb = params['fc_b'].reshape(1, 1)

    out = pl.pallas_call(
        _fused_kernel,
        out_shape=jax.ShapeDtypeStruct((N, 1, 128), jnp.float32),
        grid_spec=pltpu.PrefetchScalarGridSpec(
            num_scalar_prefetch=0,
            grid=(N,),
            in_specs=[
                pl.BlockSpec((1, 9, 9, 225), lambda i: (i, 0, 0, 0)),
                pl.BlockSpec((32, 9), lambda i: (0, 0)),
                pl.BlockSpec((32, 1), lambda i: (0, 0)),
                pl.BlockSpec((9, 32, 32), lambda i: (0, 0, 0)),
                pl.BlockSpec((32, 1), lambda i: (0, 0)),
                pl.BlockSpec((9, 64, 32), lambda i: (0, 0, 0)),
                pl.BlockSpec((64, 1), lambda i: (0, 0)),
                pl.BlockSpec((64, 25), lambda i: (0, 0)),
                pl.BlockSpec((1, 1), lambda i: (0, 0)),
            ],
            out_specs=pl.BlockSpec((1, 1, 128), lambda i: (i, 0, 0)),
        ),
        compiler_params=pltpu.CompilerParams(
            dimension_semantics=("parallel",)),
    )(xr, w1k, b1k, w2k, b2k, w3k, b3k, fck, fcb)

    return out[:, 0, 0].reshape(1, N)                  # matches PyTorch's final transpose(0, 1)


# ------------------------------ params & reference ----------------------------

def init_params(key):
    ks = jax.random.split(key, 8)

    def conv_init(kw, kb, cout, cin):
        std = (2.0 / (cin * 9)) ** 0.5
        w = jax.random.normal(kw, (cout, cin, 3, 3), jnp.float32) * std
        b = jax.random.normal(kb, (cout,), jnp.float32) * 0.01
        return w, b

    w1, b1 = conv_init(ks[0], ks[1], 32, 1)
    w2, b2 = conv_init(ks[2], ks[3], 32, 32)
    w3, b3 = conv_init(ks[4], ks[5], 64, 32)
    fc_w = jax.random.normal(ks[6], (1, 1600), jnp.float32) * (1.0 / 1600.0) ** 0.5
    fc_b = jax.random.normal(ks[7], (1,), jnp.float32) * 0.01
    return dict(w1=w1, b1=b1, w2=w2, b2=b2, w3=w3, b3=b3, fc_w=fc_w, fc_b=fc_b)


def reference_forward(x, params):
    """Plain-JAX reference mirroring the PyTorch module (for correctness checking)."""
    h = x[:, 0:1, :, :] if x.ndim == 4 else x[:, None, :, :]
    for w, b in ((params['w1'], params['b1']),
                 (params['w2'], params['b2']),
                 (params['w3'], params['b3'])):
        h = jax.lax.conv_general_dilated(
            h, w, window_strides=(3, 3), padding='VALID',
            dimension_numbers=('NCHW', 'OIHW', 'NCHW'),
            precision=jax.lax.Precision.HIGHEST)
        h = jnp.maximum(h + b[None, :, None, None], 0.0)
    assert h.shape[2:] == (5, 5)                        # adaptive max pool (5,5) == identity
    z = h.reshape(h.shape[0], -1)                       # (N, 1600), channel-major flatten
    out = jnp.dot(z, params['fc_w'].T, precision=jax.lax.Precision.HIGHEST) + params['fc_b']
    return out.T                                        # (1, N)


# ------------------------------ main ------------------------------------------

if __name__ == "__main__":
    key = jax.random.PRNGKey(0)
    k_x, k_p = jax.random.split(key)

    slices, H, W = 4, 144, 144   # 144 -> 48 -> 16 -> 5 after the three stride-3 convs
    x = jax.random.normal(k_x, (slices, 1, H, W), jnp.float32)
    params = init_params(k_p)

    y = text_classifier2_forward(x, params)
    y = jax.block_until_ready(y)
    assert y.shape == (1, slices), y.shape

    y_ref = reference_forward(x, params)
    assert jnp.allclose(y, y_ref, rtol=1e-2, atol=1e-2), (y, y_ref)

    print("KERNEL_OK")
</pallas_src>

<mosaic_0001>
module attributes {stable_mosaic.version = 11 : i64} {
  func.func @_fused_kernel(%arg0: i32, %arg1: memref<1x9x9x225xf32, #tpu.memory_space<vmem>>, %arg2: memref<32x9xf32, #tpu.memory_space<vmem>>, %arg3: memref<32x1xf32, #tpu.memory_space<vmem>>, %arg4: memref<9x32x32xf32, #tpu.memory_space<vmem>>, %arg5: memref<32x1xf32, #tpu.memory_space<vmem>>, %arg6: memref<9x64x32xf32, #tpu.memory_space<vmem>>, %arg7: memref<64x1xf32, #tpu.memory_space<vmem>>, %arg8: memref<64x25xf32, #tpu.memory_space<vmem>>, %arg9: memref<1x1xf32, #tpu.memory_space<vmem>>, %arg10: memref<1x1x128xf32, #tpu.memory_space<vmem>>) attributes {dimension_semantics = [#tpu.dimension_semantics<parallel>], iteration_bounds = array<i64: 4>, scalar_prefetch = 0 : i64, scratch_operands = 0 : i64, tpu.core_type = #tpu.core_type<tc>, window_params = [{transform_indices = @transform_0, window_bounds = array<i64: 1, 9, 9, 225>}, {pipeline_mode = #tpu.pipeline_mode<synchronous>, transform_indices = @transform_1, window_bounds = array<i64: 32, 9>}, {pipeline_mode = #tpu.pipeline_mode<synchronous>, transform_indices = @transform_2, window_bounds = array<i64: 32, 1>}, {pipeline_mode = #tpu.pipeline_mode<synchronous>, transform_indices = @transform_3, window_bounds = array<i64: 9, 32, 32>}, {pipeline_mode = #tpu.pipeline_mode<synchronous>, transform_indices = @transform_4, window_bounds = array<i64: 32, 1>}, {pipeline_mode = #tpu.pipeline_mode<synchronous>, transform_indices = @transform_5, window_bounds = array<i64: 9, 64, 32>}, {pipeline_mode = #tpu.pipeline_mode<synchronous>, transform_indices = @transform_6, window_bounds = array<i64: 64, 1>}, {pipeline_mode = #tpu.pipeline_mode<synchronous>, transform_indices = @transform_7, window_bounds = array<i64: 64, 25>}, {pipeline_mode = #tpu.pipeline_mode<synchronous>, transform_indices = @transform_8, window_bounds = array<i64: 1, 1>}, {transform_indices = @transform_9, window_bounds = array<i64: 1, 1, 128>}]} {
    %c0 = arith.constant 0 : index
    %c0_0 = arith.constant 0 : index
    %0 = vector.load %arg2[%c0, %c0_0] : memref<32x9xf32, #tpu.memory_space<vmem>>, vector<32x9xf32>
    %c0_1 = arith.constant 0 : index
    %c0_2 = arith.constant 0 : index
    %1 = vector.load %arg3[%c0_1, %c0_2] : memref<32x1xf32, #tpu.memory_space<vmem>>, vector<32x1xf32>
    %cst = arith.constant 0.000000e+00 : f32
    %2 = vector.broadcast %cst : f32 to vector<32x225xf32>
    %c0_3 = arith.constant 0 : index
    %c0_4 = arith.constant 0 : index
    %c0_5 = arith.constant 0 : index
    %c0_6 = arith.constant 0 : index
    %3 = vector.load %arg1[%c0_3, %c0_4, %c0_5, %c0_6] : memref<1x9x9x225xf32, #tpu.memory_space<vmem>>, vector<1x1x9x225xf32>
    %4 = vector.shape_cast %3 : vector<1x1x9x225xf32> to vector<9x225xf32>
    %5 = vector.extract_strided_slice %0 {offsets = [0, 0], sizes = [32, 1], strides = [1, 1]} : vector<32x9xf32> to vector<32x1xf32>
    %6 = vector.extract_strided_slice %4 {offsets = [0, 0], sizes = [1, 225], strides = [1, 1]} : vector<9x225xf32> to vector<1x225xf32>
    %7 = vector.broadcast %5 : vector<32x1xf32> to vector<32x225xf32>
    %8 = vector.broadcast %6 : vector<1x225xf32> to vector<32x225xf32>
    %9 = arith.mulf %7, %8 : vector<32x225xf32>
    %10 = vector.extract_strided_slice %0 {offsets = [0, 1], sizes = [32, 1], strides = [1, 1]} : vector<32x9xf32> to vector<32x1xf32>
    %11 = vector.extract_strided_slice %4 {offsets = [1, 0], sizes = [1, 225], strides = [1, 1]} : vector<9x225xf32> to vector<1x225xf32>
    %12 = vector.broadcast %10 : vector<32x1xf32> to vector<32x225xf32>
    %13 = vector.broadcast %11 : vector<1x225xf32> to vector<32x225xf32>
    %14 = arith.mulf %12, %13 : vector<32x225xf32>
    %15 = arith.addf %9, %14 : vector<32x225xf32>
    %16 = vector.extract_strided_slice %0 {offsets = [0, 2], sizes = [32, 1], strides = [1, 1]} : vector<32x9xf32> to vector<32x1xf32>
    %17 = vector.extract_strided_slice %4 {offsets = [2, 0], sizes = [1, 225], strides = [1, 1]} : vector<9x225xf32> to vector<1x225xf32>
    %18 = vector.broadcast %16 : vector<32x1xf32> to vector<32x225xf32>
    %19 = vector.broadcast %17 : vector<1x225xf32> to vector<32x225xf32>
    %20 = arith.mulf %18, %19 : vector<32x225xf32>
    %21 = arith.addf %15, %20 : vector<32x225xf32>
    %22 = vector.extract_strided_slice %0 {offsets = [0, 3], sizes = [32, 1], strides = [1, 1]} : vector<32x9xf32> to vector<32x1xf32>
    %23 = vector.extract_strided_slice %4 {offsets = [3, 0], sizes = [1, 225], strides = [1, 1]} : vector<9x225xf32> to vector<1x225xf32>
    %24 = vector.broadcast %22 : vector<32x1xf32> to vector<32x225xf32>
    %25 = vector.broadcast %23 : vector<1x225xf32> to vector<32x225xf32>
    %26 = arith.mulf %24, %25 : vector<32x225xf32>
    %27 = arith.addf %21, %26 : vector<32x225xf32>
    %28 = vector.extract_strided_slice %0 {offsets = [0, 4], sizes = [32, 1], strides = [1, 1]} : vector<32x9xf32> to vector<32x1xf32>
    %29 = vector.extract_strided_slice %4 {offsets = [4, 0], sizes = [1, 225], strides = [1, 1]} : vector<9x225xf32> to vector<1x225xf32>
    %30 = vector.broadcast %28 : vector<32x1xf32> to vector<32x225xf32>
    %31 = vector.broadcast %29 : vector<1x225xf32> to vector<32x225xf32>
    %32 = arith.mulf %30, %31 : vector<32x225xf32>
    %33 = arith.addf %27, %32 : vector<32x225xf32>
    %34 = vector.extract_strided_slice %0 {offsets = [0, 5], sizes = [32, 1], strides = [1, 1]} : vector<32x9xf32> to vector<32x1xf32>
    %35 = vector.extract_strided_slice %4 {offsets = [5, 0], sizes = [1, 225], strides = [1, 1]} : vector<9x225xf32> to vector<1x225xf32>
    %36 = vector.broadcast %34 : vector<32x1xf32> to vector<32x225xf32>
    %37 = vector.broadcast %35 : vector<1x225xf32> to vector<32x225xf32>
    %38 = arith.mulf %36, %37 : vector<32x225xf32>
    %39 = arith.addf %33, %38 : vector<32x225xf32>
    %40 = vector.extract_strided_slice %0 {offsets = [0, 6], sizes = [32, 1], strides = [1, 1]} : vector<32x9xf32> to vector<32x1xf32>
    %41 = vector.extract_strided_slice %4 {offsets = [6, 0], sizes = [1, 225], strides = [1, 1]} : vector<9x225xf32> to vector<1x225xf32>
    %42 = vector.broadcast %40 : vector<32x1xf32> to vector<32x225xf32>
    %43 = vector.broadcast %41 : vector<1x225xf32> to vector<32x225xf32>
    %44 = arith.mulf %42, %43 : vector<32x225xf32>
    %45 = arith.addf %39, %44 : vector<32x225xf32>
    %46 = vector.extract_strided_slice %0 {offsets = [0, 7], sizes = [32, 1], strides = [1, 1]} : vector<32x9xf32> to vector<32x1xf32>
    %47 = vector.extract_strided_slice %4 {offsets = [7, 0], sizes = [1, 225], strides = [1, 1]} : vector<9x225xf32> to vector<1x225xf32>
    %48 = vector.broadcast %46 : vector<32x1xf32> to vector<32x225xf32>
    %49 = vector.broadcast %47 : vector<1x225xf32> to vector<32x225xf32>
    %50 = arith.mulf %48, %49 : vector<32x225xf32>
    %51 = arith.addf %45, %50 : vector<32x225xf32>
    %52 = vector.extract_strided_slice %0 {offsets = [0, 8], sizes = [32, 1], strides = [1, 1]} : vector<32x9xf32> to vector<32x1xf32>
    %53 = vector.extract_strided_slice %4 {offsets = [8, 0], sizes = [1, 225], strides = [1, 1]} : vector<9x225xf32> to vector<1x225xf32>
    %54 = vector.broadcast %52 : vector<32x1xf32> to vector<32x225xf32>
    %55 = vector.broadcast %53 : vector<1x225xf32> to vector<32x225xf32>
    %56 = arith.mulf %54, %55 : vector<32x225xf32>
    %57 = arith.addf %51, %56 : vector<32x225xf32>
    %58 = vector.broadcast %1 : vector<32x1xf32> to vector<32x225xf32>
    %59 = arith.addf %57, %58 : vector<32x225xf32>
    %cst_7 = arith.constant 0.000000e+00 : f32
    %60 = vector.broadcast %cst_7 : f32 to vector<32x225xf32>
    %61 = arith.maximumf %59, %60 : vector<32x225xf32>
    %c0_8 = arith.constant 0 : index
    %c0_9 = arith.constant 0 : index
    %c0_10 = arith.constant 0 : index
    %62 = vector.load %arg4[%c0_8, %c0_9, %c0_10] : memref<9x32x32xf32, #tpu.memory_space<vmem>>, vector<1x32x32xf32>
    %63 = vector.shape_cast %62 : vector<1x32x32xf32> to vector<32x32xf32>
    %cst_11 = arith.constant dense<0.000000e+00> : vector<32x225xf32>
    %64 = tpu.matmul %63, %61, %cst_11 {dimension_numbers = #tpu.dot_dimension_numbers<[1], [0], [0], [1], [0, 0, 1, 1], [], []>} : vector<32x32xf32>, vector<32x225xf32>, vector<32x225xf32> -> vector<32x225xf32>
    %65 = arith.addf %2, %64 : vector<32x225xf32>
    %c0_12 = arith.constant 0 : index
    %c1 = arith.constant 1 : index
    %c0_13 = arith.constant 0 : index
    %c0_14 = arith.constant 0 : index
    %66 = vector.load %arg1[%c0_12, %c1, %c0_13, %c0_14] : memref<1x9x9x225xf32, #tpu.memory_space<vmem>>, vector<1x1x9x225xf32>
    %67 = vector.shape_cast %66 : vector<1x1x9x225xf32> to vector<9x225xf32>
    %68 = vector.extract_strided_slice %0 {offsets = [0, 0], sizes = [32, 1], strides = [1, 1]} : vector<32x9xf32> to vector<32x1xf32>
    %69 = vector.extract_strided_slice %67 {offsets = [0, 0], sizes = [1, 225], strides = [1, 1]} : vector<9x225xf32> to vector<1x225xf32>
    %70 = vector.broadcast %68 : vector<32x1xf32> to vector<32x225xf32>
    %71 = vector.broadcast %69 : vector<1x225xf32> to vector<32x225xf32>
    %72 = arith.mulf %70, %71 : vector<32x225xf32>
    %73 = vector.extract_strided_slice %0 {offsets = [0, 1], sizes = [32, 1], strides = [1, 1]} : vector<32x9xf32> to vector<32x1xf32>
    %74 = vector.extract_strided_slice %67 {offsets = [1, 0], sizes = [1, 225], strides = [1, 1]} : vector<9x225xf32> to vector<1x225xf32>
    %75 = vector.broadcast %73 : vector<32x1xf32> to vector<32x225xf32>
    %76 = vector.broadcast %74 : vector<1x225xf32> to vector<32x225xf32>
    %77 = arith.mulf %75, %76 : vector<32x225xf32>
    %78 = arith.addf %72, %77 : vector<32x225xf32>
    %79 = vector.extract_strided_slice %0 {offsets = [0, 2], sizes = [32, 1], strides = [1, 1]} : vector<32x9xf32> to vector<32x1xf32>
    %80 = vector.extract_strided_slice %67 {offsets = [2, 0], sizes = [1, 225], strides = [1, 1]} : vector<9x225xf32> to vector<1x225xf32>
    %81 = vector.broadcast %79 : vector<32x1xf32> to vector<32x225xf32>
    %82 = vector.broadcast %80 : vector<1x225xf32> to vector<32x225xf32>
    %83 = arith.mulf %81, %82 : vector<32x225xf32>
    %84 = arith.addf %78, %83 : vector<32x225xf32>
    %85 = vector.extract_strided_slice %0 {offsets = [0, 3], sizes = [32, 1], strides = [1, 1]} : vector<32x9xf32> to vector<32x1xf32>
    %86 = vector.extract_strided_slice %67 {offsets = [3, 0], sizes = [1, 225], strides = [1, 1]} : vector<9x225xf32> to vector<1x225xf32>
    %87 = vector.broadcast %85 : vector<32x1xf32> to vector<32x225xf32>
    %88 = vector.broadcast %86 : vector<1x225xf32> to vector<32x225xf32>
    %89 = arith.mulf %87, %88 : vector<32x225xf32>
    %90 = arith.addf %84, %89 : vector<32x225xf32>
    %91 = vector.extract_strided_slice %0 {offsets = [0, 4], sizes = [32, 1], strides = [1, 1]} : vector<32x9xf32> to vector<32x1xf32>
    %92 = vector.extract_strided_slice %67 {offsets = [4, 0], sizes = [1, 225], strides = [1, 1]} : vector<9x225xf32> to vector<1x225xf32>
    %93 = vector.broadcast %91 : vector<32x1xf32> to vector<32x225xf32>
    %94 = vector.broadcast %92 : vector<1x225xf32> to vector<32x225xf32>
    %95 = arith.mulf %93, %94 : vector<32x225xf32>
    %96 = arith.addf %90, %95 : vector<32x225xf32>
    %97 = vector.extract_strided_slice %0 {offsets = [0, 5], sizes = [32, 1], strides = [1, 1]} : vector<32x9xf32> to vector<32x1xf32>
    %98 = vector.extract_strided_slice %67 {offsets = [5, 0], sizes = [1, 225], strides = [1, 1]} : vector<9x225xf32> to vector<1x225xf32>
    %99 = vector.broadcast %97 : vector<32x1xf32> to vector<32x225xf32>
    %100 = vector.broadcast %98 : vector<1x225xf32> to vector<32x225xf32>
    %101 = arith.mulf %99, %100 : vector<32x225xf32>
    %102 = arith.addf %96, %101 : vector<32x225xf32>
    %103 = vector.extract_strided_slice %0 {offsets = [0, 6], sizes = [32, 1], strides = [1, 1]} : vector<32x9xf32> to vector<32x1xf32>
    %104 = vector.extract_strided_slice %67 {offsets = [6, 0], sizes = [1, 225], strides = [1, 1]} : vector<9x225xf32> to vector<1x225xf32>
    %105 = vector.broadcast %103 : vector<32x1xf32> to vector<32x225xf32>
    %106 = vector.broadcast %104 : vector<1x225xf32> to vector<32x225xf32>
    %107 = arith.mulf %105, %106 : vector<32x225xf32>
    %108 = arith.addf %102, %107 : vector<32x225xf32>
    %109 = vector.extract_strided_slice %0 {offsets = [0, 7], sizes = [32, 1], strides = [1, 1]} : vector<32x9xf32> to vector<32x1xf32>
    %110 = vector.extract_strided_slice %67 {offsets = [7, 0], sizes = [1, 225], strides = [1, 1]} : vector<9x225xf32> to vector<1x225xf32>
    %111 = vector.broadcast %109 : vector<32x1xf32> to vector<32x225xf32>
    %112 = vector.broadcast %110 : vector<1x225xf32> to vector<32x225xf32>
    %113 = arith.mulf %111, %112 : vector<32x225xf32>
    %114 = arith.addf %108, %113 : vector<32x225xf32>
    %115 = vector.extract_strided_slice %0 {offsets = [0, 8], sizes = [32, 1], strides = [1, 1]} : vector<32x9xf32> to vector<32x1xf32>
    %116 = vector.extract_strided_slice %67 {offsets = [8, 0], sizes = [1, 225], strides = [1, 1]} : vector<9x225xf32> to vector<1x225xf32>
    %117 = vector.broadcast %115 : vector<32x1xf32> to vector<32x225xf32>
    %118 = vector.broadcast %116 : vector<1x225xf32> to vector<32x225xf32>
    %119 = arith.mulf %117, %118 : vector<32x225xf32>
    %120 = arith.addf %114, %119 : vector<32x225xf32>
    %121 = vector.broadcast %1 : vector<32x1xf32> to vector<32x225xf32>
    %122 = arith.addf %120, %121 : vector<32x225xf32>
    %cst_15 = arith.constant 0.000000e+00 : f32
    %123 = vector.broadcast %cst_15 : f32 to vector<32x225xf32>
    %124 = arith.maximumf %122, %123 : vector<32x225xf32>
    %c1_16 = arith.constant 1 : index
    %c0_17 = arith.constant 0 : index
    %c0_18 = arith.constant 0 : index
    %125 = vector.load %arg4[%c1_16, %c0_17, %c0_18] : memref<9x32x32xf32, #tpu.memory_space<vmem>>, vector<1x32x32xf32>
    %126 = vector.shape_cast %125 : vector<1x32x32xf32> to vector<32x32xf32>
    %cst_19 = arith.constant dense<0.000000e+00> : vector<32x225xf32>
    %127 = tpu.matmul %126, %124, %cst_19 {dimension_numbers = #tpu.dot_dimension_numbers<[1], [0], [0], [1], [0, 0, 1, 1], [], []>} : vector<32x32xf32>, vector<32x225xf32>, vector<32x225xf32> -> vector<32x225xf32>
    %128 = arith.addf %65, %127 : vector<32x225xf32>
    %c0_20 = arith.constant 0 : index
    %c2 = arith.constant 2 : index
    %c0_21 = arith.constant 0 : index
    %c0_22 = arith.constant 0 : index
    %129 = vector.load %arg1[%c0_20, %c2, %c0_21, %c0_22] : memref<1x9x9x225xf32, #tpu.memory_space<vmem>>, vector<1x1x9x225xf32>
    %130 = vector.shape_cast %129 : vector<1x1x9x225xf32> to vector<9x225xf32>
    %131 = vector.extract_strided_slice %0 {offsets = [0, 0], sizes = [32, 1], strides = [1, 1]} : vector<32x9xf32> to vector<32x1xf32>
    %132 = vector.extract_strided_slice %130 {offsets = [0, 0], sizes = [1, 225], strides = [1, 1]} : vector<9x225xf32> to vector<1x225xf32>
    %133 = vector.broadcast %131 : vector<32x1xf32> to vector<32x225xf32>
    %134 = vector.broadcast %132 : vector<1x225xf32> to vector<32x225xf32>
    %135 = arith.mulf %133, %134 : vector<32x225xf32>
    %136 = vector.extract_strided_slice %0 {offsets = [0, 1], sizes = [32, 1], strides = [1, 1]} : vector<32x9xf32> to vector<32x1xf32>
    %137 = vector.extract_strided_slice %130 {offsets = [1, 0], sizes = [1, 225], strides = [1, 1]} : vector<9x225xf32> to vector<1x225xf32>
    %138 = vector.broadcast %136 : vector<32x1xf32> to vector<32x225xf32>
    %139 = vector.broadcast %137 : vector<1x225xf32> to vector<32x225xf32>
    %140 = arith.mulf %138, %139 : vector<32x225xf32>
    %141 = arith.addf %135, %140 : vector<32x225xf32>
    %142 = vector.extract_strided_slice %0 {offsets = [0, 2], sizes = [32, 1], strides = [1, 1]} : vector<32x9xf32> to vector<32x1xf32>
    %143 = vector.extract_strided_slice %130 {offsets = [2, 0], sizes = [1, 225], strides = [1, 1]} : vector<9x225xf32> to vector<1x225xf32>
    %144 = vector.broadcast %142 : vector<32x1xf32> to vector<32x225xf32>
    %145 = vector.broadcast %143 : vector<1x225xf32> to vector<32x225xf32>
    %146 = arith.mulf %144, %145 : vector<32x225xf32>
    %147 = arith.addf %141, %146 : vector<32x225xf32>
    %148 = vector.extract_strided_slice %0 {offsets = [0, 3], sizes = [32, 1], strides = [1, 1]} : vector<32x9xf32> to vector<32x1xf32>
    %149 = vector.extract_strided_slice %130 {offsets = [3, 0], sizes = [1, 225], strides = [1, 1]} : vector<9x225xf32> to vector<1x225xf32>
    %150 = vector.broadcast %148 : vector<32x1xf32> to vector<32x225xf32>
    %151 = vector.broadcast %149 : vector<1x225xf32> to vector<32x225xf32>
    %152 = arith.mulf %150, %151 : vector<32x225xf32>
    %153 = arith.addf %147, %152 : vector<32x225xf32>
    %154 = vector.extract_strided_slice %0 {offsets = [0, 4], sizes = [32, 1], strides = [1, 1]} : vector<32x9xf32> to vector<32x1xf32>
    %155 = vector.extract_strided_slice %130 {offsets = [4, 0], sizes = [1, 225], strides = [1, 1]} : vector<9x225xf32> to vector<1x225xf32>
    %156 = vector.broadcast %154 : vector<32x1xf32> to vector<32x225xf32>
    %157 = vector.broadcast %155 : vector<1x225xf32> to vector<32x225xf32>
    %158 = arith.mulf %156, %157 : vector<32x225xf32>
    %159 = arith.addf %153, %158 : vector<32x225xf32>
    %160 = vector.extract_strided_slice %0 {offsets = [0, 5], sizes = [32, 1], strides = [1, 1]} : vector<32x9xf32> to vector<32x1xf32>
    %161 = vector.extract_strided_slice %130 {offsets = [5, 0], sizes = [1, 225], strides = [1, 1]} : vector<9x225xf32> to vector<1x225xf32>
    %162 = vector.broadcast %160 : vector<32x1xf32> to vector<32x225xf32>
    %163 = vector.broadcast %161 : vector<1x225xf32> to vector<32x225xf32>
    %164 = arith.mulf %162, %163 : vector<32x225xf32>
    %165 = arith.addf %159, %164 : vector<32x225xf32>
    %166 = vector.extract_strided_slice %0 {offsets = [0, 6], sizes = [32, 1], strides = [1, 1]} : vector<32x9xf32> to vector<32x1xf32>
    %167 = vector.extract_strided_slice %130 {offsets = [6, 0], sizes = [1, 225], strides = [1, 1]} : vector<9x225xf32> to vector<1x225xf32>
    %168 = vector.broadcast %166 : vector<32x1xf32> to vector<32x225xf32>
    %169 = vector.broadcast %167 : vector<1x225xf32> to vector<32x225xf32>
    %170 = arith.mulf %168, %169 : vector<32x225xf32>
    %171 = arith.addf %165, %170 : vector<32x225xf32>
    %172 = vector.extract_strided_slice %0 {offsets = [0, 7], sizes = [32, 1], strides = [1, 1]} : vector<32x9xf32> to vector<32x1xf32>
    %173 = vector.extract_strided_slice %130 {offsets = [7, 0], sizes = [1, 225], strides = [1, 1]} : vector<9x225xf32> to vector<1x225xf32>
    %174 = vector.broadcast %172 : vector<32x1xf32> to vector<32x225xf32>
    %175 = vector.broadcast %173 : vector<1x225xf32> to vector<32x225xf32>
    %176 = arith.mulf %174, %175 : vector<32x225xf32>
    %177 = arith.addf %171, %176 : vector<32x225xf32>
    %178 = vector.extract_strided_slice %0 {offsets = [0, 8], sizes = [32, 1], strides = [1, 1]} : vector<32x9xf32> to vector<32x1xf32>
    %179 = vector.extract_strided_slice %130 {offsets = [8, 0], sizes = [1, 225], strides = [1, 1]} : vector<9x225xf32> to vector<1x225xf32>
    %180 = vector.broadcast %178 : vector<32x1xf32> to vector<32x225xf32>
    %181 = vector.broadcast %179 : vector<1x225xf32> to vector<32x225xf32>
    %182 = arith.mulf %180, %181 : vector<32x225xf32>
    %183 = arith.addf %177, %182 : vector<32x225xf32>
    %184 = vector.broadcast %1 : vector<32x1xf32> to vector<32x225xf32>
    %185 = arith.addf %183, %184 : vector<32x225xf32>
    %cst_23 = arith.constant 0.000000e+00 : f32
    %186 = vector.broadcast %cst_23 : f32 to vector<32x225xf32>
    %187 = arith.maximumf %185, %186 : vector<32x225xf32>
    %c2_24 = arith.constant 2 : index
    %c0_25 = arith.constant 0 : index
    %c0_26 = arith.constant 0 : index
    %188 = vector.load %arg4[%c2_24, %c0_25, %c0_26] : memref<9x32x32xf32, #tpu.memory_space<vmem>>, vector<1x32x32xf32>
    %189 = vector.shape_cast %188 : vector<1x32x32xf32> to vector<32x32xf32>
    %cst_27 = arith.constant dense<0.000000e+00> : vector<32x225xf32>
    %190 = tpu.matmul %189, %187, %cst_27 {dimension_numbers = #tpu.dot_dimension_numbers<[1], [0], [0], [1], [0, 0, 1, 1], [], []>} : vector<32x32xf32>, vector<32x225xf32>, vector<32x225xf32> -> vector<32x225xf32>
    %191 = arith.addf %128, %190 : vector<32x225xf32>
    %c0_28 = arith.constant 0 : index
    %c3 = arith.constant 3 : index
    %c0_29 = arith.constant 0 : index
    %c0_30 = arith.constant 0 : index
    %192 = vector.load %arg1[%c0_28, %c3, %c0_29, %c0_30] : memref<1x9x9x225xf32, #tpu.memory_space<vmem>>, vector<1x1x9x225xf32>
    %193 = vector.shape_cast %192 : vector<1x1x9x225xf32> to vector<9x225xf32>
    %194 = vector.extract_strided_slice %0 {offsets = [0, 0], sizes = [32, 1], strides = [1, 1]} : vector<32x9xf32> to vector<32x1xf32>
    %195 = vector.extract_strided_slice %193 {offsets = [0, 0], sizes = [1, 225], strides = [1, 1]} : vector<9x225xf32> to vector<1x225xf32>
    %196 = vector.broadcast %194 : vector<32x1xf32> to vector<32x225xf32>
    %197 = vector.broadcast %195 : vector<1x225xf32> to vector<32x225xf32>
    %198 = arith.mulf %196, %197 : vector<32x225xf32>
    %199 = vector.extract_strided_slice %0 {offsets = [0, 1], sizes = [32, 1], strides = [1, 1]} : vector<32x9xf32> to vector<32x1xf32>
    %200 = vector.extract_strided_slice %193 {offsets = [1, 0], sizes = [1, 225], strides = [1, 1]} : vector<9x225xf32> to vector<1x225xf32>
    %201 = vector.broadcast %199 : vector<32x1xf32> to vector<32x225xf32>
    %202 = vector.broadcast %200 : vector<1x225xf32> to vector<32x225xf32>
    %203 = arith.mulf %201, %202 : vector<32x225xf32>
    %204 = arith.addf %198, %203 : vector<32x225xf32>
    %205 = vector.extract_strided_slice %0 {offsets = [0, 2], sizes = [32, 1], strides = [1, 1]} : vector<32x9xf32> to vector<32x1xf32>
    %206 = vector.extract_strided_slice %193 {offsets = [2, 0], sizes = [1, 225], strides = [1, 1]} : vector<9x225xf32> to vector<1x225xf32>
    %207 = vector.broadcast %205 : vector<32x1xf32> to vector<32x225xf32>
    %208 = vector.broadcast %206 : vector<1x225xf32> to vector<32x225xf32>
    %209 = arith.mulf %207, %208 : vector<32x225xf32>
    %210 = arith.addf %204, %209 : vector<32x225xf32>
    %211 = vector.extract_strided_slice %0 {offsets = [0, 3], sizes = [32, 1], strides = [1, 1]} : vector<32x9xf32> to vector<32x1xf32>
    %212 = vector.extract_strided_slice %193 {offsets = [3, 0], sizes = [1, 225], strides = [1, 1]} : vector<9x225xf32> to vector<1x225xf32>
    %213 = vector.broadcast %211 : vector<32x1xf32> to vector<32x225xf32>
    %214 = vector.broadcast %212 : vector<1x225xf32> to vector<32x225xf32>
    %215 = arith.mulf %213, %214 : vector<32x225xf32>
    %216 = arith.addf %210, %215 : vector<32x225xf32>
    %217 = vector.extract_strided_slice %0 {offsets = [0, 4], sizes = [32, 1], strides = [1, 1]} : vector<32x9xf32> to vector<32x1xf32>
    %218 = vector.extract_strided_slice %193 {offsets = [4, 0], sizes = [1, 225], strides = [1, 1]} : vector<9x225xf32> to vector<1x225xf32>
    %219 = vector.broadcast %217 : vector<32x1xf32> to vector<32x225xf32>
    %220 = vector.broadcast %218 : vector<1x225xf32> to vector<32x225xf32>
    %221 = arith.mulf %219, %220 : vector<32x225xf32>
    %222 = arith.addf %216, %221 : vector<32x225xf32>
    %223 = vector.extract_strided_slice %0 {offsets = [0, 5], sizes = [32, 1], strides = [1, 1]} : vector<32x9xf32> to vector<32x1xf32>
    %224 = vector.extract_strided_slice %193 {offsets = [5, 0], sizes = [1, 225], strides = [1, 1]} : vector<9x225xf32> to vector<1x225xf32>
    %225 = vector.broadcast %223 : vector<32x1xf32> to vector<32x225xf32>
    %226 = vector.broadcast %224 : vector<1x225xf32> to vector<32x225xf32>
    %227 = arith.mulf %225, %226 : vector<32x225xf32>
    %228 = arith.addf %222, %227 : vector<32x225xf32>
    %229 = vector.extract_strided_slice %0 {offsets = [0, 6], sizes = [32, 1], strides = [1, 1]} : vector<32x9xf32> to vector<32x1xf32>
    %230 = vector.extract_strided_slice %193 {offsets = [6, 0], sizes = [1, 225], strides = [1, 1]} : vector<9x225xf32> to vector<1x225xf32>
    %231 = vector.broadcast %229 : vector<32x1xf32> to vector<32x225xf32>
    %232 = vector.broadcast %230 : vector<1x225xf32> to vector<32x225xf32>
    %233 = arith.mulf %231, %232 : vector<32x225xf32>
    %234 = arith.addf %228, %233 : vector<32x225xf32>
    %235 = vector.extract_strided_slice %0 {offsets = [0, 7], sizes = [32, 1], strides = [1, 1]} : vector<32x9xf32> to vector<32x1xf32>
    %236 = vector.extract_strided_slice %193 {offsets = [7, 0], sizes = [1, 225], strides = [1, 1]} : vector<9x225xf32> to vector<1x225xf32>
    %237 = vector.broadcast %235 : vector<32x1xf32> to vector<32x225xf32>
    %238 = vector.broadcast %236 : vector<1x225xf32> to vector<32x225xf32>
    %239 = arith.mulf %237, %238 : vector<32x225xf32>
    %240 = arith.addf %234, %239 : vector<32x225xf32>
    %241 = vector.extract_strided_slice %0 {offsets = [0, 8], sizes = [32, 1], strides = [1, 1]} : vector<32x9xf32> to vector<32x1xf32>
    %242 = vector.extract_strided_slice %193 {offsets = [8, 0], sizes = [1, 225], strides = [1, 1]} : vector<9x225xf32> to vector<1x225xf32>
    %243 = vector.broadcast %241 : vector<32x1xf32> to vector<32x225xf32>
    %244 = vector.broadcast %242 : vector<1x225xf32> to vector<32x225xf32>
    %245 = arith.mulf %243, %244 : vector<32x225xf32>
    %246 = arith.addf %240, %245 : vector<32x225xf32>
    %247 = vector.broadcast %1 : vector<32x1xf32> to vector<32x225xf32>
    %248 = arith.addf %246, %247 : vector<32x225xf32>
    %cst_31 = arith.constant 0.000000e+00 : f32
    %249 = vector.broadcast %cst_31 : f32 to vector<32x225xf32>
    %250 = arith.maximumf %248, %249 : vector<32x225xf32>
    %c3_32 = arith.constant 3 : index
    %c0_33 = arith.constant 0 : index
    %c0_34 = arith.constant 0 : index
    %251 = vector.load %arg4[%c3_32, %c0_33, %c0_34] : memref<9x32x32xf32, #tpu.memory_space<vmem>>, vector<1x32x32xf32>
    %252 = vector.shape_cast %251 : vector<1x32x32xf32> to vector<32x32xf32>
    %cst_35 = arith.constant dense<0.000000e+00> : vector<32x225xf32>
    %253 = tpu.matmul %252, %250, %cst_35 {dimension_numbers = #tpu.dot_dimension_numbers<[1], [0], [0], [1], [0, 0, 1, 1], [], []>} : vector<32x32xf32>, vector<32x225xf32>, vector<32x225xf32> -> vector<32x225xf32>
    %254 = arith.addf %191, %253 : vector<32x225xf32>
    %c0_36 = arith.constant 0 : index
    %c4 = arith.constant 4 : index
    %c0_37 = arith.constant 0 : index
    %c0_38 = arith.constant 0 : index
    %255 = vector.load %arg1[%c0_36, %c4, %c0_37, %c0_38] : memref<1x9x9x225xf32, #tpu.memory_space<vmem>>, vector<1x1x9x225xf32>
    %256 = vector.shape_cast %255 : vector<1x1x9x225xf32> to vector<9x225xf32>
    %257 = vector.extract_strided_slice %0 {offsets = [0, 0], sizes = [32, 1], strides = [1, 1]} : vector<32x9xf32> to vector<32x1xf32>
    %258 = vector.extract_strided_slice %256 {offsets = [0, 0], sizes = [1, 225], strides = [1, 1]} : vector<9x225xf32> to vector<1x225xf32>
    %259 = vector.broadcast %257 : vector<32x1xf32> to vector<32x225xf32>
    %260 = vector.broadcast %258 : vector<1x225xf32> to vector<32x225xf32>
    %261 = arith.mulf %259, %260 : vector<32x225xf32>
    %262 = vector.extract_strided_slice %0 {offsets = [0, 1], sizes = [32, 1], strides = [1, 1]} : vector<32x9xf32> to vector<32x1xf32>
    %263 = vector.extract_strided_slice %256 {offsets = [1, 0], sizes = [1, 225], strides = [1, 1]} : vector<9x225xf32> to vector<1x225xf32>
    %264 = vector.broadcast %262 : vector<32x1xf32> to vector<32x225xf32>
    %265 = vector.broadcast %263 : vector<1x225xf32> to vector<32x225xf32>
    %266 = arith.mulf %264, %265 : vector<32x225xf32>
    %267 = arith.addf %261, %266 : vector<32x225xf32>
    %268 = vector.extract_strided_slice %0 {offsets = [0, 2], sizes = [32, 1], strides = [1, 1]} : vector<32x9xf32> to vector<32x1xf32>
    %269 = vector.extract_strided_slice %256 {offsets = [2, 0], sizes = [1, 225], strides = [1, 1]} : vector<9x225xf32> to vector<1x225xf32>
    %270 = vector.broadcast %268 : vector<32x1xf32> to vector<32x225xf32>
    %271 = vector.broadcast %269 : vector<1x225xf32> to vector<32x225xf32>
    %272 = arith.mulf %270, %271 : vector<32x225xf32>
    %273 = arith.addf %267, %272 : vector<32x225xf32>
    %274 = vector.extract_strided_slice %0 {offsets = [0, 3], sizes = [32, 1], strides = [1, 1]} : vector<32x9xf32> to vector<32x1xf32>
    %275 = vector.extract_strided_slice %256 {offsets = [3, 0], sizes = [1, 225], strides = [1, 1]} : vector<9x225xf32> to vector<1x225xf32>
    %276 = vector.broadcast %274 : vector<32x1xf32> to vector<32x225xf32>
    %277 = vector.broadcast %275 : vector<1x225xf32> to vector<32x225xf32>
    %278 = arith.mulf %276, %277 : vector<32x225xf32>
    %279 = arith.addf %273, %278 : vector<32x225xf32>
    %280 = vector.extract_strided_slice %0 {offsets = [0, 4], sizes = [32, 1], strides = [1, 1]} : vector<32x9xf32> to vector<32x1xf32>
    %281 = vector.extract_strided_slice %256 {offsets = [4, 0], sizes = [1, 225], strides = [1, 1]} : vector<9x225xf32> to vector<1x225xf32>
    %282 = vector.broadcast %280 : vector<32x1xf32> to vector<32x225xf32>
    %283 = vector.broadcast %281 : vector<1x225xf32> to vector<32x225xf32>
    %284 = arith.mulf %282, %283 : vector<32x225xf32>
    %285 = arith.addf %279, %284 : vector<32x225xf32>
    %286 = vector.extract_strided_slice %0 {offsets = [0, 5], sizes = [32, 1], strides = [1, 1]} : vector<32x9xf32> to vector<32x1xf32>
    %287 = vector.extract_strided_slice %256 {offsets = [5, 0], sizes = [1, 225], strides = [1, 1]} : vector<9x225xf32> to vector<1x225xf32>
    %288 = vector.broadcast %286 : vector<32x1xf32> to vector<32x225xf32>
    %289 = vector.broadcast %287 : vector<1x225xf32> to vector<32x225xf32>
    %290 = arith.mulf %288, %289 : vector<32x225xf32>
    %291 = arith.addf %285, %290 : vector<32x225xf32>
    %292 = vector.extract_strided_slice %0 {offsets = [0, 6], sizes = [32, 1], strides = [1, 1]} : vector<32x9xf32> to vector<32x1xf32>
    %293 = vector.extract_strided_slice %256 {offsets = [6, 0], sizes = [1, 225], strides = [1, 1]} : vector<9x225xf32> to vector<1x225xf32>
    %294 = vector.broadcast %292 : vector<32x1xf32> to vector<32x225xf32>
    %295 = vector.broadcast %293 : vector<1x225xf32> to vector<32x225xf32>
    %296 = arith.mulf %294, %295 : vector<32x225xf32>
    %297 = arith.addf %291, %296 : vector<32x225xf32>
    %298 = vector.extract_strided_slice %0 {offsets = [0, 7], sizes = [32, 1], strides = [1, 1]} : vector<32x9xf32> to vector<32x1xf32>
    %299 = vector.extract_strided_slice %256 {offsets = [7, 0], sizes = [1, 225], strides = [1, 1]} : vector<9x225xf32> to vector<1x225xf32>
    %300 = vector.broadcast %298 : vector<32x1xf32> to vector<32x225xf32>
    %301 = vector.broadcast %299 : vector<1x225xf32> to vector<32x225xf32>
    %302 = arith.mulf %300, %301 : vector<32x225xf32>
    %303 = arith.addf %297, %302 : vector<32x225xf32>
    %304 = vector.extract_strided_slice %0 {offsets = [0, 8], sizes = [32, 1], strides = [1, 1]} : vector<32x9xf32> to vector<32x1xf32>
    %305 = vector.extract_strided_slice %256 {offsets = [8, 0], sizes = [1, 225], strides = [1, 1]} : vector<9x225xf32> to vector<1x225xf32>
    %306 = vector.broadcast %304 : vector<32x1xf32> to vector<32x225xf32>
    %307 = vector.broadcast %305 : vector<1x225xf32> to vector<32x225xf32>
    %308 = arith.mulf %306, %307 : vector<32x225xf32>
    %309 = arith.addf %303, %308 : vector<32x225xf32>
    %310 = vector.broadcast %1 : vector<32x1xf32> to vector<32x225xf32>
    %311 = arith.addf %309, %310 : vector<32x225xf32>
    %cst_39 = arith.constant 0.000000e+00 : f32
    %312 = vector.broadcast %cst_39 : f32 to vector<32x225xf32>
    %313 = arith.maximumf %311, %312 : vector<32x225xf32>
    %c4_40 = arith.constant 4 : index
    %c0_41 = arith.constant 0 : index
    %c0_42 = arith.constant 0 : index
    %314 = vector.load %arg4[%c4_40, %c0_41, %c0_42] : memref<9x32x32xf32, #tpu.memory_space<vmem>>, vector<1x32x32xf32>
    %315 = vector.shape_cast %314 : vector<1x32x32xf32> to vector<32x32xf32>
    %cst_43 = arith.constant dense<0.000000e+00> : vector<32x225xf32>
    %316 = tpu.matmul %315, %313, %cst_43 {dimension_numbers = #tpu.dot_dimension_numbers<[1], [0], [0], [1], [0, 0, 1, 1], [], []>} : vector<32x32xf32>, vector<32x225xf32>, vector<32x225xf32> -> vector<32x225xf32>
    %317 = arith.addf %254, %316 : vector<32x225xf32>
    %c0_44 = arith.constant 0 : index
    %c5 = arith.constant 5 : index
    %c0_45 = arith.constant 0 : index
    %c0_46 = arith.constant 0 : index
    %318 = vector.load %arg1[%c0_44, %c5, %c0_45, %c0_46] : memref<1x9x9x225xf32, #tpu.memory_space<vmem>>, vector<1x1x9x225xf32>
    %319 = vector.shape_cast %318 : vector<1x1x9x225xf32> to vector<9x225xf32>
    %320 = vector.extract_strided_slice %0 {offsets = [0, 0], sizes = [32, 1], strides = [1, 1]} : vector<32x9xf32> to vector<32x1xf32>
    %321 = vector.extract_strided_slice %319 {offsets = [0, 0], sizes = [1, 225], strides = [1, 1]} : vector<9x225xf32> to vector<1x225xf32>
    %322 = vector.broadcast %320 : vector<32x1xf32> to vector<32x225xf32>
    %323 = vector.broadcast %321 : vector<1x225xf32> to vector<32x225xf32>
    %324 = arith.mulf %322, %323 : vector<32x225xf32>
    %325 = vector.extract_strided_slice %0 {offsets = [0, 1], sizes = [32, 1], strides = [1, 1]} : vector<32x9xf32> to vector<32x1xf32>
    %326 = vector.extract_strided_slice %319 {offsets = [1, 0], sizes = [1, 225], strides = [1, 1]} : vector<9x225xf32> to vector<1x225xf32>
    %327 = vector.broadcast %325 : vector<32x1xf32> to vector<32x225xf32>
    %328 = vector.broadcast %326 : vector<1x225xf32> to vector<32x225xf32>
    %329 = arith.mulf %327, %328 : vector<32x225xf32>
    %330 = arith.addf %324, %329 : vector<32x225xf32>
    %331 = vector.extract_strided_slice %0 {offsets = [0, 2], sizes = [32, 1], strides = [1, 1]} : vector<32x9xf32> to vector<32x1xf32>
    %332 = vector.extract_strided_slice %319 {offsets = [2, 0], sizes = [1, 225], strides = [1, 1]} : vector<9x225xf32> to vector<1x225xf32>
    %333 = vector.broadcast %331 : vector<32x1xf32> to vector<32x225xf32>
    %334 = vector.broadcast %332 : vector<1x225xf32> to vector<32x225xf32>
    %335 = arith.mulf %333, %334 : vector<32x225xf32>
    %336 = arith.addf %330, %335 : vector<32x225xf32>
    %337 = vector.extract_strided_slice %0 {offsets = [0, 3], sizes = [32, 1], strides = [1, 1]} : vector<32x9xf32> to vector<32x1xf32>
    %338 = vector.extract_strided_slice %319 {offsets = [3, 0], sizes = [1, 225], strides = [1, 1]} : vector<9x225xf32> to vector<1x225xf32>
    %339 = vector.broadcast %337 : vector<32x1xf32> to vector<32x225xf32>
    %340 = vector.broadcast %338 : vector<1x225xf32> to vector<32x225xf32>
    %341 = arith.mulf %339, %340 : vector<32x225xf32>
    %342 = arith.addf %336, %341 : vector<32x225xf32>
    %343 = vector.extract_strided_slice %0 {offsets = [0, 4], sizes = [32, 1], strides = [1, 1]} : vector<32x9xf32> to vector<32x1xf32>
    %344 = vector.extract_strided_slice %319 {offsets = [4, 0], sizes = [1, 225], strides = [1, 1]} : vector<9x225xf32> to vector<1x225xf32>
    %345 = vector.broadcast %343 : vector<32x1xf32> to vector<32x225xf32>
    %346 = vector.broadcast %344 : vector<1x225xf32> to vector<32x225xf32>
    %347 = arith.mulf %345, %346 : vector<32x225xf32>
    %348 = arith.addf %342, %347 : vector<32x225xf32>
    %349 = vector.extract_strided_slice %0 {offsets = [0, 5], sizes = [32, 1], strides = [1, 1]} : vector<32x9xf32> to vector<32x1xf32>
    %350 = vector.extract_strided_slice %319 {offsets = [5, 0], sizes = [1, 225], strides = [1, 1]} : vector<9x225xf32> to vector<1x225xf32>
    %351 = vector.broadcast %349 : vector<32x1xf32> to vector<32x225xf32>
    %352 = vector.broadcast %350 : vector<1x225xf32> to vector<32x225xf32>
    %353 = arith.mulf %351, %352 : vector<32x225xf32>
    %354 = arith.addf %348, %353 : vector<32x225xf32>
    %355 = vector.extract_strided_slice %0 {offsets = [0, 6], sizes = [32, 1], strides = [1, 1]} : vector<32x9xf32> to vector<32x1xf32>
    %356 = vector.extract_strided_slice %319 {offsets = [6, 0], sizes = [1, 225], strides = [1, 1]} : vector<9x225xf32> to vector<1x225xf32>
    %357 = vector.broadcast %355 : vector<32x1xf32> to vector<32x225xf32>
    %358 = vector.broadcast %356 : vector<1x225xf32> to vector<32x225xf32>
    %359 = arith.mulf %357, %358 : vector<32x225xf32>
    %360 = arith.addf %354, %359 : vector<32x225xf32>
    %361 = vector.extract_strided_slice %0 {offsets = [0, 7], sizes = [32, 1], strides = [1, 1]} : vector<32x9xf32> to vector<32x1xf32>
    %362 = vector.extract_strided_slice %319 {offsets = [7, 0], sizes = [1, 225], strides = [1, 1]} : vector<9x225xf32> to vector<1x225xf32>
    %363 = vector.broadcast %361 : vector<32x1xf32> to vector<32x225xf32>
    %364 = vector.broadcast %362 : vector<1x225xf32> to vector<32x225xf32>
    %365 = arith.mulf %363, %364 : vector<32x225xf32>
    %366 = arith.addf %360, %365 : vector<32x225xf32>
    %367 = vector.extract_strided_slice %0 {offsets = [0, 8], sizes = [32, 1], strides = [1, 1]} : vector<32x9xf32> to vector<32x1xf32>
    %368 = vector.extract_strided_slice %319 {offsets = [8, 0], sizes = [1, 225], strides = [1, 1]} : vector<9x225xf32> to vector<1x225xf32>
    %369 = vector.broadcast %367 : vector<32x1xf32> to vector<32x225xf32>
    %370 = vector.broadcast %368 : vector<1x225xf32> to vector<32x225xf32>
    %371 = arith.mulf %369, %370 : vector<32x225xf32>
    %372 = arith.addf %366, %371 : vector<32x225xf32>
    %373 = vector.broadcast %1 : vector<32x1xf32> to vector<32x225xf32>
    %374 = arith.addf %372, %373 : vector<32x225xf32>
    %cst_47 = arith.constant 0.000000e+00 : f32
    %375 = vector.broadcast %cst_47 : f32 to vector<32x225xf32>
    %376 = arith.maximumf %374, %375 : vector<32x225xf32>
    %c5_48 = arith.constant 5 : index
    %c0_49 = arith.constant 0 : index
    %c0_50 = arith.constant 0 : index
    %377 = vector.load %arg4[%c5_48, %c0_49, %c0_50] : memref<9x32x32xf32, #tpu.memory_space<vmem>>, vector<1x32x32xf32>
    %378 = vector.shape_cast %377 : vector<1x32x32xf32> to vector<32x32xf32>
    %cst_51 = arith.constant dense<0.000000e+00> : vector<32x225xf32>
    %379 = tpu.matmul %378, %376, %cst_51 {dimension_numbers = #tpu.dot_dimension_numbers<[1], [0], [0], [1], [0, 0, 1, 1], [], []>} : vector<32x32xf32>, vector<32x225xf32>, vector<32x225xf32> -> vector<32x225xf32>
    %380 = arith.addf %317, %379 : vector<32x225xf32>
    %c0_52 = arith.constant 0 : index
    %c6 = arith.constant 6 : index
    %c0_53 = arith.constant 0 : index
    %c0_54 = arith.constant 0 : index
    %381 = vector.load %arg1[%c0_52, %c6, %c0_53, %c0_54] : memref<1x9x9x225xf32, #tpu.memory_space<vmem>>, vector<1x1x9x225xf32>
    %382 = vector.shape_cast %381 : vector<1x1x9x225xf32> to vector<9x225xf32>
    %383 = vector.extract_strided_slice %0 {offsets = [0, 0], sizes = [32, 1], strides = [1, 1]} : vector<32x9xf32> to vector<32x1xf32>
    %384 = vector.extract_strided_slice %382 {offsets = [0, 0], sizes = [1, 225], strides = [1, 1]} : vector<9x225xf32> to vector<1x225xf32>
    %385 = vector.broadcast %383 : vector<32x1xf32> to vector<32x225xf32>
    %386 = vector.broadcast %384 : vector<1x225xf32> to vector<32x225xf32>
    %387 = arith.mulf %385, %386 : vector<32x225xf32>
    %388 = vector.extract_strided_slice %0 {offsets = [0, 1], sizes = [32, 1], strides = [1, 1]} : vector<32x9xf32> to vector<32x1xf32>
    %389 = vector.extract_strided_slice %382 {offsets = [1, 0], sizes = [1, 225], strides = [1, 1]} : vector<9x225xf32> to vector<1x225xf32>
    %390 = vector.broadcast %388 : vector<32x1xf32> to vector<32x225xf32>
    %391 = vector.broadcast %389 : vector<1x225xf32> to vector<32x225xf32>
    %392 = arith.mulf %390, %391 : vector<32x225xf32>
    %393 = arith.addf %387, %392 : vector<32x225xf32>
    %394 = vector.extract_strided_slice %0 {offsets = [0, 2], sizes = [32, 1], strides = [1, 1]} : vector<32x9xf32> to vector<32x1xf32>
    %395 = vector.extract_strided_slice %382 {offsets = [2, 0], sizes = [1, 225], strides = [1, 1]} : vector<9x225xf32> to vector<1x225xf32>
    %396 = vector.broadcast %394 : vector<32x1xf32> to vector<32x225xf32>
    %397 = vector.broadcast %395 : vector<1x225xf32> to vector<32x225xf32>
    %398 = arith.mulf %396, %397 : vector<32x225xf32>
    %399 = arith.addf %393, %398 : vector<32x225xf32>
    %400 = vector.extract_strided_slice %0 {offsets = [0, 3], sizes = [32, 1], strides = [1, 1]} : vector<32x9xf32> to vector<32x1xf32>
    %401 = vector.extract_strided_slice %382 {offsets = [3, 0], sizes = [1, 225], strides = [1, 1]} : vector<9x225xf32> to vector<1x225xf32>
    %402 = vector.broadcast %400 : vector<32x1xf32> to vector<32x225xf32>
    %403 = vector.broadcast %401 : vector<1x225xf32> to vector<32x225xf32>
    %404 = arith.mulf %402, %403 : vector<32x225xf32>
    %405 = arith.addf %399, %404 : vector<32x225xf32>
    %406 = vector.extract_strided_slice %0 {offsets = [0, 4], sizes = [32, 1], strides = [1, 1]} : vector<32x9xf32> to vector<32x1xf32>
    %407 = vector.extract_strided_slice %382 {offsets = [4, 0], sizes = [1, 225], strides = [1, 1]} : vector<9x225xf32> to vector<1x225xf32>
    %408 = vector.broadcast %406 : vector<32x1xf32> to vector<32x225xf32>
    %409 = vector.broadcast %407 : vector<1x225xf32> to vector<32x225xf32>
    %410 = arith.mulf %408, %409 : vector<32x225xf32>
    %411 = arith.addf %405, %410 : vector<32x225xf32>
    %412 = vector.extract_strided_slice %0 {offsets = [0, 5], sizes = [32, 1], strides = [1, 1]} : vector<32x9xf32> to vector<32x1xf32>
    %413 = vector.extract_strided_slice %382 {offsets = [5, 0], sizes = [1, 225], strides = [1, 1]} : vector<9x225xf32> to vector<1x225xf32>
    %414 = vector.broadcast %412 : vector<32x1xf32> to vector<32x225xf32>
    %415 = vector.broadcast %413 : vector<1x225xf32> to vector<32x225xf32>
    %416 = arith.mulf %414, %415 : vector<32x225xf32>
    %417 = arith.addf %411, %416 : vector<32x225xf32>
    %418 = vector.extract_strided_slice %0 {offsets = [0, 6], sizes = [32, 1], strides = [1, 1]} : vector<32x9xf32> to vector<32x1xf32>
    %419 = vector.extract_strided_slice %382 {offsets = [6, 0], sizes = [1, 225], strides = [1, 1]} : vector<9x225xf32> to vector<1x225xf32>
    %420 = vector.broadcast %418 : vector<32x1xf32> to vector<32x225xf32>
    %421 = vector.broadcast %419 : vector<1x225xf32> to vector<32x225xf32>
    %422 = arith.mulf %420, %421 : vector<32x225xf32>
    %423 = arith.addf %417, %422 : vector<32x225xf32>
    %424 = vector.extract_strided_slice %0 {offsets = [0, 7], sizes = [32, 1], strides = [1, 1]} : vector<32x9xf32> to vector<32x1xf32>
    %425 = vector.extract_strided_slice %382 {offsets = [7, 0], sizes = [1, 225], strides = [1, 1]} : vector<9x225xf32> to vector<1x225xf32>
    %426 = vector.broadcast %424 : vector<32x1xf32> to vector<32x225xf32>
    %427 = vector.broadcast %425 : vector<1x225xf32> to vector<32x225xf32>
    %428 = arith.mulf %426, %427 : vector<32x225xf32>
    %429 = arith.addf %423, %428 : vector<32x225xf32>
    %430 = vector.extract_strided_slice %0 {offsets = [0, 8], sizes = [32, 1], strides = [1, 1]} : vector<32x9xf32> to vector<32x1xf32>
    %431 = vector.extract_strided_slice %382 {offsets = [8, 0], sizes = [1, 225], strides = [1, 1]} : vector<9x225xf32> to vector<1x225xf32>
    %432 = vector.broadcast %430 : vector<32x1xf32> to vector<32x225xf32>
    %433 = vector.broadcast %431 : vector<1x225xf32> to vector<32x225xf32>
    %434 = arith.mulf %432, %433 : vector<32x225xf32>
    %435 = arith.addf %429, %434 : vector<32x225xf32>
    %436 = vector.broadcast %1 : vector<32x1xf32> to vector<32x225xf32>
    %437 = arith.addf %435, %436 : vector<32x225xf32>
    %cst_55 = arith.constant 0.000000e+00 : f32
    %438 = vector.broadcast %cst_55 : f32 to vector<32x225xf32>
    %439 = arith.maximumf %437, %438 : vector<32x225xf32>
    %c6_56 = arith.constant 6 : index
    %c0_57 = arith.constant 0 : index
    %c0_58 = arith.constant 0 : index
    %440 = vector.load %arg4[%c6_56, %c0_57, %c0_58] : memref<9x32x32xf32, #tpu.memory_space<vmem>>, vector<1x32x32xf32>
    %441 = vector.shape_cast %440 : vector<1x32x32xf32> to vector<32x32xf32>
    %cst_59 = arith.constant dense<0.000000e+00> : vector<32x225xf32>
    %442 = tpu.matmul %441, %439, %cst_59 {dimension_numbers = #tpu.dot_dimension_numbers<[1], [0], [0], [1], [0, 0, 1, 1], [], []>} : vector<32x32xf32>, vector<32x225xf32>, vector<32x225xf32> -> vector<32x225xf32>
    %443 = arith.addf %380, %442 : vector<32x225xf32>
    %c0_60 = arith.constant 0 : index
    %c7 = arith.constant 7 : index
    %c0_61 = arith.constant 0 : index
    %c0_62 = arith.constant 0 : index
    %444 = vector.load %arg1[%c0_60, %c7, %c0_61, %c0_62] : memref<1x9x9x225xf32, #tpu.memory_space<vmem>>, vector<1x1x9x225xf32>
    %445 = vector.shape_cast %444 : vector<1x1x9x225xf32> to vector<9x225xf32>
    %446 = vector.extract_strided_slice %0 {offsets = [0, 0], sizes = [32, 1], strides = [1, 1]} : vector<32x9xf32> to vector<32x1xf32>
    %447 = vector.extract_strided_slice %445 {offsets = [0, 0], sizes = [1, 225], strides = [1, 1]} : vector<9x225xf32> to vector<1x225xf32>
    %448 = vector.broadcast %446 : vector<32x1xf32> to vector<32x225xf32>
    %449 = vector.broadcast %447 : vector<1x225xf32> to vector<32x225xf32>
    %450 = arith.mulf %448, %449 : vector<32x225xf32>
    %451 = vector.extract_strided_slice %0 {offsets = [0, 1], sizes = [32, 1], strides = [1, 1]} : vector<32x9xf32> to vector<32x1xf32>
    %452 = vector.extract_strided_slice %445 {offsets = [1, 0], sizes = [1, 225], strides = [1, 1]} : vector<9x225xf32> to vector<1x225xf32>
    %453 = vector.broadcast %451 : vector<32x1xf32> to vector<32x225xf32>
    %454 = vector.broadcast %452 : vector<1x225xf32> to vector<32x225xf32>
    %455 = arith.mulf %453, %454 : vector<32x225xf32>
    %456 = arith.addf %450, %455 : vector<32x225xf32>
    %457 = vector.extract_strided_slice %0 {offsets = [0, 2], sizes = [32, 1], strides = [1, 1]} : vector<32x9xf32> to vector<32x1xf32>
    %458 = vector.extract_strided_slice %445 {offsets = [2, 0], sizes = [1, 225], strides = [1, 1]} : vector<9x225xf32> to vector<1x225xf32>
    %459 = vector.broadcast %457 : vector<32x1xf32> to vector<32x225xf32>
    %460 = vector.broadcast %458 : vector<1x225xf32> to vector<32x225xf32>
    %461 = arith.mulf %459, %460 : vector<32x225xf32>
    %462 = arith.addf %456, %461 : vector<32x225xf32>
    %463 = vector.extract_strided_slice %0 {offsets = [0, 3], sizes = [32, 1], strides = [1, 1]} : vector<32x9xf32> to vector<32x1xf32>
    %464 = vector.extract_strided_slice %445 {offsets = [3, 0], sizes = [1, 225], strides = [1, 1]} : vector<9x225xf32> to vector<1x225xf32>
    %465 = vector.broadcast %463 : vector<32x1xf32> to vector<32x225xf32>
    %466 = vector.broadcast %464 : vector<1x225xf32> to vector<32x225xf32>
    %467 = arith.mulf %465, %466 : vector<32x225xf32>
    %468 = arith.addf %462, %467 : vector<32x225xf32>
    %469 = vector.extract_strided_slice %0 {offsets = [0, 4], sizes = [32, 1], strides = [1, 1]} : vector<32x9xf32> to vector<32x1xf32>
    %470 = vector.extract_strided_slice %445 {offsets = [4, 0], sizes = [1, 225], strides = [1, 1]} : vector<9x225xf32> to vector<1x225xf32>
    %471 = vector.broadcast %469 : vector<32x1xf32> to vector<32x225xf32>
    %472 = vector.broadcast %470 : vector<1x225xf32> to vector<32x225xf32>
    %473 = arith.mulf %471, %472 : vector<32x225xf32>
    %474 = arith.addf %468, %473 : vector<32x225xf32>
    %475 = vector.extract_strided_slice %0 {offsets = [0, 5], sizes = [32, 1], strides = [1, 1]} : vector<32x9xf32> to vector<32x1xf32>
    %476 = vector.extract_strided_slice %445 {offsets = [5, 0], sizes = [1, 225], strides = [1, 1]} : vector<9x225xf32> to vector<1x225xf32>
    %477 = vector.broadcast %475 : vector<32x1xf32> to vector<32x225xf32>
    %478 = vector.broadcast %476 : vector<1x225xf32> to vector<32x225xf32>
    %479 = arith.mulf %477, %478 : vector<32x225xf32>
    %480 = arith.addf %474, %479 : vector<32x225xf32>
    %481 = vector.extract_strided_slice %0 {offsets = [0, 6], sizes = [32, 1], strides = [1, 1]} : vector<32x9xf32> to vector<32x1xf32>
    %482 = vector.extract_strided_slice %445 {offsets = [6, 0], sizes = [1, 225], strides = [1, 1]} : vector<9x225xf32> to vector<1x225xf32>
    %483 = vector.broadcast %481 : vector<32x1xf32> to vector<32x225xf32>
    %484 = vector.broadcast %482 : vector<1x225xf32> to vector<32x225xf32>
    %485 = arith.mulf %483, %484 : vector<32x225xf32>
    %486 = arith.addf %480, %485 : vector<32x225xf32>
    %487 = vector.extract_strided_slice %0 {offsets = [0, 7], sizes = [32, 1], strides = [1, 1]} : vector<32x9xf32> to vector<32x1xf32>
    %488 = vector.extract_strided_slice %445 {offsets = [7, 0], sizes = [1, 225], strides = [1, 1]} : vector<9x225xf32> to vector<1x225xf32>
    %489 = vector.broadcast %487 : vector<32x1xf32> to vector<32x225xf32>
    %490 = vector.broadcast %488 : vector<1x225xf32> to vector<32x225xf32>
    %491 = arith.mulf %489, %490 : vector<32x225xf32>
    %492 = arith.addf %486, %491 : vector<32x225xf32>
    %493 = vector.extract_strided_slice %0 {offsets = [0, 8], sizes = [32, 1], strides = [1, 1]} : vector<32x9xf32> to vector<32x1xf32>
    %494 = vector.extract_strided_slice %445 {offsets = [8, 0], sizes = [1, 225], strides = [1, 1]} : vector<9x225xf32> to vector<1x225xf32>
    %495 = vector.broadcast %493 : vector<32x1xf32> to vector<32x225xf32>
    %496 = vector.broadcast %494 : vector<1x225xf32> to vector<32x225xf32>
    %497 = arith.mulf %495, %496 : vector<32x225xf32>
    %498 = arith.addf %492, %497 : vector<32x225xf32>
    %499 = vector.broadcast %1 : vector<32x1xf32> to vector<32x225xf32>
    %500 = arith.addf %498, %499 : vector<32x225xf32>
    %cst_63 = arith.constant 0.000000e+00 : f32
    %501 = vector.broadcast %cst_63 : f32 to vector<32x225xf32>
    %502 = arith.maximumf %500, %501 : vector<32x225xf32>
    %c7_64 = arith.constant 7 : index
    %c0_65 = arith.constant 0 : index
    %c0_66 = arith.constant 0 : index
    %503 = vector.load %arg4[%c7_64, %c0_65, %c0_66] : memref<9x32x32xf32, #tpu.memory_space<vmem>>, vector<1x32x32xf32>
    %504 = vector.shape_cast %503 : vector<1x32x32xf32> to vector<32x32xf32>
    %cst_67 = arith.constant dense<0.000000e+00> : vector<32x225xf32>
    %505 = tpu.matmul %504, %502, %cst_67 {dimension_numbers = #tpu.dot_dimension_numbers<[1], [0], [0], [1], [0, 0, 1, 1], [], []>} : vector<32x32xf32>, vector<32x225xf32>, vector<32x225xf32> -> vector<32x225xf32>
    %506 = arith.addf %443, %505 : vector<32x225xf32>
    %c0_68 = arith.constant 0 : index
    %c8 = arith.constant 8 : index
    %c0_69 = arith.constant 0 : index
    %c0_70 = arith.constant 0 : index
    %507 = vector.load %arg1[%c0_68, %c8, %c0_69, %c0_70] : memref<1x9x9x225xf32, #tpu.memory_space<vmem>>, vector<1x1x9x225xf32>
    %508 = vector.shape_cast %507 : vector<1x1x9x225xf32> to vector<9x225xf32>
    %509 = vector.extract_strided_slice %0 {offsets = [0, 0], sizes = [32, 1], strides = [1, 1]} : vector<32x9xf32> to vector<32x1xf32>
    %510 = vector.extract_strided_slice %508 {offsets = [0, 0], sizes = [1, 225], strides = [1, 1]} : vector<9x225xf32> to vector<1x225xf32>
    %511 = vector.broadcast %509 : vector<32x1xf32> to vector<32x225xf32>
    %512 = vector.broadcast %510 : vector<1x225xf32> to vector<32x225xf32>
    %513 = arith.mulf %511, %512 : vector<32x225xf32>
    %514 = vector.extract_strided_slice %0 {offsets = [0, 1], sizes = [32, 1], strides = [1, 1]} : vector<32x9xf32> to vector<32x1xf32>
    %515 = vector.extract_strided_slice %508 {offsets = [1, 0], sizes = [1, 225], strides = [1, 1]} : vector<9x225xf32> to vector<1x225xf32>
    %516 = vector.broadcast %514 : vector<32x1xf32> to vector<32x225xf32>
    %517 = vector.broadcast %515 : vector<1x225xf32> to vector<32x225xf32>
    %518 = arith.mulf %516, %517 : vector<32x225xf32>
    %519 = arith.addf %513, %518 : vector<32x225xf32>
    %520 = vector.extract_strided_slice %0 {offsets = [0, 2], sizes = [32, 1], strides = [1, 1]} : vector<32x9xf32> to vector<32x1xf32>
    %521 = vector.extract_strided_slice %508 {offsets = [2, 0], sizes = [1, 225], strides = [1, 1]} : vector<9x225xf32> to vector<1x225xf32>
    %522 = vector.broadcast %520 : vector<32x1xf32> to vector<32x225xf32>
    %523 = vector.broadcast %521 : vector<1x225xf32> to vector<32x225xf32>
    %524 = arith.mulf %522, %523 : vector<32x225xf32>
    %525 = arith.addf %519, %524 : vector<32x225xf32>
    %526 = vector.extract_strided_slice %0 {offsets = [0, 3], sizes = [32, 1], strides = [1, 1]} : vector<32x9xf32> to vector<32x1xf32>
    %527 = vector.extract_strided_slice %508 {offsets = [3, 0], sizes = [1, 225], strides = [1, 1]} : vector<9x225xf32> to vector<1x225xf32>
    %528 = vector.broadcast %526 : vector<32x1xf32> to vector<32x225xf32>
    %529 = vector.broadcast %527 : vector<1x225xf32> to vector<32x225xf32>
    %530 = arith.mulf %528, %529 : vector<32x225xf32>
    %531 = arith.addf %525, %530 : vector<32x225xf32>
    %532 = vector.extract_strided_slice %0 {offsets = [0, 4], sizes = [32, 1], strides = [1, 1]} : vector<32x9xf32> to vector<32x1xf32>
    %533 = vector.extract_strided_slice %508 {offsets = [4, 0], sizes = [1, 225], strides = [1, 1]} : vector<9x225xf32> to vector<1x225xf32>
    %534 = vector.broadcast %532 : vector<32x1xf32> to vector<32x225xf32>
    %535 = vector.broadcast %533 : vector<1x225xf32> to vector<32x225xf32>
    %536 = arith.mulf %534, %535 : vector<32x225xf32>
    %537 = arith.addf %531, %536 : vector<32x225xf32>
    %538 = vector.extract_strided_slice %0 {offsets = [0, 5], sizes = [32, 1], strides = [1, 1]} : vector<32x9xf32> to vector<32x1xf32>
    %539 = vector.extract_strided_slice %508 {offsets = [5, 0], sizes = [1, 225], strides = [1, 1]} : vector<9x225xf32> to vector<1x225xf32>
    %540 = vector.broadcast %538 : vector<32x1xf32> to vector<32x225xf32>
    %541 = vector.broadcast %539 : vector<1x225xf32> to vector<32x225xf32>
    %542 = arith.mulf %540, %541 : vector<32x225xf32>
    %543 = arith.addf %537, %542 : vector<32x225xf32>
    %544 = vector.extract_strided_slice %0 {offsets = [0, 6], sizes = [32, 1], strides = [1, 1]} : vector<32x9xf32> to vector<32x1xf32>
    %545 = vector.extract_strided_slice %508 {offsets = [6, 0], sizes = [1, 225], strides = [1, 1]} : vector<9x225xf32> to vector<1x225xf32>
    %546 = vector.broadcast %544 : vector<32x1xf32> to vector<32x225xf32>
    %547 = vector.broadcast %545 : vector<1x225xf32> to vector<32x225xf32>
    %548 = arith.mulf %546, %547 : vector<32x225xf32>
    %549 = arith.addf %543, %548 : vector<32x225xf32>
    %550 = vector.extract_strided_slice %0 {offsets = [0, 7], sizes = [32, 1], strides = [1, 1]} : vector<32x9xf32> to vector<32x1xf32>
    %551 = vector.extract_strided_slice %508 {offsets = [7, 0], sizes = [1, 225], strides = [1, 1]} : vector<9x225xf32> to vector<1x225xf32>
    %552 = vector.broadcast %550 : vector<32x1xf32> to vector<32x225xf32>
    %553 = vector.broadcast %551 : vector<1x225xf32> to vector<32x225xf32>
    %554 = arith.mulf %552, %553 : vector<32x225xf32>
    %555 = arith.addf %549, %554 : vector<32x225xf32>
    %556 = vector.extract_strided_slice %0 {offsets = [0, 8], sizes = [32, 1], strides = [1, 1]} : vector<32x9xf32> to vector<32x1xf32>
    %557 = vector.extract_strided_slice %508 {offsets = [8, 0], sizes = [1, 225], strides = [1, 1]} : vector<9x225xf32> to vector<1x225xf32>
    %558 = vector.broadcast %556 : vector<32x1xf32> to vector<32x225xf32>
    %559 = vector.broadcast %557 : vector<1x225xf32> to vector<32x225xf32>
    %560 = arith.mulf %558, %559 : vector<32x225xf32>
    %561 = arith.addf %555, %560 : vector<32x225xf32>
    %562 = vector.broadcast %1 : vector<32x1xf32> to vector<32x225xf32>
    %563 = arith.addf %561, %562 : vector<32x225xf32>
    %cst_71 = arith.constant 0.000000e+00 : f32
    %564 = vector.broadcast %cst_71 : f32 to vector<32x225xf32>
    %565 = arith.maximumf %563, %564 : vector<32x225xf32>
    %c8_72 = arith.constant 8 : index
    %c0_73 = arith.constant 0 : index
    %c0_74 = arith.constant 0 : index
    %566 = vector.load %arg4[%c8_72, %c0_73, %c0_74] : memref<9x32x32xf32, #tpu.memory_space<vmem>>, vector<1x32x32xf32>
    %567 = vector.shape_cast %566 : vector<1x32x32xf32> to vector<32x32xf32>
    %cst_75 = arith.constant dense<0.000000e+00> : vector<32x225xf32>
    %568 = tpu.matmul %567, %565, %cst_75 {dimension_numbers = #tpu.dot_dimension_numbers<[1], [0], [0], [1], [0, 0, 1, 1], [], []>} : vector<32x32xf32>, vector<32x225xf32>, vector<32x225xf32> -> vector<32x225xf32>
    %569 = arith.addf %506, %568 : vector<32x225xf32>
    %c0_76 = arith.constant 0 : index
    %c0_77 = arith.constant 0 : index
    %570 = vector.load %arg5[%c0_76, %c0_77] : memref<32x1xf32, #tpu.memory_space<vmem>>, vector<32x1xf32>
    %571 = vector.broadcast %570 : vector<32x1xf32> to vector<32x225xf32>
    %572 = arith.addf %569, %571 : vector<32x225xf32>
    %cst_78 = arith.constant 0.000000e+00 : f32
    %573 = vector.broadcast %cst_78 : f32 to vector<32x225xf32>
    %574 = arith.maximumf %572, %573 : vector<32x225xf32>
    %cst_79 = arith.constant 0.000000e+00 : f32
    %575 = vector.broadcast %cst_79 : f32 to vector<64x25xf32>
    %c0_80 = arith.constant 0 : index
    %c0_81 = arith.constant 0 : index
    %c0_82 = arith.constant 0 : index
    %576 = vector.load %arg6[%c0_80, %c0_81, %c0_82] : memref<9x64x32xf32, #tpu.memory_space<vmem>>, vector<1x64x32xf32>
    %577 = vector.shape_cast %576 : vector<1x64x32xf32> to vector<64x32xf32>
    %578 = vector.extract_strided_slice %574 {offsets = [0, 0], sizes = [32, 25], strides = [1, 1]} : vector<32x225xf32> to vector<32x25xf32>
    %cst_83 = arith.constant dense<0.000000e+00> : vector<64x25xf32>
    %579 = tpu.matmul %577, %578, %cst_83 {dimension_numbers = #tpu.dot_dimension_numbers<[1], [0], [0], [1], [0, 0, 1, 1], [], []>} : vector<64x32xf32>, vector<32x25xf32>, vector<64x25xf32> -> vector<64x25xf32>
    %580 = arith.addf %575, %579 : vector<64x25xf32>
    %c1_84 = arith.constant 1 : index
    %c0_85 = arith.constant 0 : index
    %c0_86 = arith.constant 0 : index
    %581 = vector.load %arg6[%c1_84, %c0_85, %c0_86] : memref<9x64x32xf32, #tpu.memory_space<vmem>>, vector<1x64x32xf32>
    %582 = vector.shape_cast %581 : vector<1x64x32xf32> to vector<64x32xf32>
    %583 = vector.extract_strided_slice %574 {offsets = [0, 25], sizes = [32, 25], strides = [1, 1]} : vector<32x225xf32> to vector<32x25xf32>
    %cst_87 = arith.constant dense<0.000000e+00> : vector<64x25xf32>
    %584 = tpu.matmul %582, %583, %cst_87 {dimension_numbers = #tpu.dot_dimension_numbers<[1], [0], [0], [1], [0, 0, 1, 1], [], []>} : vector<64x32xf32>, vector<32x25xf32>, vector<64x25xf32> -> vector<64x25xf32>
    %585 = arith.addf %580, %584 : vector<64x25xf32>
    %c2_88 = arith.constant 2 : index
    %c0_89 = arith.constant 0 : index
    %c0_90 = arith.constant 0 : index
    %586 = vector.load %arg6[%c2_88, %c0_89, %c0_90] : memref<9x64x32xf32, #tpu.memory_space<vmem>>, vector<1x64x32xf32>
    %587 = vector.shape_cast %586 : vector<1x64x32xf32> to vector<64x32xf32>
    %588 = vector.extract_strided_slice %574 {offsets = [0, 50], sizes = [32, 25], strides = [1, 1]} : vector<32x225xf32> to vector<32x25xf32>
    %cst_91 = arith.constant dense<0.000000e+00> : vector<64x25xf32>
    %589 = tpu.matmul %587, %588, %cst_91 {dimension_numbers = #tpu.dot_dimension_numbers<[1], [0], [0], [1], [0, 0, 1, 1], [], []>} : vector<64x32xf32>, vector<32x25xf32>, vector<64x25xf32> -> vector<64x25xf32>
    %590 = arith.addf %585, %589 : vector<64x25xf32>
    %c3_92 = arith.constant 3 : index
    %c0_93 = arith.constant 0 : index
    %c0_94 = arith.constant 0 : index
    %591 = vector.load %arg6[%c3_92, %c0_93, %c0_94] : memref<9x64x32xf32, #tpu.memory_space<vmem>>, vector<1x64x32xf32>
    %592 = vector.shape_cast %591 : vector<1x64x32xf32> to vector<64x32xf32>
    %593 = vector.extract_strided_slice %574 {offsets = [0, 75], sizes = [32, 25], strides = [1, 1]} : vector<32x225xf32> to vector<32x25xf32>
    %cst_95 = arith.constant dense<0.000000e+00> : vector<64x25xf32>
    %594 = tpu.matmul %592, %593, %cst_95 {dimension_numbers = #tpu.dot_dimension_numbers<[1], [0], [0], [1], [0, 0, 1, 1], [], []>} : vector<64x32xf32>, vector<32x25xf32>, vector<64x25xf32> -> vector<64x25xf32>
    %595 = arith.addf %590, %594 : vector<64x25xf32>
    %c4_96 = arith.constant 4 : index
    %c0_97 = arith.constant 0 : index
    %c0_98 = arith.constant 0 : index
    %596 = vector.load %arg6[%c4_96, %c0_97, %c0_98] : memref<9x64x32xf32, #tpu.memory_space<vmem>>, vector<1x64x32xf32>
    %597 = vector.shape_cast %596 : vector<1x64x32xf32> to vector<64x32xf32>
    %598 = vector.extract_strided_slice %574 {offsets = [0, 100], sizes = [32, 25], strides = [1, 1]} : vector<32x225xf32> to vector<32x25xf32>
    %cst_99 = arith.constant dense<0.000000e+00> : vector<64x25xf32>
    %599 = tpu.matmul %597, %598, %cst_99 {dimension_numbers = #tpu.dot_dimension_numbers<[1], [0], [0], [1], [0, 0, 1, 1], [], []>} : vector<64x32xf32>, vector<32x25xf32>, vector<64x25xf32> -> vector<64x25xf32>
    %600 = arith.addf %595, %599 : vector<64x25xf32>
    %c5_100 = arith.constant 5 : index
    %c0_101 = arith.constant 0 : index
    %c0_102 = arith.constant 0 : index
    %601 = vector.load %arg6[%c5_100, %c0_101, %c0_102] : memref<9x64x32xf32, #tpu.memory_space<vmem>>, vector<1x64x32xf32>
    %602 = vector.shape_cast %601 : vector<1x64x32xf32> to vector<64x32xf32>
    %603 = vector.extract_strided_slice %574 {offsets = [0, 125], sizes = [32, 25], strides = [1, 1]} : vector<32x225xf32> to vector<32x25xf32>
    %cst_103 = arith.constant dense<0.000000e+00> : vector<64x25xf32>
    %604 = tpu.matmul %602, %603, %cst_103 {dimension_numbers = #tpu.dot_dimension_numbers<[1], [0], [0], [1], [0, 0, 1, 1], [], []>} : vector<64x32xf32>, vector<32x25xf32>, vector<64x25xf32> -> vector<64x25xf32>
    %605 = arith.addf %600, %604 : vector<64x25xf32>
    %c6_104 = arith.constant 6 : index
    %c0_105 = arith.constant 0 : index
    %c0_106 = arith.constant 0 : index
    %606 = vector.load %arg6[%c6_104, %c0_105, %c0_106] : memref<9x64x32xf32, #tpu.memory_space<vmem>>, vector<1x64x32xf32>
    %607 = vector.shape_cast %606 : vector<1x64x32xf32> to vector<64x32xf32>
    %608 = vector.extract_strided_slice %574 {offsets = [0, 150], sizes = [32, 25], strides = [1, 1]} : vector<32x225xf32> to vector<32x25xf32>
    %cst_107 = arith.constant dense<0.000000e+00> : vector<64x25xf32>
    %609 = tpu.matmul %607, %608, %cst_107 {dimension_numbers = #tpu.dot_dimension_numbers<[1], [0], [0], [1], [0, 0, 1, 1], [], []>} : vector<64x32xf32>, vector<32x25xf32>, vector<64x25xf32> -> vector<64x25xf32>
    %610 = arith.addf %605, %609 : vector<64x25xf32>
    %c7_108 = arith.constant 7 : index
    %c0_109 = arith.constant 0 : index
    %c0_110 = arith.constant 0 : index
    %611 = vector.load %arg6[%c7_108, %c0_109, %c0_110] : memref<9x64x32xf32, #tpu.memory_space<vmem>>, vector<1x64x32xf32>
    %612 = vector.shape_cast %611 : vector<1x64x32xf32> to vector<64x32xf32>
    %613 = vector.extract_strided_slice %574 {offsets = [0, 175], sizes = [32, 25], strides = [1, 1]} : vector<32x225xf32> to vector<32x25xf32>
    %cst_111 = arith.constant dense<0.000000e+00> : vector<64x25xf32>
    %614 = tpu.matmul %612, %613, %cst_111 {dimension_numbers = #tpu.dot_dimension_numbers<[1], [0], [0], [1], [0, 0, 1, 1], [], []>} : vector<64x32xf32>, vector<32x25xf32>, vector<64x25xf32> -> vector<64x25xf32>
    %615 = arith.addf %610, %614 : vector<64x25xf32>
    %c8_112 = arith.constant 8 : index
    %c0_113 = arith.constant 0 : index
    %c0_114 = arith.constant 0 : index
    %616 = vector.load %arg6[%c8_112, %c0_113, %c0_114] : memref<9x64x32xf32, #tpu.memory_space<vmem>>, vector<1x64x32xf32>
    %617 = vector.shape_cast %616 : vector<1x64x32xf32> to vector<64x32xf32>
    %618 = vector.extract_strided_slice %574 {offsets = [0, 200], sizes = [32, 25], strides = [1, 1]} : vector<32x225xf32> to vector<32x25xf32>
    %cst_115 = arith.constant dense<0.000000e+00> : vector<64x25xf32>
    %619 = tpu.matmul %617, %618, %cst_115 {dimension_numbers = #tpu.dot_dimension_numbers<[1], [0], [0], [1], [0, 0, 1, 1], [], []>} : vector<64x32xf32>, vector<32x25xf32>, vector<64x25xf32> -> vector<64x25xf32>
    %620 = arith.addf %615, %619 : vector<64x25xf32>
    %c0_116 = arith.constant 0 : index
    %c0_117 = arith.constant 0 : index
    %621 = vector.load %arg7[%c0_116, %c0_117] : memref<64x1xf32, #tpu.memory_space<vmem>>, vector<64x1xf32>
    %622 = vector.broadcast %621 : vector<64x1xf32> to vector<64x25xf32>
    %623 = arith.addf %620, %622 : vector<64x25xf32>
    %cst_118 = arith.constant 0.000000e+00 : f32
    %624 = vector.broadcast %cst_118 : f32 to vector<64x25xf32>
    %625 = arith.maximumf %623, %624 : vector<64x25xf32>
    %c0_119 = arith.constant 0 : index
    %c0_120 = arith.constant 0 : index
    %626 = vector.load %arg8[%c0_119, %c0_120] : memref<64x25xf32, #tpu.memory_space<vmem>>, vector<64x25xf32>
    %627 = arith.mulf %625, %626 : vector<64x25xf32>
    %628 = vector.shape_cast %627 : vector<64x25xf32> to vector<1x64x25xf32>
    %cst_121 = arith.constant dense<0.000000e+00> : vector<1xf32>
    %629 = vector.multi_reduction <add>, %628, %cst_121 [1, 2] : vector<1x64x25xf32> to vector<1xf32>
    %630 = vector.shape_cast %629 : vector<1xf32> to vector<1x1x1xf32>
    %631 = vector.extract %630[0, 0, 0] : f32 from vector<1x1x1xf32>
    %632 = vector.broadcast %631 : f32 to vector<1x1xf32>
    %c0_122 = arith.constant 0 : index
    %c0_123 = arith.constant 0 : index
    %633 = vector.load %arg9[%c0_122, %c0_123] : memref<1x1xf32, #tpu.memory_space<vmem>>, vector<1x1xf32>
    %634 = arith.addf %632, %633 : vector<1x1xf32>
    %635 = vector.shape_cast %634 : vector<1x1xf32> to vector<1x1x1xf32>
    %636 = vector.broadcast %635 : vector<1x1x1xf32> to vector<1x1x128xf32>
    %c0_124 = arith.constant 0 : index
    %c0_125 = arith.constant 0 : index
    %c0_126 = arith.constant 0 : index
    %637 = vector.load %arg10[%c0_124, %c0_125, %c0_126] : memref<1x1x128xf32, #tpu.memory_space<vmem>>, vector<1x1x128xf32>
    tpu.vector_store %arg10[%c0_124, %c0_125, %c0_126], %636 {strides = array<i32>} : memref<1x1x128xf32, #tpu.memory_space<vmem>>, vector<1x1x128xf32>,
    return
  }
  func.func @transform_0(%arg0: i32) -> (i32, i32, i32, i32) {
    %c0_i32 = arith.constant 0 : i32
    %c0_i32_0 = arith.constant 0 : i32
    %c0_i32_1 = arith.constant 0 : i32
    %c0_i32_2 = arith.constant 0 : i32
    return %arg0, %c0_i32, %c0_i32_0, %c0_i32_1 : i32, i32, i32, i32
  }
  func.func @transform_1(%arg0: i32) -> (i32, i32) {
    %c0_i32 = arith.constant 0 : i32
    %c0_i32_0 = arith.constant 0 : i32
    %c0_i32_1 = arith.constant 0 : i32
    return %c0_i32, %c0_i32_0 : i32, i32
  }
  func.func @transform_2(%arg0: i32) -> (i32, i32) {
    %c0_i32 = arith.constant 0 : i32
    %c0_i32_0 = arith.constant 0 : i32
    %c0_i32_1 = arith.constant 0 : i32
    return %c0_i32, %c0_i32_0 : i32, i32
  }
  func.func @transform_3(%arg0: i32) -> (i32, i32, i32) {
    %c0_i32 = arith.constant 0 : i32
    %c0_i32_0 = arith.constant 0 : i32
    %c0_i32_1 = arith.constant 0 : i32
    %c0_i32_2 = arith.constant 0 : i32
    return %c0_i32, %c0_i32_0, %c0_i32_1 : i32, i32, i32
  }
  func.func @transform_4(%arg0: i32) -> (i32, i32) {
    %c0_i32 = arith.constant 0 : i32
    %c0_i32_0 = arith.constant 0 : i32
    %c0_i32_1 = arith.constant 0 : i32
    return %c0_i32, %c0_i32_0 : i32, i32
  }
  func.func @transform_5(%arg0: i32) -> (i32, i32, i32) {
    %c0_i32 = arith.constant 0 : i32
    %c0_i32_0 = arith.constant 0 : i32
    %c0_i32_1 = arith.constant 0 : i32
    %c0_i32_2 = arith.constant 0 : i32
    return %c0_i32, %c0_i32_0, %c0_i32_1 : i32, i32, i32
  }
  func.func @transform_6(%arg0: i32) -> (i32, i32) {
    %c0_i32 = arith.constant 0 : i32
    %c0_i32_0 = arith.constant 0 : i32
    %c0_i32_1 = arith.constant 0 : i32
    return %c0_i32, %c0_i32_0 : i32, i32
  }
  func.func @transform_7(%arg0: i32) -> (i32, i32) {
    %c0_i32 = arith.constant 0 : i32
    %c0_i32_0 = arith.constant 0 : i32
    %c0_i32_1 = arith.constant 0 : i32
    return %c0_i32, %c0_i32_0 : i32, i32
  }
  func.func @transform_8(%arg0: i32) -> (i32, i32) {
    %c0_i32 = arith.constant 0 : i32
    %c0_i32_0 = arith.constant 0 : i32
    %c0_i32_1 = arith.constant 0 : i32
    return %c0_i32, %c0_i32_0 : i32, i32
  }
  func.func @transform_9(%arg0: i32) -> (i32, i32, i32) {
    %c0_i32 = arith.constant 0 : i32
    %c0_i32_0 = arith.constant 0 : i32
    %c0_i32_1 = arith.constant 0 : i32
    return %arg0, %c0_i32, %c0_i32_0 : i32, i32, i32
  }
}

</mosaic_0001>

<llo_original>
// kernel: text_classifier2_forward.1
$region0: #{text_classifier2_forward.1}
  #allocation0 [shape = 'u32[]', space=smem, size = 0x4, offset = 0x4, fixed_abs, tag = 'smem constant byte address 0x4 - core index']
  #allocation1 [shape = 'u32[144,128]{1,0:T(1,128)}', space=vmem, size = 0x12000, scoped, tag = 'internal scratch']
  #allocation2 [shape = 'f32[1,1]{1,0:T(1,128)S(1)}', space=vmem, size = 0x200, scoped, tag = 'scoped memory for text_classifier2_forward.1']
  %s0 = inlined_call_operand.vmem [shape: f32[4,9,9,225], index: 0, kind: input, shape index: {}]
  %s1 = inlined_call_operand.vmem [shape: f32[32,9], index: 1, kind: input, shape index: {}]
  %s2 = inlined_call_operand.vmem [shape: f32[32,1], index: 2, kind: input, shape index: {}]
  %s3 = inlined_call_operand.vmem [shape: f32[9,32,32], index: 3, kind: input, shape index: {}]
  %s4 = inlined_call_operand.vmem [shape: f32[32,1], index: 4, kind: input, shape index: {}]
  %s5 = inlined_call_operand.vmem [shape: f32[9,64,32], index: 5, kind: input, shape index: {}]
  %s6 = inlined_call_operand.vmem [shape: f32[64,1], index: 6, kind: input, shape index: {}]
  %s7 = inlined_call_operand.vmem [shape: f32[64,25], index: 7, kind: input, shape index: {}]
  %s8 = inlined_call_operand.<no memory space> [shape: f32[1,1], index: 8, kind: input, shape index: {}]
  %s9 = inlined_call_operand.vmem [shape: f32[4,1,128], index: 9, kind: output, shape index: {}]
  %s10 = sld [smem:[#allocation0]]
  $region69: #{text_classifier2_forward.1} parent=0
    _
  %s12 = ssub.s32 1, %s10
  %s13 = scalar_select 0, %s12, %s10
  %v14 = vstv %s8
  %15 = vst [vmem:[#allocation2] sm:$0x1] %v14
  loop: start=0, step=1, limit=6
  $region2: #{text_classifier2_forward.1} parent=0 // loop_pre_header
    _
  $region3: #{text_classifier2_forward.1} parent=0 // loop_header
    %s17 = sphi 0, %s21
    %p18 = scmp.ge.s32.totalorder %s17, 6
    %s27 = sphi 0, %s29
    %s30 = sphi 0, %s27
    %s31 = sphi 0, %s30
    %s47 = sphi 0, %s31
    %s51 = sphi 0, %s51
    %s53 = sphi 0, %s51
    %s54 = sphi 0, %s53
    %s68 = sphi 0, %s54
    %s72 = sphi 0, %s72
    %s74 = sphi 0, %s72
    %s75 = sphi 0, %s74
    %s89 = sphi 0, %s75
    %s93 = sphi 0, %s93
    %s95 = sphi 0, %s93
    %s96 = sphi 0, %s95
    %s110 = sphi 0, %s96
    %s114 = sphi 0, %s114
    %s116 = sphi 0, %s114
    %s117 = sphi 0, %s116
    %s131 = sphi 0, %s117
    %s135 = sphi 0, %s135
    %s137 = sphi 0, %s135
    %s138 = sphi 0, %s137
    %s152 = sphi 0, %s138
    %s156 = sphi 0, %s156
    %s158 = sphi 0, %s156
    %s159 = sphi 0, %s158
    %s173 = sphi 0, %s159
    %s177 = sphi 0, %s177
    %s179 = sphi 0, %s177
    %s180 = sphi 0, %s179
    %s194 = sphi 0, %s180
    %s198 = sphi 0, %s198
    %s200 = sphi 0, %s198
    %s201 = sphi 0, %s200
    %s215 = sphi 0, %s201
    %s221 = sphi 0, %s223
    %s224 = sphi 0, %s221
    %s225 = sphi 0, %s224
    %s241 = sphi 0, %s225
  $region4: #{text_classifier2_forward.1} parent=0 // loop_header_branch
    %20 = sbr.rel (%p18) target = $region8
  $region5: #{text_classifier2_forward.1} parent=0 // loop_body
    %s22 = ssub.s32 %s17, 1
    %s23 = ssub.s32 %s17, 2
    %s24 = sadd.s32 %s17, 1
    %s25 = ssub.s32 %s17, %s24
    %p26 = scmp.eq.s32.totalorder %s25, 0
    %s28 = sadd.s32 %s27, 1
    %s29 = scalar_select %p26, %s27, %s28
    %p32 = pneg %p26
    %p33 = scmp.eq.s32.totalorder %s17, 3
    %p34 = por %p32, %p33
    %p35 = scmp.ne.s32.totalorder %s27, %s30
    %p36 = scmp.eq.s32.totalorder %s17, 0
    %p37 = por %p35, %p36
    %p38 = scmp.ne.s32.totalorder %s27, %s30
    %p39 = scmp.eq.s32.totalorder %s22, 3
    %p40 = por %p38, %p39
    %p41 = scmp.ne.s32.totalorder %s30, %s31
    %p42 = scmp.eq.s32.totalorder %s22, 0
    %p43 = por %p41, %p42
    %p44 = scmp.ne.s32.totalorder %s30, %s31
    %p45 = scmp.eq.s32.totalorder %s23, 3
    %p46 = por %p44, %p45
    %p48 = scmp.ne.s32.totalorder %s31, %s47
    %p49 = scmp.eq.s32.totalorder %s23, 0
    %p50 = por %p48, %p49
    %s52 = sadd.s32 %s51, 1
    %p55 = scmp.eq.s32.totalorder %s17, 3
    %p56 = scmp.ne.s32.totalorder %s51, %s53
    %p57 = scmp.eq.s32.totalorder %s17, 0
    %p58 = por %p56, %p57
    %p59 = scmp.ne.s32.totalorder %s51, %s53
    %p60 = scmp.eq.s32.totalorder %s22, 3
    %p61 = por %p59, %p60
    %p62 = scmp.ne.s32.totalorder %s53, %s54
    %p63 = scmp.eq.s32.totalorder %s22, 0
    %p64 = por %p62, %p63
    %p65 = scmp.ne.s32.totalorder %s53, %s54
    %p66 = scmp.eq.s32.totalorder %s23, 3
    %p67 = por %p65, %p66
    %p69 = scmp.ne.s32.totalorder %s54, %s68
    %p70 = scmp.eq.s32.totalorder %s23, 0
    %p71 = por %p69, %p70
    %s73 = sadd.s32 %s72, 1
    %p76 = scmp.eq.s32.totalorder %s17, 3
    %p77 = scmp.ne.s32.totalorder %s72, %s74
    %p78 = scmp.eq.s32.totalorder %s17, 0
    %p79 = por %p77, %p78
    %p80 = scmp.ne.s32.totalorder %s72, %s74
    %p81 = scmp.eq.s32.totalorder %s22, 3
    %p82 = por %p80, %p81
    %p83 = scmp.ne.s32.totalorder %s74, %s75
    %p84 = scmp.eq.s32.totalorder %s22, 0
    %p85 = por %p83, %p84
    %p86 = scmp.ne.s32.totalorder %s74, %s75
    %p87 = scmp.eq.s32.totalorder %s23, 3
    %p88 = por %p86, %p87
    %p90 = scmp.ne.s32.totalorder %s75, %s89
    %p91 = scmp.eq.s32.totalorder %s23, 0
    %p92 = por %p90, %p91
    %s94 = sadd.s32 %s93, 1
    %p97 = scmp.eq.s32.totalorder %s17, 3
    %p98 = scmp.ne.s32.totalorder %s93, %s95
    %p99 = scmp.eq.s32.totalorder %s17, 0
    %p100 = por %p98, %p99
    %p101 = scmp.ne.s32.totalorder %s93, %s95
    %p102 = scmp.eq.s32.totalorder %s22, 3
    %p103 = por %p101, %p102
    %p104 = scmp.ne.s32.totalorder %s95, %s96
    %p105 = scmp.eq.s32.totalorder %s22, 0
    %p106 = por %p104, %p105
    %p107 = scmp.ne.s32.totalorder %s95, %s96
    %p108 = scmp.eq.s32.totalorder %s23, 3
    %p109 = por %p107, %p108
    %p111 = scmp.ne.s32.totalorder %s96, %s110
    %p112 = scmp.eq.s32.totalorder %s23, 0
    %p113 = por %p111, %p112
    %s115 = sadd.s32 %s114, 1
    %p118 = scmp.eq.s32.totalorder %s17, 3
    %p119 = scmp.ne.s32.totalorder %s114, %s116
    %p120 = scmp.eq.s32.totalorder %s17, 0
    %p121 = por %p119, %p120
    %p122 = scmp.ne.s32.totalorder %s114, %s116
    %p123 = scmp.eq.s32.totalorder %s22, 3
    %p124 = por %p122, %p123
    %p125 = scmp.ne.s32.totalorder %s116, %s117
    %p126 = scmp.eq.s32.totalorder %s22, 0
    %p127 = por %p125, %p126
    %p128 = scmp.ne.s32.totalorder %s116, %s117
    %p129 = scmp.eq.s32.totalorder %s23, 3
    %p130 = por %p128, %p129
    %p132 = scmp.ne.s32.totalorder %s117, %s131
    %p133 = scmp.eq.s32.totalorder %s23, 0
    %p134 = por %p132, %p133
    %s136 = sadd.s32 %s135, 1
    %p139 = scmp.eq.s32.totalorder %s17, 3
    %p140 = scmp.ne.s32.totalorder %s135, %s137
    %p141 = scmp.eq.s32.totalorder %s17, 0
    %p142 = por %p140, %p141
    %p143 = scmp.ne.s32.totalorder %s135, %s137
    %p144 = scmp.eq.s32.totalorder %s22, 3
    %p145 = por %p143, %p144
    %p146 = scmp.ne.s32.totalorder %s137, %s138
    %p147 = scmp.eq.s32.totalorder %s22, 0
    %p148 = por %p146, %p147
    %p149 = scmp.ne.s32.totalorder %s137, %s138
    %p150 = scmp.eq.s32.totalorder %s23, 3
    %p151 = por %p149, %p150
    %p153 = scmp.ne.s32.totalorder %s138, %s152
    %p154 = scmp.eq.s32.totalorder %s23, 0
    %p155 = por %p153, %p154
    %s157 = sadd.s32 %s156, 1
    %p160 = scmp.eq.s32.totalorder %s17, 3
    %p161 = scmp.ne.s32.totalorder %s156, %s158
    %p162 = scmp.eq.s32.totalorder %s17, 0
    %p163 = por %p161, %p162
    %p164 = scmp.ne.s32.totalorder %s156, %s158
    %p165 = scmp.eq.s32.totalorder %s22, 3
    %p166 = por %p164, %p165
    %p167 = scmp.ne.s32.totalorder %s158, %s159
    %p168 = scmp.eq.s32.totalorder %s22, 0
    %p169 = por %p167, %p168
    %p170 = scmp.ne.s32.totalorder %s158, %s159
    %p171 = scmp.eq.s32.totalorder %s23, 3
    %p172 = por %p170, %p171
    %p174 = scmp.ne.s32.totalorder %s159, %s173
    %p175 = scmp.eq.s32.totalorder %s23, 0
    %p176 = por %p174, %p175
    %s178 = sadd.s32 %s177, 1
    %p181 = scmp.eq.s32.totalorder %s17, 3
    %p182 = scmp.ne.s32.totalorder %s177, %s179
    %p183 = scmp.eq.s32.totalorder %s17, 0
    %p184 = por %p182, %p183
    %p185 = scmp.ne.s32.totalorder %s177, %s179
    %p186 = scmp.eq.s32.totalorder %s22, 3
    %p187 = por %p185, %p186
    %p188 = scmp.ne.s32.totalorder %s179, %s180
    %p189 = scmp.eq.s32.totalorder %s22, 0
    %p190 = por %p188, %p189
    %p191 = scmp.ne.s32.totalorder %s179, %s180
    %p192 = scmp.eq.s32.totalorder %s23, 3
    %p193 = por %p191, %p192
    %p195 = scmp.ne.s32.totalorder %s180, %s194
    %p196 = scmp.eq.s32.totalorder %s23, 0
    %p197 = por %p195, %p196
    %s199 = sadd.s32 %s198, 1
    %p202 = scmp.eq.s32.totalorder %s17, 3
    %p203 = scmp.ne.s32.totalorder %s198, %s200
    %p204 = scmp.eq.s32.totalorder %s17, 0
    %p205 = por %p203, %p204
    %p206 = scmp.ne.s32.totalorder %s198, %s200
    %p207 = scmp.eq.s32.totalorder %s22, 3
    %p208 = por %p206, %p207
    %p209 = scmp.ne.s32.totalorder %s200, %s201
    %p210 = scmp.eq.s32.totalorder %s22, 0
    %p211 = por %p209, %p210
    %p212 = scmp.ne.s32.totalorder %s200, %s201
    %p213 = scmp.eq.s32.totalorder %s23, 3
    %p214 = por %p212, %p213
    %p216 = scmp.ne.s32.totalorder %s201, %s215
    %p217 = scmp.eq.s32.totalorder %s23, 0
    %p218 = por %p216, %p217
    %s219 = ssub.s32 %s17, %s24
    %p220 = scmp.eq.s32.totalorder %s219, 0
    %s222 = sadd.s32 %s221, 1
    %s223 = scalar_select %p220, %s221, %s222
    %p226 = pneg %p220
    %p227 = scmp.eq.s32.totalorder %s17, 3
    %p228 = por %p226, %p227
    %p229 = scmp.ne.s32.totalorder %s221, %s224
    %p230 = scmp.eq.s32.totalorder %s17, 0
    %p231 = por %p229, %p230
    %p232 = scmp.ne.s32.totalorder %s221, %s224
    %p233 = scmp.eq.s32.totalorder %s22, 3
    %p234 = por %p232, %p233
    %p235 = scmp.ne.s32.totalorder %s224, %s225
    %p236 = scmp.eq.s32.totalorder %s22, 0
    %p237 = por %p235, %p236
    %p238 = scmp.ne.s32.totalorder %s224, %s225
    %p239 = scmp.eq.s32.totalorder %s23, 3
    %p240 = por %p238, %p239
    %p242 = scmp.ne.s32.totalorder %s225, %s241
    %p243 = scmp.eq.s32.totalorder %s23, 0
    %p244 = por %p242, %p243
    %p245 = scmp.le.s32.totalorder 1, %s17
    %p246 = scmp.lt.s32.totalorder %s17, 5
    %p247 = pnand %p245, %p246
    %p248 = pneg %p247
    // Predicated region
    $region9: #{text_classifier2_forward.1} parent=5 // pred_check
      _
    $region10: #{text_classifier2_forward.1} parent=5 // pred_check_branch
      %250 = sbr.rel (%p247) target = $region12
    $region11: #{text_classifier2_forward.1} parent=5 // pred_region
      %s251 = ssub.s32 %s17, 1
      // Predicated region
      $region13: #{text_classifier2_forward.1} parent=11 // pred_check
        %p252 = pneg %p64
      $region14: #{text_classifier2_forward.1} parent=11 // pred_check_branch
        %254 = sbr.rel (%p252) target = $region16
      $region15: #{text_classifier2_forward.1} parent=11 // pred_region
        _
      $region16: #{text_classifier2_forward.1} parent=11 // pred_fallthru
        _
      // Predicated region
      $region17: #{text_classifier2_forward.1} parent=11 // pred_check
        %p255 = pneg %p85
      $region18: #{text_classifier2_forward.1} parent=11 // pred_check_branch
        %257 = sbr.rel (%p255) target = $region20
      $region19: #{text_classifier2_forward.1} parent=11 // pred_region
        _
      $region20: #{text_classifier2_forward.1} parent=11 // pred_fallthru
        _
      // Predicated region
      $region21: #{text_classifier2_forward.1} parent=11 // pred_check
        %p258 = pneg %p106
      $region22: #{text_classifier2_forward.1} parent=11 // pred_check_branch
        %260 = sbr.rel (%p258) target = $region24
      $region23: #{text_classifier2_forward.1} parent=11 // pred_region
        _
      $region24: #{text_classifier2_forward.1} parent=11 // pred_fallthru
        _
      // Predicated region
      $region25: #{text_classifier2_forward.1} parent=11 // pred_check
        %p261 = pneg %p127
      $region26: #{text_classifier2_forward.1} parent=11 // pred_check_branch
        %263 = sbr.rel (%p261) target = $region28
      $region27: #{text_classifier2_forward.1} parent=11 // pred_region
        _
      $region28: #{text_classifier2_forward.1} parent=11 // pred_fallthru
        _
      // Predicated region
      $region29: #{text_classifier2_forward.1} parent=11 // pred_check
        %p264 = pneg %p148
      $region30: #{text_classifier2_forward.1} parent=11 // pred_check_branch
        %266 = sbr.rel (%p264) target = $region32
      $region31: #{text_classifier2_forward.1} parent=11 // pred_region
        _
      $region32: #{text_classifier2_forward.1} parent=11 // pred_fallthru
        _
      // Predicated region
      $region33: #{text_classifier2_forward.1} parent=11 // pred_check
        %p267 = pneg %p169
      $region34: #{text_classifier2_forward.1} parent=11 // pred_check_branch
        %269 = sbr.rel (%p267) target = $region36
      $region35: #{text_classifier2_forward.1} parent=11 // pred_region
        _
      $region36: #{text_classifier2_forward.1} parent=11 // pred_fallthru
        _
      // Predicated region
      $region37: #{text_classifier2_forward.1} parent=11 // pred_check
        %p270 = pneg %p190
      $region38: #{text_classifier2_forward.1} parent=11 // pred_check_branch
        %272 = sbr.rel (%p270) target = $region40
      $region39: #{text_classifier2_forward.1} parent=11 // pred_region
        _
      $region40: #{text_classifier2_forward.1} parent=11 // pred_fallthru
        _
      // Predicated region
      $region41: #{text_classifier2_forward.1} parent=11 // pred_check
        %p273 = pneg %p211
      $region42: #{text_classifier2_forward.1} parent=11 // pred_check_branch
        %275 = sbr.rel (%p273) target = $region44
      $region43: #{text_classifier2_forward.1} parent=11 // pred_region
        _
      $region44: #{text_classifier2_forward.1} parent=11 // pred_fallthru
        _
    $region12: #{text_classifier2_forward.1} parent=5 // pred_fallthru
      _
    %p276 = scmp.lt.s32.totalorder %s17, 4
    // Predicated region
    $region45: #{text_classifier2_forward.1} parent=5 // pred_check
      %p277 = pneg %p276
    $region46: #{text_classifier2_forward.1} parent=5 // pred_check_branch
      %279 = sbr.rel (%p277) target = $region48
    $region47: #{text_classifier2_forward.1} parent=5 // pred_region
      // Predicated region
      $region49: #{text_classifier2_forward.1} parent=47 // pred_check
        %p280 = pneg %p37
      $region50: #{text_classifier2_forward.1} parent=47 // pred_check_branch
        %282 = sbr.rel (%p280) target = $region52
      $region51: #{text_classifier2_forward.1} parent=47 // pred_region
        %p283 = scmp.lt.s32.totalorder %s17, 3
        %s284 = scalar_select %p283, %s17, 3
        %s285 = smul.addr %s284, 36
        %s286 = smul.addr %s285, 8
        %s287 = scalar_lea.vmem %s0, %s286
      $region52: #{text_classifier2_forward.1} parent=47 // pred_fallthru
        _
    $region48: #{text_classifier2_forward.1} parent=5 // pred_fallthru
      _
    %p288 = scmp.le.s32.totalorder 1, %s17
    %p289 = scmp.lt.s32.totalorder %s17, 5
    %p290 = pnand %p288, %p289
    %p291 = pneg %p290
    // Predicated region
    $region53: #{text_classifier2_forward.1} parent=5 // pred_check
      _
    $region54: #{text_classifier2_forward.1} parent=5 // pred_check_branch
      %293 = sbr.rel (%p290) target = $region56
    $region55: #{text_classifier2_forward.1} parent=5 // pred_region
      %s294 = ssub.s32 %s17, 1
      %p295 = scmp.lt.s32.totalorder %s22, 3
      %s296 = scalar_select %p295, %s22, 3
      %s297 = smul.addr %s296, 36
      %s298 = smul.addr %s297, 8
      %s299 = scalar_lea.vmem %s0, %s298
      %p300 = pneg %p43
      %p301 = pneg %p40
      %p302 = pneg %p64
      %p303 = pneg %p61
      %p304 = pneg %p85
      %p305 = pneg %p82
      %p306 = pneg %p106
      %p307 = pneg %p103
      %p308 = pneg %p127
      %p309 = pneg %p124
      %p310 = pneg %p148
      %p311 = pneg %p145
      %p312 = pneg %p169
      %p313 = pneg %p166
      %p314 = pneg %p190
      %p315 = pneg %p187
      %p316 = pneg %p211
      %p317 = pneg %p208
      %p318 = pneg %p237
      %p319 = pneg %p234
      %p320 = scmp.lt.s32.totalorder %s22, 3
      %s321 = scalar_select %p320, %s22, 3
      %s322 = scalar_lea.vmem %s9, %s321
      %p323 = scmp.lt.s32.totalorder %s22, 3
      %s324 = scalar_select %p323, %s22, 3
      %s325 = smul.addr %s324, 36
      %s326 = smul.addr %s325, 8
      %s327 = scalar_lea.vmem %s0, %s326
      %p328 = scmp.lt.s32.totalorder %s22, 3
      %s329 = scalar_select %p328, %s22, 3
      %s330 = scalar_lea.vmem %s9, %s329
      %v331 = vld [vmem:[%s1] sm:$0xff]
      %v332 = vld [vmem:[%s1 + $0x8] sm:$0xff]
      %v333 = vld [vmem:[%s1 + $0x10] sm:$0xff]
      %v334 = vld [vmem:[%s1 + $0x18] sm:$0xff]
      %v335 = vld [vmem:[%s2] sm:$0xff]
      %v336 = vld [vmem:[%s2 + $0x8] sm:$0xff]
      %v337 = vld [vmem:[%s2 + $0x10] sm:$0xff]
      %v338 = vld [vmem:[%s2 + $0x18] sm:$0xff]
      %v339 = vld [vmem:[%s327] sm:$0xff]
      %v340 = vld [vmem:[%s327 + $0x8] sm:$0xff]
      %v341 = vld [vmem:[%s327 + $0x10] sm:$0x1]
      %v342 = vld [vmem:[%s327 + $0x18] sm:$0x1]
      %344 = vset.pattern.permute.xlu0 0
      %345 = vperm.xlu0 %344, %v331
      %v346 = vpop.permute.xlu0 %345
      %349 = vset.pattern.permute.xlu0 0
      %350 = vperm.xlu0 %349, %v332
      %v351 = vpop.permute.xlu0 %350
      %354 = vset.pattern.permute.xlu0 0
      %355 = vperm.xlu0 %354, %v333
      %v356 = vpop.permute.xlu0 %355
      %359 = vset.pattern.permute.xlu0 0
      %360 = vperm.xlu0 %359, %v334
      %v361 = vpop.permute.xlu0 %360
      %v363 = vlaneseq
      %v364 = vshrl.u32 %v363, 7
      %v365 = vsub.s32 0, %v364
      %v366 = vrot.slane %v339, %v365
      %v367 = vlaneseq
      %v368 = vshrl.u32 %v367, 7
      %v369 = vsub.s32 0, %v368
      %v370 = vrot.slane %v340, %v369
      %v371 = vmul.f32 %v346, %v366
      %v372 = vmul.f32 %v346, %v370
      %v373 = vmul.f32 %v351, %v366
      %v374 = vmul.f32 %v351, %v370
      %v375 = vmul.f32 %v356, %v366
      %v376 = vmul.f32 %v356, %v370
      %v377 = vmul.f32 %v361, %v366
      %v378 = vmul.f32 %v361, %v370
      %379 = vset.pattern.permute.xlu0 1
      %380 = vperm.xlu0 %379, %v331
      %v381 = vpop.permute.xlu0 %380
      %383 = vset.pattern.permute.xlu0 1
      %384 = vperm.xlu0 %383, %v332
      %v385 = vpop.permute.xlu0 %384
      %387 = vset.pattern.permute.xlu0 1
      %388 = vperm.xlu0 %387, %v333
      %v389 = vpop.permute.xlu0 %388
      %391 = vset.pattern.permute.xlu0 1
      %392 = vperm.xlu0 %391, %v334
      %v393 = vpop.permute.xlu0 %392
      %v395 = vlaneseq
      %v396 = vshrl.u32 %v395, 7
      %v397 = vsub.s32 1, %v396
      %v398 = vrot.slane %v339, %v397
      %v399 = vlaneseq
      %v400 = vshrl.u32 %v399, 7
      %v401 = vsub.s32 1, %v400
      %v402 = vrot.slane %v340, %v401
      %v403 = vmul.f32 %v381, %v398
      %v404 = vmul.f32 %v381, %v402
      %v405 = vmul.f32 %v385, %v398
      %v406 = vmul.f32 %v385, %v402
      %v407 = vmul.f32 %v389, %v398
      %v408 = vmul.f32 %v389, %v402
      %v409 = vmul.f32 %v393, %v398
      %v410 = vmul.f32 %v393, %v402
      %v411 = vadd.f32 %v371, %v403
      %v412 = vadd.f32 %v372, %v404
      %v413 = vadd.f32 %v373, %v405
      %v414 = vadd.f32 %v374, %v406
      %v415 = vadd.f32 %v375, %v407
      %v416 = vadd.f32 %v376, %v408
      %v417 = vadd.f32 %v377, %v409
      %v418 = vadd.f32 %v378, %v410
      %419 = vset.pattern.permute.xlu0 2
      %420 = vperm.xlu0 %419, %v331
      %v421 = vpop.permute.xlu0 %420
      %423 = vset.pattern.permute.xlu0 2
      %424 = vperm.xlu0 %423, %v332
      %v425 = vpop.permute.xlu0 %424
      %427 = vset.pattern.permute.xlu0 2
      %428 = vperm.xlu0 %427, %v333
      %v429 = vpop.permute.xlu0 %428
      %431 = vset.pattern.permute.xlu0 2
      %432 = vperm.xlu0 %431, %v334
      %v433 = vpop.permute.xlu0 %432
      %v435 = vlaneseq
      %v436 = vshrl.u32 %v435, 7
      %v437 = vsub.s32 2, %v436
      %v438 = vrot.slane %v339, %v437
      %v439 = vlaneseq
      %v440 = vshrl.u32 %v439, 7
      %v441 = vsub.s32 2, %v440
      %v442 = vrot.slane %v340, %v441
      %v443 = vmul.f32 %v421, %v438
      %v444 = vmul.f32 %v421, %v442
      %v445 = vmul.f32 %v425, %v438
      %v446 = vmul.f32 %v425, %v442
      %v447 = vmul.f32 %v429, %v438
      %v448 = vmul.f32 %v429, %v442
      %v449 = vmul.f32 %v433, %v438
      %v450 = vmul.f32 %v433, %v442
      %v451 = vadd.f32 %v411, %v443
      %v452 = vadd.f32 %v412, %v444
      %v453 = vadd.f32 %v413, %v445
      %v454 = vadd.f32 %v414, %v446
      %v455 = vadd.f32 %v415, %v447
      %v456 = vadd.f32 %v416, %v448
      %v457 = vadd.f32 %v417, %v449
      %v458 = vadd.f32 %v418, %v450
      %459 = vset.pattern.permute.xlu0 3
      %460 = vperm.xlu0 %459, %v331
      %v461 = vpop.permute.xlu0 %460
      %463 = vset.pattern.permute.xlu0 3
      %464 = vperm.xlu0 %463, %v332
      %v465 = vpop.permute.xlu0 %464
      %467 = vset.pattern.permute.xlu0 3
      %468 = vperm.xlu0 %467, %v333
      %v469 = vpop.permute.xlu0 %468
      %471 = vset.pattern.permute.xlu0 3
      %472 = vperm.xlu0 %471, %v334
      %v473 = vpop.permute.xlu0 %472
      %v475 = vlaneseq
      %v476 = vshrl.u32 %v475, 7
      %v477 = vsub.s32 3, %v476
      %v478 = vrot.slane %v339, %v477
      %v479 = vlaneseq
      %v480 = vshrl.u32 %v479, 7
      %v481 = vsub.s32 3, %v480
      %v482 = vrot.slane %v340, %v481
      %v483 = vmul.f32 %v461, %v478
      %v484 = vmul.f32 %v461, %v482
      %v485 = vmul.f32 %v465, %v478
      %v486 = vmul.f32 %v465, %v482
      %v487 = vmul.f32 %v469, %v478
      %v488 = vmul.f32 %v469, %v482
      %v489 = vmul.f32 %v473, %v478
      %v490 = vmul.f32 %v473, %v482
      %v491 = vadd.f32 %v451, %v483
      %v492 = vadd.f32 %v452, %v484
      %v493 = vadd.f32 %v453, %v485
      %v494 = vadd.f32 %v454, %v486
      %v495 = vadd.f32 %v455, %v487
      %v496 = vadd.f32 %v456, %v488
      %v497 = vadd.f32 %v457, %v489
      %v498 = vadd.f32 %v458, %v490
      %499 = vset.pattern.permute.xlu0 4
      %500 = vperm.xlu0 %499, %v331
      %v501 = vpop.permute.xlu0 %500
      %503 = vset.pattern.permute.xlu0 4
      %504 = vperm.xlu0 %503, %v332
      %v505 = vpop.permute.xlu0 %504
      %507 = vset.pattern.permute.xlu0 4
      %508 = vperm.xlu0 %507, %v333
      %v509 = vpop.permute.xlu0 %508
      %511 = vset.pattern.permute.xlu0 4
      %512 = vperm.xlu0 %511, %v334
      %v513 = vpop.permute.xlu0 %512
      %v515 = vlaneseq
      %v516 = vshrl.u32 %v515, 7
      %v517 = vsub.s32 4, %v516
      %v518 = vrot.slane %v339, %v517
      %v519 = vlaneseq
      %v520 = vshrl.u32 %v519, 7
      %v521 = vsub.s32 4, %v520
      %v522 = vrot.slane %v340, %v521
      %v523 = vmul.f32 %v501, %v518
      %v524 = vmul.f32 %v501, %v522
      %v525 = vmul.f32 %v505, %v518
      %v526 = vmul.f32 %v505, %v522
      %v527 = vmul.f32 %v509, %v518
      %v528 = vmul.f32 %v509, %v522
      %v529 = vmul.f32 %v513, %v518
      %v530 = vmul.f32 %v513, %v522
      %v531 = vadd.f32 %v491, %v523
      %v532 = vadd.f32 %v492, %v524
      %v533 = vadd.f32 %v493, %v525
      %v534 = vadd.f32 %v494, %v526
      %v535 = vadd.f32 %v495, %v527
      %v536 = vadd.f32 %v496, %v528
      %v537 = vadd.f32 %v497, %v529
      %v538 = vadd.f32 %v498, %v530
      %539 = vset.pattern.permute.xlu0 5
      %540 = vperm.xlu0 %539, %v331
      %v541 = vpop.permute.xlu0 %540
      %543 = vset.pattern.permute.xlu0 5
      %544 = vperm.xlu0 %543, %v332
      %v545 = vpop.permute.xlu0 %544
      %547 = vset.pattern.permute.xlu0 5
      %548 = vperm.xlu0 %547, %v333
      %v549 = vpop.permute.xlu0 %548
      %551 = vset.pattern.permute.xlu0 5
      %552 = vperm.xlu0 %551, %v334
      %v553 = vpop.permute.xlu0 %552
      %v555 = vlaneseq
      %v556 = vshrl.u32 %v555, 7
      %v557 = vsub.s32 5, %v556
      %v558 = vrot.slane %v339, %v557
      %v559 = vlaneseq
      %v560 = vshrl.u32 %v559, 7
      %v561 = vsub.s32 5, %v560
      %v562 = vrot.slane %v340, %v561
      %v563 = vmul.f32 %v541, %v558
      %v564 = vmul.f32 %v541, %v562
      %v565 = vmul.f32 %v545, %v558
      %v566 = vmul.f32 %v545, %v562
      %v567 = vmul.f32 %v549, %v558
      %v568 = vmul.f32 %v549, %v562
      %v569 = vmul.f32 %v553, %v558
      %v570 = vmul.f32 %v553, %v562
      %v571 = vadd.f32 %v531, %v563
      %v572 = vadd.f32 %v532, %v564
      %v573 = vadd.f32 %v533, %v565
      %v574 = vadd.f32 %v534, %v566
      %v575 = vadd.f32 %v535, %v567
      %v576 = vadd.f32 %v536, %v568
      %v577 = vadd.f32 %v537, %v569
      %v578 = vadd.f32 %v538, %v570
      %579 = vset.pattern.permute.xlu0 6
      %580 = vperm.xlu0 %579, %v331
      %v581 = vpop.permute.xlu0 %580
      %583 = vset.pattern.permute.xlu0 6
      %584 = vperm.xlu0 %583, %v332
      %v585 = vpop.permute.xlu0 %584
      %587 = vset.pattern.permute.xlu0 6
      %588 = vperm.xlu0 %587, %v333
      %v589 = vpop.permute.xlu0 %588
      %591 = vset.pattern.permute.xlu0 6
      %592 = vperm.xlu0 %591, %v334
      %v593 = vpop.permute.xlu0 %592
      %v595 = vlaneseq
      %v596 = vshrl.u32 %v595, 7
      %v597 = vsub.s32 6, %v596
      %v598 = vrot.slane %v339, %v597
      %v599 = vlaneseq
      %v600 = vshrl.u32 %v599, 7
      %v601 = vsub.s32 6, %v600
      %v602 = vrot.slane %v340, %v601
      %v603 = vmul.f32 %v581, %v598
      %v604 = vmul.f32 %v581, %v602
      %v605 = vmul.f32 %v585, %v598
      %v606 = vmul.f32 %v585, %v602
      %v607 = vmul.f32 %v589, %v598
      %v608 = vmul.f32 %v589, %v602
      %v609 = vmul.f32 %v593, %v598
      %v610 = vmul.f32 %v593, %v602
      %v611 = vadd.f32 %v571, %v603
      %v612 = vadd.f32 %v572, %v604
      %v613 = vadd.f32 %v573, %v605
      %v614 = vadd.f32 %v574, %v606
      %v615 = vadd.f32 %v575, %v607
      %v616 = vadd.f32 %v576, %v608
      %v617 = vadd.f32 %v577, %v609
      %v618 = vadd.f32 %v578, %v610
      %619 = vset.pattern.permute.xlu0 7
      %620 = vperm.xlu0 %619, %v331
      %v621 = vpop.permute.xlu0 %620
      %623 = vset.pattern.permute.xlu0 7
      %624 = vperm.xlu0 %623, %v332
      %v625 = vpop.permute.xlu0 %624
      %627 = vset.pattern.permute.xlu0 7
      %628 = vperm.xlu0 %627, %v333
      %v629 = vpop.permute.xlu0 %628
      %631 = vset.pattern.permute.xlu0 7
      %632 = vperm.xlu0 %631, %v334
      %v633 = vpop.permute.xlu0 %632
      %v635 = vlaneseq
      %v636 = vshrl.u32 %v635, 7
      %v637 = vsub.s32 7, %v636
      %v638 = vrot.slane %v339, %v637
      %v639 = vlaneseq
      %v640 = vshrl.u32 %v639, 7
      %v641 = vsub.s32 7, %v640
      %v642 = vrot.slane %v340, %v641
      %v643 = vmul.f32 %v621, %v638
      %v644 = vmul.f32 %v621, %v642
      %v645 = vmul.f32 %v625, %v638
      %v646 = vmul.f32 %v625, %v642
      %v647 = vmul.f32 %v629, %v638
      %v648 = vmul.f32 %v629, %v642
      %v649 = vmul.f32 %v633, %v638
      %v650 = vmul.f32 %v633, %v642
      %v651 = vadd.f32 %v611, %v643
      %v652 = vadd.f32 %v612, %v644
      %v653 = vadd.f32 %v613, %v645
      %v654 = vadd.f32 %v614, %v646
      %v655 = vadd.f32 %v615, %v647
      %v656 = vadd.f32 %v616, %v648
      %v657 = vadd.f32 %v617, %v649
      %v658 = vadd.f32 %v618, %v650
      %659 = vset.pattern.permute.xlu0 8
      %660 = vperm.xlu0 %659, %v331
      %v661 = vpop.permute.xlu0 %660
      %663 = vset.pattern.permute.xlu0 8
      %664 = vperm.xlu0 %663, %v332
      %v665 = vpop.permute.xlu0 %664
      %667 = vset.pattern.permute.xlu0 8
      %668 = vperm.xlu0 %667, %v333
      %v669 = vpop.permute.xlu0 %668
      %671 = vset.pattern.permute.xlu0 8
      %672 = vperm.xlu0 %671, %v334
      %v673 = vpop.permute.xlu0 %672
      %v675 = vlaneseq
      %v676 = vshrl.u32 %v675, 7
      %v677 = vsub.s32 0, %v676
      %v678 = vrot.slane %v341, %v677
      %v679 = vlaneseq
      %v680 = vshrl.u32 %v679, 7
      %v681 = vsub.s32 0, %v680
      %v682 = vrot.slane %v342, %v681
      %v683 = vmul.f32 %v661, %v678
      %v684 = vmul.f32 %v661, %v682
      %v685 = vmul.f32 %v665, %v678
      %v686 = vmul.f32 %v665, %v682
      %v687 = vmul.f32 %v669, %v678
      %v688 = vmul.f32 %v669, %v682
      %v689 = vmul.f32 %v673, %v678
      %v690 = vmul.f32 %v673, %v682
      %v691 = vadd.f32 %v651, %v683
      %v692 = vadd.f32 %v652, %v684
      %v693 = vadd.f32 %v653, %v685
      %v694 = vadd.f32 %v654, %v686
      %v695 = vadd.f32 %v655, %v687
      %v696 = vadd.f32 %v656, %v688
      %v697 = vadd.f32 %v657, %v689
      %v698 = vadd.f32 %v658, %v690
      %700 = vset.pattern.permute.xlu0 0
      %701 = vperm.xlu0 %700, %v335
      %v702 = vpop.permute.xlu0 %701
      %705 = vset.pattern.permute.xlu0 0
      %706 = vperm.xlu0 %705, %v336
      %v707 = vpop.permute.xlu0 %706
      %710 = vset.pattern.permute.xlu0 0
      %711 = vperm.xlu0 %710, %v337
      %v712 = vpop.permute.xlu0 %711
      %715 = vset.pattern.permute.xlu0 0
      %716 = vperm.xlu0 %715, %v338
      %v717 = vpop.permute.xlu0 %716
      %v719 = vadd.f32 %v691, %v702
      %v720 = vadd.f32 %v692, %v702
      %v721 = vadd.f32 %v693, %v707
      %v722 = vadd.f32 %v694, %v707
      %v723 = vadd.f32 %v695, %v712
      %v724 = vadd.f32 %v696, %v712
      %v725 = vadd.f32 %v697, %v717
      %v726 = vadd.f32 %v698, %v717
      %v727 = vmax.f32 %v719, 0.0
      %v728 = vmax.f32 %v720, 0.0
      %v729 = vmax.f32 %v721, 0.0
      %v730 = vmax.f32 %v722, 0.0
      %v731 = vmax.f32 %v723, 0.0
      %v732 = vmax.f32 %v724, 0.0
      %v733 = vmax.f32 %v725, 0.0
      %v734 = vmax.f32 %v726, 0.0
      %v735 = vld [vmem:[%s3] sm:$0xff]
      %v736 = vld [vmem:[%s3 + $0x8] sm:$0xff]
      %v737 = vld [vmem:[%s3 + $0x10] sm:$0xff]
      %v738 = vld [vmem:[%s3 + $0x18] sm:$0xff]
      %s739 = scalar_lea.vmem %s327, 32
      %v740 = vld [vmem:[%s739] sm:$0xff]
      %v741 = vld [vmem:[%s739 + $0x8] sm:$0xff]
      %v742 = vld [vmem:[%s739 + $0x10] sm:$0x1]
      %v743 = vld [vmem:[%s739 + $0x18] sm:$0x1]
      %v744 = vlaneseq
      %v745 = vshrl.u32 %v744, 7
      %v746 = vsub.s32 0, %v745
      %v747 = vrot.slane %v740, %v746
      %v748 = vlaneseq
      %v749 = vshrl.u32 %v748, 7
      %v750 = vsub.s32 0, %v749
      %v751 = vrot.slane %v741, %v750
      %v752 = vmul.f32 %v346, %v747
      %v753 = vmul.f32 %v346, %v751
      %v754 = vmul.f32 %v351, %v747
      %v755 = vmul.f32 %v351, %v751
      %v756 = vmul.f32 %v356, %v747
      %v757 = vmul.f32 %v356, %v751
      %v758 = vmul.f32 %v361, %v747
      %v759 = vmul.f32 %v361, %v751
      %v760 = vlaneseq
      %v761 = vshrl.u32 %v760, 7
      %v762 = vsub.s32 1, %v761
      %v763 = vrot.slane %v740, %v762
      %v764 = vlaneseq
      %v765 = vshrl.u32 %v764, 7
      %v766 = vsub.s32 1, %v765
      %v767 = vrot.slane %v741, %v766
      %v768 = vmul.f32 %v381, %v763
      %v769 = vmul.f32 %v381, %v767
      %v770 = vmul.f32 %v385, %v763
      %v771 = vmul.f32 %v385, %v767
      %v772 = vmul.f32 %v389, %v763
      %v773 = vmul.f32 %v389, %v767
      %v774 = vmul.f32 %v393, %v763
      %v775 = vmul.f32 %v393, %v767
      %v776 = vadd.f32 %v752, %v768
      %v777 = vadd.f32 %v753, %v769
      %v778 = vadd.f32 %v754, %v770
      %v779 = vadd.f32 %v755, %v771
      %v780 = vadd.f32 %v756, %v772
      %v781 = vadd.f32 %v757, %v773
      %v782 = vadd.f32 %v758, %v774
      %v783 = vadd.f32 %v759, %v775
      %v784 = vlaneseq
      %v785 = vshrl.u32 %v784, 7
      %v786 = vsub.s32 2, %v785
      %v787 = vrot.slane %v740, %v786
      %v788 = vlaneseq
      %v789 = vshrl.u32 %v788, 7
      %v790 = vsub.s32 2, %v789
      %v791 = vrot.slane %v741, %v790
      %v792 = vmul.f32 %v421, %v787
      %v793 = vmul.f32 %v421, %v791
      %v794 = vmul.f32 %v425, %v787
      %v795 = vmul.f32 %v425, %v791
      %v796 = vmul.f32 %v429, %v787
      %v797 = vmul.f32 %v429, %v791
      %v798 = vmul.f32 %v433, %v787
      %v799 = vmul.f32 %v433, %v791
      %v800 = vadd.f32 %v776, %v792
      %v801 = vadd.f32 %v777, %v793
      %v802 = vadd.f32 %v778, %v794
      %v803 = vadd.f32 %v779, %v795
      %v804 = vadd.f32 %v780, %v796
      %v805 = vadd.f32 %v781, %v797
      %v806 = vadd.f32 %v782, %v798
      %v807 = vadd.f32 %v783, %v799
      %v808 = vlaneseq
      %v809 = vshrl.u32 %v808, 7
      %v810 = vsub.s32 3, %v809
      %v811 = vrot.slane %v740, %v810
      %v812 = vlaneseq
      %v813 = vshrl.u32 %v812, 7
      %v814 = vsub.s32 3, %v813
      %v815 = vrot.slane %v741, %v814
      %v816 = vmul.f32 %v461, %v811
      %v817 = vmul.f32 %v461, %v815
      %v818 = vmul.f32 %v465, %v811
      %v819 = vmul.f32 %v465, %v815
      %v820 = vmul.f32 %v469, %v811
      %v821 = vmul.f32 %v469, %v815
      %v822 = vmul.f32 %v473, %v811
      %v823 = vmul.f32 %v473, %v815
      %v824 = vadd.f32 %v800, %v816
      %v825 = vadd.f32 %v801, %v817
      %v826 = vadd.f32 %v802, %v818
      %v827 = vadd.f32 %v803, %v819
      %v828 = vadd.f32 %v804, %v820
      %v829 = vadd.f32 %v805, %v821
      %v830 = vadd.f32 %v806, %v822
      %v831 = vadd.f32 %v807, %v823
      %v832 = vlaneseq
      %v833 = vshrl.u32 %v832, 7
      %v834 = vsub.s32 4, %v833
      %v835 = vrot.slane %v740, %v834
      %v836 = vlaneseq
      %v837 = vshrl.u32 %v836, 7
      %v838 = vsub.s32 4, %v837
      %v839 = vrot.slane %v741, %v838
      %v840 = vmul.f32 %v501, %v835
      %v841 = vmul.f32 %v501, %v839
      %v842 = vmul.f32 %v505, %v835
      %v843 = vmul.f32 %v505, %v839
      %v844 = vmul.f32 %v509, %v835
      %v845 = vmul.f32 %v509, %v839
      %v846 = vmul.f32 %v513, %v835
      %v847 = vmul.f32 %v513, %v839
      %v848 = vadd.f32 %v824, %v840
      %v849 = vadd.f32 %v825, %v841
      %v850 = vadd.f32 %v826, %v842
      %v851 = vadd.f32 %v827, %v843
      %v852 = vadd.f32 %v828, %v844
      %v853 = vadd.f32 %v829, %v845
      %v854 = vadd.f32 %v830, %v846
      %v855 = vadd.f32 %v831, %v847
      %v856 = vlaneseq
      %v857 = vshrl.u32 %v856, 7
      %v858 = vsub.s32 5, %v857
      %v859 = vrot.slane %v740, %v858
      %v860 = vlaneseq
      %v861 = vshrl.u32 %v860, 7
      %v862 = vsub.s32 5, %v861
      %v863 = vrot.slane %v741, %v862
      %v864 = vmul.f32 %v541, %v859
      %v865 = vmul.f32 %v541, %v863
      %v866 = vmul.f32 %v545, %v859
      %v867 = vmul.f32 %v545, %v863
      %v868 = vmul.f32 %v549, %v859
      %v869 = vmul.f32 %v549, %v863
      %v870 = vmul.f32 %v553, %v859
      %v871 = vmul.f32 %v553, %v863
      %v872 = vadd.f32 %v848, %v864
      %v873 = vadd.f32 %v849, %v865
      %v874 = vadd.f32 %v850, %v866
      %v875 = vadd.f32 %v851, %v867
      %v876 = vadd.f32 %v852, %v868
      %v877 = vadd.f32 %v853, %v869
      %v878 = vadd.f32 %v854, %v870
      %v879 = vadd.f32 %v855, %v871
      %v880 = vlaneseq
      %v881 = vshrl.u32 %v880, 7
      %v882 = vsub.s32 6, %v881
      %v883 = vrot.slane %v740, %v882
      %v884 = vlaneseq
      %v885 = vshrl.u32 %v884, 7
      %v886 = vsub.s32 6, %v885
      %v887 = vrot.slane %v741, %v886
      %v888 = vmul.f32 %v581, %v883
      %v889 = vmul.f32 %v581, %v887
      %v890 = vmul.f32 %v585, %v883
      %v891 = vmul.f32 %v585, %v887
      %v892 = vmul.f32 %v589, %v883
      %v893 = vmul.f32 %v589, %v887
      %v894 = vmul.f32 %v593, %v883
      %v895 = vmul.f32 %v593, %v887
      %v896 = vadd.f32 %v872, %v888
      %v897 = vadd.f32 %v873, %v889
      %v898 = vadd.f32 %v874, %v890
      %v899 = vadd.f32 %v875, %v891
      %v900 = vadd.f32 %v876, %v892
      %v901 = vadd.f32 %v877, %v893
      %v902 = vadd.f32 %v878, %v894
      %v903 = vadd.f32 %v879, %v895
      %v904 = vlaneseq
      %v905 = vshrl.u32 %v904, 7
      %v906 = vsub.s32 7, %v905
      %v907 = vrot.slane %v740, %v906
      %v908 = vlaneseq
      %v909 = vshrl.u32 %v908, 7
      %v910 = vsub.s32 7, %v909
      %v911 = vrot.slane %v741, %v910
      %v912 = vmul.f32 %v621, %v907
      %v913 = vmul.f32 %v621, %v911
      %v914 = vmul.f32 %v625, %v907
      %v915 = vmul.f32 %v625, %v911
      %v916 = vmul.f32 %v629, %v907
      %v917 = vmul.f32 %v629, %v911
      %v918 = vmul.f32 %v633, %v907
      %v919 = vmul.f32 %v633, %v911
      %v920 = vadd.f32 %v896, %v912
      %v921 = vadd.f32 %v897, %v913
      %v922 = vadd.f32 %v898, %v914
      %v923 = vadd.f32 %v899, %v915
      %v924 = vadd.f32 %v900, %v916
      %v925 = vadd.f32 %v901, %v917
      %v926 = vadd.f32 %v902, %v918
      %v927 = vadd.f32 %v903, %v919
      %v928 = vlaneseq
      %v929 = vshrl.u32 %v928, 7
      %v930 = vsub.s32 0, %v929
      %v931 = vrot.slane %v742, %v930
      %v932 = vlaneseq
      %v933 = vshrl.u32 %v932, 7
      %v934 = vsub.s32 0, %v933
      %v935 = vrot.slane %v743, %v934
      %v936 = vmul.f32 %v661, %v931
      %v937 = vmul.f32 %v661, %v935
      %v938 = vmul.f32 %v665, %v931
      %v939 = vmul.f32 %v665, %v935
      %v940 = vmul.f32 %v669, %v931
      %v941 = vmul.f32 %v669, %v935
      %v942 = vmul.f32 %v673, %v931
      %v943 = vmul.f32 %v673, %v935
      %v944 = vadd.f32 %v920, %v936
      %v945 = vadd.f32 %v921, %v937
      %v946 = vadd.f32 %v922, %v938
      %v947 = vadd.f32 %v923, %v939
      %v948 = vadd.f32 %v924, %v940
      %v949 = vadd.f32 %v925, %v941
      %v950 = vadd.f32 %v926, %v942
      %v951 = vadd.f32 %v927, %v943
      %v952 = vadd.f32 %v944, %v702
      %v953 = vadd.f32 %v945, %v702
      %v954 = vadd.f32 %v946, %v707
      %v955 = vadd.f32 %v947, %v707
      %v956 = vadd.f32 %v948, %v712
      %v957 = vadd.f32 %v949, %v712
      %v958 = vadd.f32 %v950, %v717
      %v959 = vadd.f32 %v951, %v717
      %v960 = vmax.f32 %v952, 0.0
      %v961 = vmax.f32 %v953, 0.0
      %v962 = vmax.f32 %v954, 0.0
      %v963 = vmax.f32 %v955, 0.0
      %v964 = vmax.f32 %v956, 0.0
      %v965 = vmax.f32 %v957, 0.0
      %v966 = vmax.f32 %v958, 0.0
      %v967 = vmax.f32 %v959, 0.0
      %s968 = scalar_lea.vmem %s3, 32
      %v969 = vld [vmem:[%s968] sm:$0xff]
      %v970 = vld [vmem:[%s968 + $0x8] sm:$0xff]
      %v971 = vld [vmem:[%s968 + $0x10] sm:$0xff]
      %v972 = vld [vmem:[%s968 + $0x18] sm:$0xff]
      %vm973 = vcmask 261120
      %v975 = vsel %vm973, %v969, 0
      %v978 = vsel %vm973, %v970, 0
      %v981 = vsel %vm973, %v971, 0
      %v984 = vsel %vm973, %v972, 0
      %986 = vmatprep.subr.mxu0 %v961
      %987 = vmatpush1.msra.mxu0 %v960
      %988 = vmatprep.subr.mxu0 %v963
      %989 = vmatpush1.msra.mxu0 %v962
      %990 = vmatprep.subr.mxu0 %v965
      %991 = vmatpush1.msra.mxu0 %v964
      %992 = vmatprep.subr.mxu0 %v967
      %993 = vmatpush1.msra.mxu0 %v966
      %994 = vmatprep.subr.mxu0 0.0
      %995 = vmatpush1.msra.mxu0 0.0
      %996 = vmatprep.subr.mxu0 0.0
      %997 = vmatpush1.msra.mxu0 0.0
      %998 = vmatprep.subr.mxu0 0.0
      %999 = vmatpush1.msra.mxu0 0.0
      %1000 = vmatprep.subr.mxu0 0.0
      %1001 = vmatpush1.msra.mxu0 0.0
      %1002 = vmatprep.subr.mxu0 0.0
      %1003 = vmatpush1.msra.mxu0 0.0
      %1004 = vmatprep.subr.mxu0 0.0
      %1005 = vmatpush1.msra.mxu0 0.0
      %1006 = vmatprep.subr.mxu0 0.0
      %1007 = vmatpush1.msra.mxu0 0.0
      %1008 = vmatprep.subr.mxu0 0.0
      %1009 = vmatpush1.msra.mxu0 0.0
      %1010 = vmatprep.subr.mxu0 0.0
      %1011 = vmatpush1.msra.mxu0 0.0
      %1012 = vmatprep.subr.mxu0 0.0
      %1013 = vmatpush1.msra.mxu0 0.0
      %1014 = vmatprep.subr.mxu0 0.0
      %1015 = vmatpush1.msra.mxu0 0.0
      %1016 = vmatprep.subr.mxu0 0.0
      %1017 = vmatpush1.msra.mxu0 0.0
      %1018 = vmatprep.subr.mxu0 0.0
      %1019 = vmatpush1.msra.mxu0 0.0
      %1020 = vmatprep.subr.mxu0 0.0
      %1021 = vmatpush1.msra.mxu0 0.0
      %1022 = vmatprep.subr.mxu0 0.0
      %1023 = vmatpush1.msra.mxu0 0.0
      %1024 = vmatprep.subr.mxu0 0.0
      %1025 = vmatpush1.msra.mxu0 0.0
      %1026 = vmatprep.subr.mxu0 0.0
      %1027 = vmatpush1.msra.mxu0 0.0
      %1028 = vmatprep.subr.mxu0 0.0
      %1029 = vmatpush1.msra.mxu0 0.0
      %1030 = vmatprep.subr.mxu0 0.0
      %1031 = vmatpush1.msra.mxu0 0.0
      %1032 = vmatprep.subr.mxu0 0.0
      %1033 = vmatpush1.msra.mxu0 0.0
      %1034 = vmatprep.subr.mxu0 0.0
      %1035 = vmatpush1.msra.mxu0 0.0
      %1036 = vmatprep.subr.mxu0 0.0
      %1037 = vmatpush1.msra.mxu0 0.0
      %1038 = vmatprep.subr.mxu0 0.0
      %1039 = vmatpush1.msra.mxu0 0.0
      %1040 = vmatprep.subr.mxu0 0.0
      %1041 = vmatpush1.msra.mxu0 0.0
      %1042 = vmatprep.subr.mxu0 0.0
      %1043 = vmatpush1.msra.mxu0 0.0
      %1044 = vmatprep.subr.mxu0 0.0
      %1045 = vmatpush1.msra.mxu0 0.0
      %1046 = vmatprep.subr.mxu0 0.0
      %1047 = vmatpush1.msra.mxu0 0.0
      %1048 = vmatprep.subr.mxu0 0.0
      %1049 = vmatpush1.msra.mxu0 0.0
      %1050 = vmatprep.mubr.f32.mxu0 0.0
      %1051 = vmatmul.mubr.f32.gmra.mrb[0].mxu0 %v975
      %v1052 = vpop.f32.mrb[0].mxu0
      %v1053 = vadd.f32 0.0, %v1052
      %v1054 = vpop.f32.mrb[0].mxu0
      %v1055 = vadd.f32 0.0, %v1054
      %1056 = vmatprep.mubr.f32.mxu0 0.0
      %1057 = vmatmul.mubr.f32.gmra.mrb[0].mxu0 %v978
      %v1058 = vpop.f32.mrb[0].mxu0
      %v1059 = vadd.f32 0.0, %v1058
      %v1060 = vpop.f32.mrb[0].mxu0
      %v1061 = vadd.f32 0.0, %v1060
      %1062 = vmatprep.mubr.f32.mxu0 0.0
      %1063 = vmatmul.mubr.f32.gmra.mrb[0].mxu0 %v981
      %v1064 = vpop.f32.mrb[0].mxu0
      %v1065 = vadd.f32 0.0, %v1064
      %v1066 = vpop.f32.mrb[0].mxu0
      %v1067 = vadd.f32 0.0, %v1066
      %1068 = vmatprep.mubr.f32.mxu0 0.0
      %1069 = vmatmul.mubr.f32.gmra.mrb[0].mxu0 %v984
      %v1070 = vpop.f32.mrb[0].mxu0
      %v1071 = vadd.f32 0.0, %v1070
      %v1072 = vpop.f32.mrb[0].mxu0
      %v1073 = vadd.f32 0.0, %v1072
      %1074 = vdwg.mxu0
      %v1076 = vsel %vm973, %v735, 0
      %v1079 = vsel %vm973, %v736, 0
      %v1082 = vsel %vm973, %v737, 0
      %v1085 = vsel %vm973, %v738, 0
      %1087 = vmatprep.subr.mxu0 %v728
      %1088 = vmatpush1.msra.mxu0 %v727
      %1089 = vmatprep.subr.mxu0 %v730
      %1090 = vmatpush1.msra.mxu0 %v729
      %1091 = vmatprep.subr.mxu0 %v732
      %1092 = vmatpush1.msra.mxu0 %v731
      %1093 = vmatprep.subr.mxu0 %v734
      %1094 = vmatpush1.msra.mxu0 %v733
      %1095 = vmatprep.subr.mxu0 0.0
      %1096 = vmatpush1.msra.mxu0 0.0
      %1097 = vmatprep.subr.mxu0 0.0
      %1098 = vmatpush1.msra.mxu0 0.0
      %1099 = vmatprep.subr.mxu0 0.0
      %1100 = vmatpush1.msra.mxu0 0.0
      %1101 = vmatprep.subr.mxu0 0.0
      %1102 = vmatpush1.msra.mxu0 0.0
      %1103 = vmatprep.subr.mxu0 0.0
      %1104 = vmatpush1.msra.mxu0 0.0
      %1105 = vmatprep.subr.mxu0 0.0
      %1106 = vmatpush1.msra.mxu0 0.0
      %1107 = vmatprep.subr.mxu0 0.0
      %1108 = vmatpush1.msra.mxu0 0.0
      %1109 = vmatprep.subr.mxu0 0.0
      %1110 = vmatpush1.msra.mxu0 0.0
      %1111 = vmatprep.subr.mxu0 0.0
      %1112 = vmatpush1.msra.mxu0 0.0
      %1113 = vmatprep.subr.mxu0 0.0
      %1114 = vmatpush1.msra.mxu0 0.0
      %1115 = vmatprep.subr.mxu0 0.0
      %1116 = vmatpush1.msra.mxu0 0.0
      %1117 = vmatprep.subr.mxu0 0.0
      %1118 = vmatpush1.msra.mxu0 0.0
      %1119 = vmatprep.subr.mxu0 0.0
      %1120 = vmatpush1.msra.mxu0 0.0
      %1121 = vmatprep.subr.mxu0 0.0
      %1122 = vmatpush1.msra.mxu0 0.0
      %1123 = vmatprep.subr.mxu0 0.0
      %1124 = vmatpush1.msra.mxu0 0.0
      %1125 = vmatprep.subr.mxu0 0.0
      %1126 = vmatpush1.msra.mxu0 0.0
      %1127 = vmatprep.subr.mxu0 0.0
      %1128 = vmatpush1.msra.mxu0 0.0
      %1129 = vmatprep.subr.mxu0 0.0
      %1130 = vmatpush1.msra.mxu0 0.0
      %1131 = vmatprep.subr.mxu0 0.0
      %1132 = vmatpush1.msra.mxu0 0.0
      %1133 = vmatprep.subr.mxu0 0.0
      %1134 = vmatpush1.msra.mxu0 0.0
      %1135 = vmatprep.subr.mxu0 0.0
      %1136 = vmatpush1.msra.mxu0 0.0
      %1137 = vmatprep.subr.mxu0 0.0
      %1138 = vmatpush1.msra.mxu0 0.0
      %1139 = vmatprep.subr.mxu0 0.0
      %1140 = vmatpush1.msra.mxu0 0.0
      %1141 = vmatprep.subr.mxu0 0.0
      %1142 = vmatpush1.msra.mxu0 0.0
      %1143 = vmatprep.subr.mxu0 0.0
      %1144 = vmatpush1.msra.mxu0 0.0
      %1145 = vmatprep.subr.mxu0 0.0
      %1146 = vmatpush1.msra.mxu0 0.0
      %1147 = vmatprep.subr.mxu0 0.0
      %1148 = vmatpush1.msra.mxu0 0.0
      %1149 = vmatprep.subr.mxu0 0.0
      %1150 = vmatpush1.msra.mxu0 0.0
      %1151 = vmatprep.mubr.f32.mxu0 0.0
      %1152 = vmatmul.mubr.f32.gmra.mrb[0].mxu0 %v1076
      %v1153 = vpop.f32.mrb[0].mxu0
      %v1154 = vadd.f32 %v1053, %v1153
      %v1155 = vpop.f32.mrb[0].mxu0
      %v1156 = vadd.f32 %v1055, %v1155
      %1157 = vmatprep.mubr.f32.mxu0 0.0
      %1158 = vmatmul.mubr.f32.gmra.mrb[0].mxu0 %v1079
      %v1159 = vpop.f32.mrb[0].mxu0
      %v1160 = vadd.f32 %v1059, %v1159
      %v1161 = vpop.f32.mrb[0].mxu0
      %v1162 = vadd.f32 %v1061, %v1161
      %1163 = vmatprep.mubr.f32.mxu0 0.0
      %1164 = vmatmul.mubr.f32.gmra.mrb[0].mxu0 %v1082
      %v1165 = vpop.f32.mrb[0].mxu0
      %v1166 = vadd.f32 %v1065, %v1165
      %v1167 = vpop.f32.mrb[0].mxu0
      %v1168 = vadd.f32 %v1067, %v1167
      %1169 = vmatprep.mubr.f32.mxu0 0.0
      %1170 = vmatmul.mubr.f32.gmra.mrb[0].mxu0 %v1085
      %v1171 = vpop.f32.mrb[0].mxu0
      %v1172 = vadd.f32 %v1071, %v1171
      %v1173 = vpop.f32.mrb[0].mxu0
      %v1174 = vadd.f32 %v1073, %v1173
      %1175 = vdwg.mxu0
      %s1176 = scalar_lea.vmem %s327, 64
      %v1177 = vld [vmem:[%s1176] sm:$0xff]
      %v1178 = vld [vmem:[%s1176 + $0x8] sm:$0xff]
      %v1179 = vld [vmem:[%s1176 + $0x10] sm:$0x1]
      %v1180 = vld [vmem:[%s1176 + $0x18] sm:$0x1]
      %v1181 = vlaneseq
      %v1182 = vshrl.u32 %v1181, 7
      %v1183 = vsub.s32 0, %v1182
      %v1184 = vrot.slane %v1177, %v1183
      %v1185 = vlaneseq
      %v1186 = vshrl.u32 %v1185, 7
      %v1187 = vsub.s32 0, %v1186
      %v1188 = vrot.slane %v1178, %v1187
      %v1189 = vmul.f32 %v346, %v1184
      %v1190 = vmul.f32 %v346, %v1188
      %v1191 = vmul.f32 %v351, %v1184
      %v1192 = vmul.f32 %v351, %v1188
      %v1193 = vmul.f32 %v356, %v1184
      %v1194 = vmul.f32 %v356, %v1188
      %v1195 = vmul.f32 %v361, %v1184
      %v1196 = vmul.f32 %v361, %v1188
      %v1197 = vlaneseq
      %v1198 = vshrl.u32 %v1197, 7
      %v1199 = vsub.s32 1, %v1198
      %v1200 = vrot.slane %v1177, %v1199
      %v1201 = vlaneseq
      %v1202 = vshrl.u32 %v1201, 7
      %v1203 = vsub.s32 1, %v1202
      %v1204 = vrot.slane %v1178, %v1203
      %v1205 = vmul.f32 %v381, %v1200
      %v1206 = vmul.f32 %v381, %v1204
      %v1207 = vmul.f32 %v385, %v1200
      %v1208 = vmul.f32 %v385, %v1204
      %v1209 = vmul.f32 %v389, %v1200
      %v1210 = vmul.f32 %v389, %v1204
      %v1211 = vmul.f32 %v393, %v1200
      %v1212 = vmul.f32 %v393, %v1204
      %v1213 = vadd.f32 %v1189, %v1205
      %v1214 = vadd.f32 %v1190, %v1206
      %v1215 = vadd.f32 %v1191, %v1207
      %v1216 = vadd.f32 %v1192, %v1208
      %v1217 = vadd.f32 %v1193, %v1209
      %v1218 = vadd.f32 %v1194, %v1210
      %v1219 = vadd.f32 %v1195, %v1211
      %v1220 = vadd.f32 %v1196, %v1212
      %v1221 = vlaneseq
      %v1222 = vshrl.u32 %v1221, 7
      %v1223 = vsub.s32 2, %v1222
      %v1224 = vrot.slane %v1177, %v1223
      %v1225 = vlaneseq
      %v1226 = vshrl.u32 %v1225, 7
      %v1227 = vsub.s32 2, %v1226
      %v1228 = vrot.slane %v1178, %v1227
      %v1229 = vmul.f32 %v421, %v1224
      %v1230 = vmul.f32 %v421, %v1228
      %v1231 = vmul.f32 %v425, %v1224
      %v1232 = vmul.f32 %v425, %v1228
      %v1233 = vmul.f32 %v429, %v1224
      %v1234 = vmul.f32 %v429, %v1228
      %v1235 = vmul.f32 %v433, %v1224
      %v1236 = vmul.f32 %v433, %v1228
      %v1237 = vadd.f32 %v1213, %v1229
      %v1238 = vadd.f32 %v1214, %v1230
      %v1239 = vadd.f32 %v1215, %v1231
      %v1240 = vadd.f32 %v1216, %v1232
      %v1241 = vadd.f32 %v1217, %v1233
      %v1242 = vadd.f32 %v1218, %v1234
      %v1243 = vadd.f32 %v1219, %v1235
      %v1244 = vadd.f32 %v1220, %v1236
      %v1245 = vlaneseq
      %v1246 = vshrl.u32 %v1245, 7
      %v1247 = vsub.s32 3, %v1246
      %v1248 = vrot.slane %v1177, %v1247
      %v1249 = vlaneseq
      %v1250 = vshrl.u32 %v1249, 7
      %v1251 = vsub.s32 3, %v1250
      %v1252 = vrot.slane %v1178, %v1251
      %v1253 = vmul.f32 %v461, %v1248
      %v1254 = vmul.f32 %v461, %v1252
      %v1255 = vmul.f32 %v465, %v1248
      %v1256 = vmul.f32 %v465, %v1252
      %v1257 = vmul.f32 %v469, %v1248
      %v1258 = vmul.f32 %v469, %v1252
      %v1259 = vmul.f32 %v473, %v1248
      %v1260 = vmul.f32 %v473, %v1252
      %v1261 = vadd.f32 %v1237, %v1253
      %v1262 = vadd.f32 %v1238, %v1254
      %v1263 = vadd.f32 %v1239, %v1255
      %v1264 = vadd.f32 %v1240, %v1256
      %v1265 = vadd.f32 %v1241, %v1257
      %v1266 = vadd.f32 %v1242, %v1258
      %v1267 = vadd.f32 %v1243, %v1259
      %v1268 = vadd.f32 %v1244, %v1260
      %v1269 = vlaneseq
      %v1270 = vshrl.u32 %v1269, 7
      %v1271 = vsub.s32 4, %v1270
      %v1272 = vrot.slane %v1177, %v1271
      %v1273 = vlaneseq
      %v1274 = vshrl.u32 %v1273, 7
      %v1275 = vsub.s32 4, %v1274
      %v1276 = vrot.slane %v1178, %v1275
      %v1277 = vmul.f32 %v501, %v1272
      %v1278 = vmul.f32 %v501, %v1276
      %v1279 = vmul.f32 %v505, %v1272
      %v1280 = vmul.f32 %v505, %v1276
      %v1281 = vmul.f32 %v509, %v1272
      %v1282 = vmul.f32 %v509, %v1276
      %v1283 = vmul.f32 %v513, %v1272
      %v1284 = vmul.f32 %v513, %v1276
      %v1285 = vadd.f32 %v1261, %v1277
      %v1286 = vadd.f32 %v1262, %v1278
      %v1287 = vadd.f32 %v1263, %v1279
      %v1288 = vadd.f32 %v1264, %v1280
      %v1289 = vadd.f32 %v1265, %v1281
      %v1290 = vadd.f32 %v1266, %v1282
      %v1291 = vadd.f32 %v1267, %v1283
      %v1292 = vadd.f32 %v1268, %v1284
      %v1293 = vlaneseq
      %v1294 = vshrl.u32 %v1293, 7
      %v1295 = vsub.s32 5, %v1294
      %v1296 = vrot.slane %v1177, %v1295
      %v1297 = vlaneseq
      %v1298 = vshrl.u32 %v1297, 7
      %v1299 = vsub.s32 5, %v1298
      %v1300 = vrot.slane %v1178, %v1299
      %v1301 = vmul.f32 %v541, %v1296
      %v1302 = vmul.f32 %v541, %v1300
      %v1303 = vmul.f32 %v545, %v1296
      %v1304 = vmul.f32 %v545, %v1300
      %v1305 = vmul.f32 %v549, %v1296
      %v1306 = vmul.f32 %v549, %v1300
      %v1307 = vmul.f32 %v553, %v1296
      %v1308 = vmul.f32 %v553, %v1300
      %v1309 = vadd.f32 %v1285, %v1301
      %v1310 = vadd.f32 %v1286, %v1302
      %v1311 = vadd.f32 %v1287, %v1303
      %v1312 = vadd.f32 %v1288, %v1304
      %v1313 = vadd.f32 %v1289, %v1305
      %v1314 = vadd.f32 %v1290, %v1306
      %v1315 = vadd.f32 %v1291, %v1307
      %v1316 = vadd.f32 %v1292, %v1308
      %v1317 = vlaneseq
      %v1318 = vshrl.u32 %v1317, 7
      %v1319 = vsub.s32 6, %v1318
      %v1320 = vrot.slane %v1177, %v1319
      %v1321 = vlaneseq
      %v1322 = vshrl.u32 %v1321, 7
      %v1323 = vsub.s32 6, %v1322
      %v1324 = vrot.slane %v1178, %v1323
      %v1325 = vmul.f32 %v581, %v1320
      %v1326 = vmul.f32 %v581, %v1324
      %v1327 = vmul.f32 %v585, %v1320
      %v1328 = vmul.f32 %v585, %v1324
      %v1329 = vmul.f32 %v589, %v1320
      %v1330 = vmul.f32 %v589, %v1324
      %v1331 = vmul.f32 %v593, %v1320
      %v1332 = vmul.f32 %v593, %v1324
      %v1333 = vadd.f32 %v1309, %v1325
      %v1334 = vadd.f32 %v1310, %v1326
      %v1335 = vadd.f32 %v1311, %v1327
      %v1336 = vadd.f32 %v1312, %v1328
      %v1337 = vadd.f32 %v1313, %v1329
      %v1338 = vadd.f32 %v1314, %v1330
      %v1339 = vadd.f32 %v1315, %v1331
      %v1340 = vadd.f32 %v1316, %v1332
      %v1341 = vlaneseq
      %v1342 = vshrl.u32 %v1341, 7
      %v1343 = vsub.s32 7, %v1342
      %v1344 = vrot.slane %v1177, %v1343
      %v1345 = vlaneseq
      %v1346 = vshrl.u32 %v1345, 7
      %v1347 = vsub.s32 7, %v1346
      %v1348 = vrot.slane %v1178, %v1347
      %v1349 = vmul.f32 %v621, %v1344
      %v1350 = vmul.f32 %v621, %v1348
      %v1351 = vmul.f32 %v625, %v1344
      %v1352 = vmul.f32 %v625, %v1348
      %v1353 = vmul.f32 %v629, %v1344
      %v1354 = vmul.f32 %v629, %v1348
      %v1355 = vmul.f32 %v633, %v1344
      %v1356 = vmul.f32 %v633, %v1348
      %v1357 = vadd.f32 %v1333, %v1349
      %v1358 = vadd.f32 %v1334, %v1350
      %v1359 = vadd.f32 %v1335, %v1351
      %v1360 = vadd.f32 %v1336, %v1352
      %v1361 = vadd.f32 %v1337, %v1353
      %v1362 = vadd.f32 %v1338, %v1354
      %v1363 = vadd.f32 %v1339, %v1355
      %v1364 = vadd.f32 %v1340, %v1356
      %v1365 = vlaneseq
      %v1366 = vshrl.u32 %v1365, 7
      %v1367 = vsub.s32 0, %v1366
      %v1368 = vrot.slane %v1179, %v1367
      %v1369 = vlaneseq
      %v1370 = vshrl.u32 %v1369, 7
      %v1371 = vsub.s32 0, %v1370
      %v1372 = vrot.slane %v1180, %v1371
      %v1373 = vmul.f32 %v661, %v1368
      %v1374 = vmul.f32 %v661, %v1372
      %v1375 = vmul.f32 %v665, %v1368
      %v1376 = vmul.f32 %v665, %v1372
      %v1377 = vmul.f32 %v669, %v1368
      %v1378 = vmul.f32 %v669, %v1372
      %v1379 = vmul.f32 %v673, %v1368
      %v1380 = vmul.f32 %v673, %v1372
      %v1381 = vadd.f32 %v1357, %v1373
      %v1382 = vadd.f32 %v1358, %v1374
      %v1383 = vadd.f32 %v1359, %v1375
      %v1384 = vadd.f32 %v1360, %v1376
      %v1385 = vadd.f32 %v1361, %v1377
      %v1386 = vadd.f32 %v1362, %v1378
      %v1387 = vadd.f32 %v1363, %v1379
      %v1388 = vadd.f32 %v1364, %v1380
      %v1389 = vadd.f32 %v1381, %v702
      %v1390 = vadd.f32 %v1382, %v702
      %v1391 = vadd.f32 %v1383, %v707
      %v1392 = vadd.f32 %v1384, %v707
      %v1393 = vadd.f32 %v1385, %v712
      %v1394 = vadd.f32 %v1386, %v712
      %v1395 = vadd.f32 %v1387, %v717
      %v1396 = vadd.f32 %v1388, %v717
      %v1397 = vmax.f32 %v1389, 0.0
      %v1398 = vmax.f32 %v1390, 0.0
      %v1399 = vmax.f32 %v1391, 0.0
      %v1400 = vmax.f32 %v1392, 0.0
      %v1401 = vmax.f32 %v1393, 0.0
      %v1402 = vmax.f32 %v1394, 0.0
      %v1403 = vmax.f32 %v1395, 0.0
      %v1404 = vmax.f32 %v1396, 0.0
      %s1405 = scalar_lea.vmem %s3, 64
      %v1406 = vld [vmem:[%s1405] sm:$0xff]
      %v1407 = vld [vmem:[%s1405 + $0x8] sm:$0xff]
      %v1408 = vld [vmem:[%s1405 + $0x10] sm:$0xff]
      %v1409 = vld [vmem:[%s1405 + $0x18] sm:$0xff]
      %v1411 = vsel %vm973, %v1406, 0
      %v1414 = vsel %vm973, %v1407, 0
      %v1417 = vsel %vm973, %v1408, 0
      %v1420 = vsel %vm973, %v1409, 0
      %1422 = vmatprep.subr.mxu0 %v1398
      %1423 = vmatpush1.msra.mxu0 %v1397
      %1424 = vmatprep.subr.mxu0 %v1400
      %1425 = vmatpush1.msra.mxu0 %v1399
      %1426 = vmatprep.subr.mxu0 %v1402
      %1427 = vmatpush1.msra.mxu0 %v1401
      %1428 = vmatprep.subr.mxu0 %v1404
      %1429 = vmatpush1.msra.mxu0 %v1403
      %1430 = vmatprep.subr.mxu0 0.0
      %1431 = vmatpush1.msra.mxu0 0.0
      %1432 = vmatprep.subr.mxu0 0.0
      %1433 = vmatpush1.msra.mxu0 0.0
      %1434 = vmatprep.subr.mxu0 0.0
      %1435 = vmatpush1.msra.mxu0 0.0
      %1436 = vmatprep.subr.mxu0 0.0
      %1437 = vmatpush1.msra.mxu0 0.0
      %1438 = vmatprep.subr.mxu0 0.0
      %1439 = vmatpush1.msra.mxu0 0.0
      %1440 = vmatprep.subr.mxu0 0.0
      %1441 = vmatpush1.msra.mxu0 0.0
      %1442 = vmatprep.subr.mxu0 0.0
      %1443 = vmatpush1.msra.mxu0 0.0
      %1444 = vmatprep.subr.mxu0 0.0
      %1445 = vmatpush1.msra.mxu0 0.0
      %1446 = vmatprep.subr.mxu0 0.0
      %1447 = vmatpush1.msra.mxu0 0.0
      %1448 = vmatprep.subr.mxu0 0.0
      %1449 = vmatpush1.msra.mxu0 0.0
      %1450 = vmatprep.subr.mxu0 0.0
      %1451 = vmatpush1.msra.mxu0 0.0
      %1452 = vmatprep.subr.mxu0 0.0
      %1453 = vmatpush1.msra.mxu0 0.0
      %1454 = vmatprep.subr.mxu0 0.0
      %1455 = vmatpush1.msra.mxu0 0.0
      %1456 = vmatprep.subr.mxu0 0.0
      %1457 = vmatpush1.msra.mxu0 0.0
      %1458 = vmatprep.subr.mxu0 0.0
      %1459 = vmatpush1.msra.mxu0 0.0
      %1460 = vmatprep.subr.mxu0 0.0
      %1461 = vmatpush1.msra.mxu0 0.0
      %1462 = vmatprep.subr.mxu0 0.0
      %1463 = vmatpush1.msra.mxu0 0.0
      %1464 = vmatprep.subr.mxu0 0.0
      %1465 = vmatpush1.msra.mxu0 0.0
      %1466 = vmatprep.subr.mxu0 0.0
      %1467 = vmatpush1.msra.mxu0 0.0
      %1468 = vmatprep.subr.mxu0 0.0
      %1469 = vmatpush1.msra.mxu0 0.0
      %1470 = vmatprep.subr.mxu0 0.0
      %1471 = vmatpush1.msra.mxu0 0.0
      %1472 = vmatprep.subr.mxu0 0.0
      %1473 = vmatpush1.msra.mxu0 0.0
      %1474 = vmatprep.subr.mxu0 0.0
      %1475 = vmatpush1.msra.mxu0 0.0
      %1476 = vmatprep.subr.mxu0 0.0
      %1477 = vmatpush1.msra.mxu0 0.0
      %1478 = vmatprep.subr.mxu0 0.0
      %1479 = vmatpush1.msra.mxu0 0.0
      %1480 = vmatprep.subr.mxu0 0.0
      %1481 = vmatpush1.msra.mxu0 0.0
      %1482 = vmatprep.subr.mxu0 0.0
      %1483 = vmatpush1.msra.mxu0 0.0
      %1484 = vmatprep.subr.mxu0 0.0
      %1485 = vmatpush1.msra.mxu0 0.0
      %1486 = vmatprep.mubr.f32.mxu0 0.0
      %1487 = vmatmul.mubr.f32.gmra.mrb[0].mxu0 %v1411
      %v1488 = vpop.f32.mrb[0].mxu0
      %v1489 = vadd.f32 0.0, %v1488
      %v1490 = vpop.f32.mrb[0].mxu0
      %v1491 = vadd.f32 0.0, %v1490
      %1492 = vmatprep.mubr.f32.mxu0 0.0
      %1493 = vmatmul.mubr.f32.gmra.mrb[0].mxu0 %v1414
      %v1494 = vpop.f32.mrb[0].mxu0
      %v1495 = vadd.f32 0.0, %v1494
      %v1496 = vpop.f32.mrb[0].mxu0
      %v1497 = vadd.f32 0.0, %v1496
      %1498 = vmatprep.mubr.f32.mxu0 0.0
      %1499 = vmatmul.mubr.f32.gmra.mrb[0].mxu0 %v1417
      %v1500 = vpop.f32.mrb[0].mxu0
      %v1501 = vadd.f32 0.0, %v1500
      %v1502 = vpop.f32.mrb[0].mxu0
      %v1503 = vadd.f32 0.0, %v1502
      %1504 = vmatprep.mubr.f32.mxu0 0.0
      %1505 = vmatmul.mubr.f32.gmra.mrb[0].mxu0 %v1420
      %v1506 = vpop.f32.mrb[0].mxu0
      %v1507 = vadd.f32 0.0, %v1506
      %v1508 = vpop.f32.mrb[0].mxu0
      %v1509 = vadd.f32 0.0, %v1508
      %1510 = vdwg.mxu0
      %v1511 = vadd.f32 %v1154, %v1489
      %v1512 = vadd.f32 %v1156, %v1491
      %v1513 = vadd.f32 %v1160, %v1495
      %v1514 = vadd.f32 %v1162, %v1497
      %v1515 = vadd.f32 %v1166, %v1501
      %v1516 = vadd.f32 %v1168, %v1503
      %v1517 = vadd.f32 %v1172, %v1507
      %v1518 = vadd.f32 %v1174, %v1509
      %s1519 = scalar_lea.vmem %s327, 96
      %v1520 = vld [vmem:[%s1519] sm:$0xff]
      %v1521 = vld [vmem:[%s1519 + $0x8] sm:$0xff]
      %v1522 = vld [vmem:[%s1519 + $0x10] sm:$0x1]
      %v1523 = vld [vmem:[%s1519 + $0x18] sm:$0x1]
      %v1524 = vlaneseq
      %v1525 = vshrl.u32 %v1524, 7
      %v1526 = vsub.s32 0, %v1525
      %v1527 = vrot.slane %v1520, %v1526
      %v1528 = vlaneseq
      %v1529 = vshrl.u32 %v1528, 7
      %v1530 = vsub.s32 0, %v1529
      %v1531 = vrot.slane %v1521, %v1530
      %v1532 = vmul.f32 %v346, %v1527
      %v1533 = vmul.f32 %v346, %v1531
      %v1534 = vmul.f32 %v351, %v1527
      %v1535 = vmul.f32 %v351, %v1531
      %v1536 = vmul.f32 %v356, %v1527
      %v1537 = vmul.f32 %v356, %v1531
      %v1538 = vmul.f32 %v361, %v1527
      %v1539 = vmul.f32 %v361, %v1531
      %v1540 = vlaneseq
      %v1541 = vshrl.u32 %v1540, 7
      %v1542 = vsub.s32 1, %v1541
      %v1543 = vrot.slane %v1520, %v1542
      %v1544 = vlaneseq
      %v1545 = vshrl.u32 %v1544, 7
      %v1546 = vsub.s32 1, %v1545
      %v1547 = vrot.slane %v1521, %v1546
      %v1548 = vmul.f32 %v381, %v1543
      %v1549 = vmul.f32 %v381, %v1547
      %v1550 = vmul.f32 %v385, %v1543
      %v1551 = vmul.f32 %v385, %v1547
      %v1552 = vmul.f32 %v389, %v1543
      %v1553 = vmul.f32 %v389, %v1547
      %v1554 = vmul.f32 %v393, %v1543
      %v1555 = vmul.f32 %v393, %v1547
      %v1556 = vadd.f32 %v1532, %v1548
      %v1557 = vadd.f32 %v1533, %v1549
      %v1558 = vadd.f32 %v1534, %v1550
      %v1559 = vadd.f32 %v1535, %v1551
      %v1560 = vadd.f32 %v1536, %v1552
      %v1561 = vadd.f32 %v1537, %v1553
      %v1562 = vadd.f32 %v1538, %v1554
      %v1563 = vadd.f32 %v1539, %v1555
      %v1564 = vlaneseq
      %v1565 = vshrl.u32 %v1564, 7
      %v1566 = vsub.s32 2, %v1565
      %v1567 = vrot.slane %v1520, %v1566
      %v1568 = vlaneseq
      %v1569 = vshrl.u32 %v1568, 7
      %v1570 = vsub.s32 2, %v1569
      %v1571 = vrot.slane %v1521, %v1570
      %v1572 = vmul.f32 %v421, %v1567
      %v1573 = vmul.f32 %v421, %v1571
      %v1574 = vmul.f32 %v425, %v1567
      %v1575 = vmul.f32 %v425, %v1571
      %v1576 = vmul.f32 %v429, %v1567
      %v1577 = vmul.f32 %v429, %v1571
      %v1578 = vmul.f32 %v433, %v1567
      %v1579 = vmul.f32 %v433, %v1571
      %v1580 = vadd.f32 %v1556, %v1572
      %v1581 = vadd.f32 %v1557, %v1573
      %v1582 = vadd.f32 %v1558, %v1574
      %v1583 = vadd.f32 %v1559, %v1575
      %v1584 = vadd.f32 %v1560, %v1576
      %v1585 = vadd.f32 %v1561, %v1577
      %v1586 = vadd.f32 %v1562, %v1578
      %v1587 = vadd.f32 %v1563, %v1579
      %v1588 = vlaneseq
      %v1589 = vshrl.u32 %v1588, 7
      %v1590 = vsub.s32 3, %v1589
      %v1591 = vrot.slane %v1520, %v1590
      %v1592 = vlaneseq
      %v1593 = vshrl.u32 %v1592, 7
      %v1594 = vsub.s32 3, %v1593
      %v1595 = vrot.slane %v1521, %v1594
      %v1596 = vmul.f32 %v461, %v1591
      %v1597 = vmul.f32 %v461, %v1595
      %v1598 = vmul.f32 %v465, %v1591
      %v1599 = vmul.f32 %v465, %v1595
      %v1600 = vmul.f32 %v469, %v1591
      %v1601 = vmul.f32 %v469, %v1595
      %v1602 = vmul.f32 %v473, %v1591
      %v1603 = vmul.f32 %v473, %v1595
      %v1604 = vadd.f32 %v1580, %v1596
      %v1605 = vadd.f32 %v1581, %v1597
      %v1606 = vadd.f32 %v1582, %v1598
      %v1607 = vadd.f32 %v1583, %v1599
      %v1608 = vadd.f32 %v1584, %v1600
      %v1609 = vadd.f32 %v1585, %v1601
      %v1610 = vadd.f32 %v1586, %v1602
      %v1611 = vadd.f32 %v1587, %v1603
      %v1612 = vlaneseq
      %v1613 = vshrl.u32 %v1612, 7
      %v1614 = vsub.s32 4, %v1613
      %v1615 = vrot.slane %v1520, %v1614
      %v1616 = vlaneseq
      %v1617 = vshrl.u32 %v1616, 7
      %v1618 = vsub.s32 4, %v1617
      %v1619 = vrot.slane %v1521, %v1618
      %v1620 = vmul.f32 %v501, %v1615
      %v1621 = vmul.f32 %v501, %v1619
      %v1622 = vmul.f32 %v505, %v1615
      %v1623 = vmul.f32 %v505, %v1619
      %v1624 = vmul.f32 %v509, %v1615
      %v1625 = vmul.f32 %v509, %v1619
      %v1626 = vmul.f32 %v513, %v1615
      %v1627 = vmul.f32 %v513, %v1619
      %v1628 = vadd.f32 %v1604, %v1620
      %v1629 = vadd.f32 %v1605, %v1621
      %v1630 = vadd.f32 %v1606, %v1622
      %v1631 = vadd.f32 %v1607, %v1623
      %v1632 = vadd.f32 %v1608, %v1624
      %v1633 = vadd.f32 %v1609, %v1625
      %v1634 = vadd.f32 %v1610, %v1626
      %v1635 = vadd.f32 %v1611, %v1627
      %v1636 = vlaneseq
      %v1637 = vshrl.u32 %v1636, 7
      %v1638 = vsub.s32 5, %v1637
      %v1639 = vrot.slane %v1520, %v1638
      %v1640 = vlaneseq
      %v1641 = vshrl.u32 %v1640, 7
      %v1642 = vsub.s32 5, %v1641
      %v1643 = vrot.slane %v1521, %v1642
      %v1644 = vmul.f32 %v541, %v1639
      %v1645 = vmul.f32 %v541, %v1643
      %v1646 = vmul.f32 %v545, %v1639
      %v1647 = vmul.f32 %v545, %v1643
      %v1648 = vmul.f32 %v549, %v1639
      %v1649 = vmul.f32 %v549, %v1643
      %v1650 = vmul.f32 %v553, %v1639
      %v1651 = vmul.f32 %v553, %v1643
      %v1652 = vadd.f32 %v1628, %v1644
      %v1653 = vadd.f32 %v1629, %v1645
      %v1654 = vadd.f32 %v1630, %v1646
      %v1655 = vadd.f32 %v1631, %v1647
      %v1656 = vadd.f32 %v1632, %v1648
      %v1657 = vadd.f32 %v1633, %v1649
      %v1658 = vadd.f32 %v1634, %v1650
      %v1659 = vadd.f32 %v1635, %v1651
      %v1660 = vlaneseq
      %v1661 = vshrl.u32 %v1660, 7
      %v1662 = vsub.s32 6, %v1661
      %v1663 = vrot.slane %v1520, %v1662
      %v1664 = vlaneseq
      %v1665 = vshrl.u32 %v1664, 7
      %v1666 = vsub.s32 6, %v1665
      %v1667 = vrot.slane %v1521, %v1666
      %v1668 = vmul.f32 %v581, %v1663
      %v1669 = vmul.f32 %v581, %v1667
      %v1670 = vmul.f32 %v585, %v1663
      %v1671 = vmul.f32 %v585, %v1667
      %v1672 = vmul.f32 %v589, %v1663
      %v1673 = vmul.f32 %v589, %v1667
      %v1674 = vmul.f32 %v593, %v1663
      %v1675 = vmul.f32 %v593, %v1667
      %v1676 = vadd.f32 %v1652, %v1668
      %v1677 = vadd.f32 %v1653, %v1669
      %v1678 = vadd.f32 %v1654, %v1670
      %v1679 = vadd.f32 %v1655, %v1671
      %v1680 = vadd.f32 %v1656, %v1672
      %v1681 = vadd.f32 %v1657, %v1673
      %v1682 = vadd.f32 %v1658, %v1674
      %v1683 = vadd.f32 %v1659, %v1675
      %v1684 = vlaneseq
      %v1685 = vshrl.u32 %v1684, 7
      %v1686 = vsub.s32 7, %v1685
      %v1687 = vrot.slane %v1520, %v1686
      %v1688 = vlaneseq
      %v1689 = vshrl.u32 %v1688, 7
      %v1690 = vsub.s32 7, %v1689
      %v1691 = vrot.slane %v1521, %v1690
      %v1692 = vmul.f32 %v621, %v1687
      %v1693 = vmul.f32 %v621, %v1691
      %v1694 = vmul.f32 %v625, %v1687
      %v1695 = vmul.f32 %v625, %v1691
      %v1696 = vmul.f32 %v629, %v1687
      %v1697 = vmul.f32 %v629, %v1691
      %v1698 = vmul.f32 %v633, %v1687
      %v1699 = vmul.f32 %v633, %v1691
      %v1700 = vadd.f32 %v1676, %v1692
      %v1701 = vadd.f32 %v1677, %v1693
      %v1702 = vadd.f32 %v1678, %v1694
      %v1703 = vadd.f32 %v1679, %v1695
      %v1704 = vadd.f32 %v1680, %v1696
      %v1705 = vadd.f32 %v1681, %v1697
      %v1706 = vadd.f32 %v1682, %v1698
      %v1707 = vadd.f32 %v1683, %v1699
      %v1708 = vlaneseq
      %v1709 = vshrl.u32 %v1708, 7
      %v1710 = vsub.s32 0, %v1709
      %v1711 = vrot.slane %v1522, %v1710
      %v1712 = vlaneseq
      %v1713 = vshrl.u32 %v1712, 7
      %v1714 = vsub.s32 0, %v1713
      %v1715 = vrot.slane %v1523, %v1714
      %v1716 = vmul.f32 %v661, %v1711
      %v1717 = vmul.f32 %v661, %v1715
      %v1718 = vmul.f32 %v665, %v1711
      %v1719 = vmul.f32 %v665, %v1715
      %v1720 = vmul.f32 %v669, %v1711
      %v1721 = vmul.f32 %v669, %v1715
      %v1722 = vmul.f32 %v673, %v1711
      %v1723 = vmul.f32 %v673, %v1715
      %v1724 = vadd.f32 %v1700, %v1716
      %v1725 = vadd.f32 %v1701, %v1717
      %v1726 = vadd.f32 %v1702, %v1718
      %v1727 = vadd.f32 %v1703, %v1719
      %v1728 = vadd.f32 %v1704, %v1720
      %v1729 = vadd.f32 %v1705, %v1721
      %v1730 = vadd.f32 %v1706, %v1722
      %v1731 = vadd.f32 %v1707, %v1723
      %v1732 = vadd.f32 %v1724, %v702
      %v1733 = vadd.f32 %v1725, %v702
      %v1734 = vadd.f32 %v1726, %v707
      %v1735 = vadd.f32 %v1727, %v707
      %v1736 = vadd.f32 %v1728, %v712
      %v1737 = vadd.f32 %v1729, %v712
      %v1738 = vadd.f32 %v1730, %v717
      %v1739 = vadd.f32 %v1731, %v717
      %v1740 = vmax.f32 %v1732, 0.0
      %v1741 = vmax.f32 %v1733, 0.0
      %v1742 = vmax.f32 %v1734, 0.0
      %v1743 = vmax.f32 %v1735, 0.0
      %v1744 = vmax.f32 %v1736, 0.0
      %v1745 = vmax.f32 %v1737, 0.0
      %v1746 = vmax.f32 %v1738, 0.0
      %v1747 = vmax.f32 %v1739, 0.0
      %s1748 = scalar_lea.vmem %s3, 96
      %v1749 = vld [vmem:[%s1748] sm:$0xff]
      %v1750 = vld [vmem:[%s1748 + $0x8] sm:$0xff]
      %v1751 = vld [vmem:[%s1748 + $0x10] sm:$0xff]
      %v1752 = vld [vmem:[%s1748 + $0x18] sm:$0xff]
      %v1754 = vsel %vm973, %v1749, 0
      %v1757 = vsel %vm973, %v1750, 0
      %v1760 = vsel %vm973, %v1751, 0
      %v1763 = vsel %vm973, %v1752, 0
      %1765 = vmatprep.subr.mxu0 %v1741
      %1766 = vmatpush1.msra.mxu0 %v1740
      %1767 = vmatprep.subr.mxu0 %v1743
      %1768 = vmatpush1.msra.mxu0 %v1742
      %1769 = vmatprep.subr.mxu0 %v1745
      %1770 = vmatpush1.msra.mxu0 %v1744
      %1771 = vmatprep.subr.mxu0 %v1747
      %1772 = vmatpush1.msra.mxu0 %v1746
      %1773 = vmatprep.subr.mxu0 0.0
      %1774 = vmatpush1.msra.mxu0 0.0
      %1775 = vmatprep.subr.mxu0 0.0
      %1776 = vmatpush1.msra.mxu0 0.0
      %1777 = vmatprep.subr.mxu0 0.0
      %1778 = vmatpush1.msra.mxu0 0.0
      %1779 = vmatprep.subr.mxu0 0.0
      %1780 = vmatpush1.msra.mxu0 0.0
      %1781 = vmatprep.subr.mxu0 0.0
      %1782 = vmatpush1.msra.mxu0 0.0
      %1783 = vmatprep.subr.mxu0 0.0
      %1784 = vmatpush1.msra.mxu0 0.0
      %1785 = vmatprep.subr.mxu0 0.0
      %1786 = vmatpush1.msra.mxu0 0.0
      %1787 = vmatprep.subr.mxu0 0.0
      %1788 = vmatpush1.msra.mxu0 0.0
      %1789 = vmatprep.subr.mxu0 0.0
      %1790 = vmatpush1.msra.mxu0 0.0
      %1791 = vmatprep.subr.mxu0 0.0
      %1792 = vmatpush1.msra.mxu0 0.0
      %1793 = vmatprep.subr.mxu0 0.0
      %1794 = vmatpush1.msra.mxu0 0.0
      %1795 = vmatprep.subr.mxu0 0.0
      %1796 = vmatpush1.msra.mxu0 0.0
      %1797 = vmatprep.subr.mxu0 0.0
      %1798 = vmatpush1.msra.mxu0 0.0
      %1799 = vmatprep.subr.mxu0 0.0
      %1800 = vmatpush1.msra.mxu0 0.0
      %1801 = vmatprep.subr.mxu0 0.0
      %1802 = vmatpush1.msra.mxu0 0.0
      %1803 = vmatprep.subr.mxu0 0.0
      %1804 = vmatpush1.msra.mxu0 0.0
      %1805 = vmatprep.subr.mxu0 0.0
      %1806 = vmatpush1.msra.mxu0 0.0
      %1807 = vmatprep.subr.mxu0 0.0
      %1808 = vmatpush1.msra.mxu0 0.0
      %1809 = vmatprep.subr.mxu0 0.0
      %1810 = vmatpush1.msra.mxu0 0.0
      %1811 = vmatprep.subr.mxu0 0.0
      %1812 = vmatpush1.msra.mxu0 0.0
      %1813 = vmatprep.subr.mxu0 0.0
      %1814 = vmatpush1.msra.mxu0 0.0
      %1815 = vmatprep.subr.mxu0 0.0
      %1816 = vmatpush1.msra.mxu0 0.0
      %1817 = vmatprep.subr.mxu0 0.0
      %1818 = vmatpush1.msra.mxu0 0.0
      %1819 = vmatprep.subr.mxu0 0.0
      %1820 = vmatpush1.msra.mxu0 0.0
      %1821 = vmatprep.subr.mxu0 0.0
      %1822 = vmatpush1.msra.mxu0 0.0
      %1823 = vmatprep.subr.mxu0 0.0
      %1824 = vmatpush1.msra.mxu0 0.0
      %1825 = vmatprep.subr.mxu0 0.0
      %1826 = vmatpush1.msra.mxu0 0.0
      %1827 = vmatprep.subr.mxu0 0.0
      %1828 = vmatpush1.msra.mxu0 0.0
      %1829 = vmatprep.mubr.f32.mxu0 0.0
      %1830 = vmatmul.mubr.f32.gmra.mrb[0].mxu0 %v1754
      %v1831 = vpop.f32.mrb[0].mxu0
      %v1832 = vadd.f32 0.0, %v1831
      %v1833 = vpop.f32.mrb[0].mxu0
      %v1834 = vadd.f32 0.0, %v1833
      %1835 = vmatprep.mubr.f32.mxu0 0.0
      %1836 = vmatmul.mubr.f32.gmra.mrb[0].mxu0 %v1757
      %v1837 = vpop.f32.mrb[0].mxu0
      %v1838 = vadd.f32 0.0, %v1837
      %v1839 = vpop.f32.mrb[0].mxu0
      %v1840 = vadd.f32 0.0, %v1839
      %1841 = vmatprep.mubr.f32.mxu0 0.0
      %1842 = vmatmul.mubr.f32.gmra.mrb[0].mxu0 %v1760
      %v1843 = vpop.f32.mrb[0].mxu0
      %v1844 = vadd.f32 0.0, %v1843
      %v1845 = vpop.f32.mrb[0].mxu0
      %v1846 = vadd.f32 0.0, %v1845
      %1847 = vmatprep.mubr.f32.mxu0 0.0
      %1848 = vmatmul.mubr.f32.gmra.mrb[0].mxu0 %v1763
      %v1849 = vpop.f32.mrb[0].mxu0
      %v1850 = vadd.f32 0.0, %v1849
      %v1851 = vpop.f32.mrb[0].mxu0
      %v1852 = vadd.f32 0.0, %v1851
      %1853 = vdwg.mxu0
      %v1854 = vadd.f32 %v1511, %v1832
      %v1855 = vadd.f32 %v1512, %v1834
      %v1856 = vadd.f32 %v1513, %v1838
      %v1857 = vadd.f32 %v1514, %v1840
      %v1858 = vadd.f32 %v1515, %v1844
      %v1859 = vadd.f32 %v1516, %v1846
      %v1860 = vadd.f32 %v1517, %v1850
      %v1861 = vadd.f32 %v1518, %v1852
      %s1862 = scalar_lea.vmem %s327, 128
      %v1863 = vld [vmem:[%s1862] sm:$0xff]
      %v1864 = vld [vmem:[%s1862 + $0x8] sm:$0xff]
      %v1865 = vld [vmem:[%s1862 + $0x10] sm:$0x1]
      %v1866 = vld [vmem:[%s1862 + $0x18] sm:$0x1]
      %v1867 = vlaneseq
      %v1868 = vshrl.u32 %v1867, 7
      %v1869 = vsub.s32 0, %v1868
      %v1870 = vrot.slane %v1863, %v1869
      %v1871 = vlaneseq
      %v1872 = vshrl.u32 %v1871, 7
      %v1873 = vsub.s32 0, %v1872
      %v1874 = vrot.slane %v1864, %v1873
      %v1875 = vmul.f32 %v346, %v1870
      %v1876 = vmul.f32 %v346, %v1874
      %v1877 = vmul.f32 %v351, %v1870
      %v1878 = vmul.f32 %v351, %v1874
      %v1879 = vmul.f32 %v356, %v1870
      %v1880 = vmul.f32 %v356, %v1874
      %v1881 = vmul.f32 %v361, %v1870
      %v1882 = vmul.f32 %v361, %v1874
      %v1883 = vlaneseq
      %v1884 = vshrl.u32 %v1883, 7
      %v1885 = vsub.s32 1, %v1884
      %v1886 = vrot.slane %v1863, %v1885
      %v1887 = vlaneseq
      %v1888 = vshrl.u32 %v1887, 7
      %v1889 = vsub.s32 1, %v1888
      %v1890 = vrot.slane %v1864, %v1889
      %v1891 = vmul.f32 %v381, %v1886
      %v1892 = vmul.f32 %v381, %v1890
      %v1893 = vmul.f32 %v385, %v1886
      %v1894 = vmul.f32 %v385, %v1890
      %v1895 = vmul.f32 %v389, %v1886
      %v1896 = vmul.f32 %v389, %v1890
      %v1897 = vmul.f32 %v393, %v1886
      %v1898 = vmul.f32 %v393, %v1890
      %v1899 = vadd.f32 %v1875, %v1891
      %v1900 = vadd.f32 %v1876, %v1892
      %v1901 = vadd.f32 %v1877, %v1893
      %v1902 = vadd.f32 %v1878, %v1894
      %v1903 = vadd.f32 %v1879, %v1895
      %v1904 = vadd.f32 %v1880, %v1896
      %v1905 = vadd.f32 %v1881, %v1897
      %v1906 = vadd.f32 %v1882, %v1898
      %v1907 = vlaneseq
      %v1908 = vshrl.u32 %v1907, 7
      %v1909 = vsub.s32 2, %v1908
      %v1910 = vrot.slane %v1863, %v1909
      %v1911 = vlaneseq
      %v1912 = vshrl.u32 %v1911, 7
      %v1913 = vsub.s32 2, %v1912
      %v1914 = vrot.slane %v1864, %v1913
      %v1915 = vmul.f32 %v421, %v1910
      %v1916 = vmul.f32 %v421, %v1914
      %v1917 = vmul.f32 %v425, %v1910
      %v1918 = vmul.f32 %v425, %v1914
      %v1919 = vmul.f32 %v429, %v1910
      %v1920 = vmul.f32 %v429, %v1914
      %v1921 = vmul.f32 %v433, %v1910
      %v1922 = vmul.f32 %v433, %v1914
      %v1923 = vadd.f32 %v1899, %v1915
      %v1924 = vadd.f32 %v1900, %v1916
      %v1925 = vadd.f32 %v1901, %v1917
      %v1926 = vadd.f32 %v1902, %v1918
      %v1927 = vadd.f32 %v1903, %v1919
      %v1928 = vadd.f32 %v1904, %v1920
      %v1929 = vadd.f32 %v1905, %v1921
      %v1930 = vadd.f32 %v1906, %v1922
      %v1931 = vlaneseq
      %v1932 = vshrl.u32 %v1931, 7
      %v1933 = vsub.s32 3, %v1932
      %v1934 = vrot.slane %v1863, %v1933
      %v1935 = vlaneseq
      %v1936 = vshrl.u32 %v1935, 7
      %v1937 = vsub.s32 3, %v1936
      %v1938 = vrot.slane %v1864, %v1937
      %v1939 = vmul.f32 %v461, %v1934
      %v1940 = vmul.f32 %v461, %v1938
      %v1941 = vmul.f32 %v465, %v1934
      %v1942 = vmul.f32 %v465, %v1938
      %v1943 = vmul.f32 %v469, %v1934
      %v1944 = vmul.f32 %v469, %v1938
      %v1945 = vmul.f32 %v473, %v1934
      %v1946 = vmul.f32 %v473, %v1938
      %v1947 = vadd.f32 %v1923, %v1939
      %v1948 = vadd.f32 %v1924, %v1940
      %v1949 = vadd.f32 %v1925, %v1941
      %v1950 = vadd.f32 %v1926, %v1942
      %v1951 = vadd.f32 %v1927, %v1943
      %v1952 = vadd.f32 %v1928, %v1944
      %v1953 = vadd.f32 %v1929, %v1945
      %v1954 = vadd.f32 %v1930, %v1946
      %v1955 = vlaneseq
      %v1956 = vshrl.u32 %v1955, 7
      %v1957 = vsub.s32 4, %v1956
      %v1958 = vrot.slane %v1863, %v1957
      %v1959 = vlaneseq
      %v1960 = vshrl.u32 %v1959, 7
      %v1961 = vsub.s32 4, %v1960
      %v1962 = vrot.slane %v1864, %v1961
      %v1963 = vmul.f32 %v501, %v1958
      %v1964 = vmul.f32 %v501, %v1962
      %v1965 = vmul.f32 %v505, %v1958
      %v1966 = vmul.f32 %v505, %v1962
      %v1967 = vmul.f32 %v509, %v1958
      %v1968 = vmul.f32 %v509, %v1962
      %v1969 = vmul.f32 %v513, %v1958
      %v1970 = vmul.f32 %v513, %v1962
      %v1971 = vadd.f32 %v1947, %v1963
      %v1972 = vadd.f32 %v1948, %v1964
      %v1973 = vadd.f32 %v1949, %v1965
      %v1974 = vadd.f32 %v1950, %v1966
      %v1975 = vadd.f32 %v1951, %v1967
      %v1976 = vadd.f32 %v1952, %v1968
      %v1977 = vadd.f32 %v1953, %v1969
      %v1978 = vadd.f32 %v1954, %v1970
      %v1979 = vlaneseq
      %v1980 = vshrl.u32 %v1979, 7
      %v1981 = vsub.s32 5, %v1980
      %v1982 = vrot.slane %v1863, %v1981
      %v1983 = vlaneseq
      %v1984 = vshrl.u32 %v1983, 7
      %v1985 = vsub.s32 5, %v1984
      %v1986 = vrot.slane %v1864, %v1985
      %v1987 = vmul.f32 %v541, %v1982
      %v1988 = vmul.f32 %v541, %v1986
      %v1989 = vmul.f32 %v545, %v1982
      %v1990 = vmul.f32 %v545, %v1986
      %v1991 = vmul.f32 %v549, %v1982
      %v1992 = vmul.f32 %v549, %v1986
      %v1993 = vmul.f32 %v553, %v1982
      %v1994 = vmul.f32 %v553, %v1986
      %v1995 = vadd.f32 %v1971, %v1987
      %v1996 = vadd.f32 %v1972, %v1988
      %v1997 = vadd.f32 %v1973, %v1989
      %v1998 = vadd.f32 %v1974, %v1990
      %v1999 = vadd.f32 %v1975, %v1991
      %v2000 = vadd.f32 %v1976, %v1992
      %v2001 = vadd.f32 %v1977, %v1993
      %v2002 = vadd.f32 %v1978, %v1994
      %v2003 = vlaneseq
      %v2004 = vshrl.u32 %v2003, 7
      %v2005 = vsub.s32 6, %v2004
      %v2006 = vrot.slane %v1863, %v2005
      %v2007 = vlaneseq
      %v2008 = vshrl.u32 %v2007, 7
      %v2009 = vsub.s32 6, %v2008
      %v2010 = vrot.slane %v1864, %v2009
      %v2011 = vmul.f32 %v581, %v2006
      %v2012 = vmul.f32 %v581, %v2010
      %v2013 = vmul.f32 %v585, %v2006
      %v2014 = vmul.f32 %v585, %v2010
      %v2015 = vmul.f32 %v589, %v2006
      %v2016 = vmul.f32 %v589, %v2010
      %v2017 = vmul.f32 %v593, %v2006
      %v2018 = vmul.f32 %v593, %v2010
      %v2019 = vadd.f32 %v1995, %v2011
      %v2020 = vadd.f32 %v1996, %v2012
      %v2021 = vadd.f32 %v1997, %v2013
      %v2022 = vadd.f32 %v1998, %v2014
      %v2023 = vadd.f32 %v1999, %v2015
      %v2024 = vadd.f32 %v2000, %v2016
      %v2025 = vadd.f32 %v2001, %v2017
      %v2026 = vadd.f32 %v2002, %v2018
      %v2027 = vlaneseq
      %v2028 = vshrl.u32 %v2027, 7
      %v2029 = vsub.s32 7, %v2028
      %v2030 = vrot.slane %v1863, %v2029
      %v2031 = vlaneseq
      %v2032 = vshrl.u32 %v2031, 7
      %v2033 = vsub.s32 7, %v2032
      %v2034 = vrot.slane %v1864, %v2033
      %v2035 = vmul.f32 %v621, %v2030
      %v2036 = vmul.f32 %v621, %v2034
      %v2037 = vmul.f32 %v625, %v2030
      %v2038 = vmul.f32 %v625, %v2034
      %v2039 = vmul.f32 %v629, %v2030
      %v2040 = vmul.f32 %v629, %v2034
      %v2041 = vmul.f32 %v633, %v2030
      %v2042 = vmul.f32 %v633, %v2034
      %v2043 = vadd.f32 %v2019, %v2035
      %v2044 = vadd.f32 %v2020, %v2036
      %v2045 = vadd.f32 %v2021, %v2037
      %v2046 = vadd.f32 %v2022, %v2038
      %v2047 = vadd.f32 %v2023, %v2039
      %v2048 = vadd.f32 %v2024, %v2040
      %v2049 = vadd.f32 %v2025, %v2041
      %v2050 = vadd.f32 %v2026, %v2042
      %v2051 = vlaneseq
      %v2052 = vshrl.u32 %v2051, 7
      %v2053 = vsub.s32 0, %v2052
      %v2054 = vrot.slane %v1865, %v2053
      %v2055 = vlaneseq
      %v2056 = vshrl.u32 %v2055, 7
      %v2057 = vsub.s32 0, %v2056
      %v2058 = vrot.slane %v1866, %v2057
      %v2059 = vmul.f32 %v661, %v2054
      %v2060 = vmul.f32 %v661, %v2058
      %v2061 = vmul.f32 %v665, %v2054
      %v2062 = vmul.f32 %v665, %v2058
      %v2063 = vmul.f32 %v669, %v2054
      %v2064 = vmul.f32 %v669, %v2058
      %v2065 = vmul.f32 %v673, %v2054
      %v2066 = vmul.f32 %v673, %v2058
      %v2067 = vadd.f32 %v2043, %v2059
      %v2068 = vadd.f32 %v2044, %v2060
      %v2069 = vadd.f32 %v2045, %v2061
      %v2070 = vadd.f32 %v2046, %v2062
      %v2071 = vadd.f32 %v2047, %v2063
      %v2072 = vadd.f32 %v2048, %v2064
      %v2073 = vadd.f32 %v2049, %v2065
      %v2074 = vadd.f32 %v2050, %v2066
      %v2075 = vadd.f32 %v2067, %v702
      %v2076 = vadd.f32 %v2068, %v702
      %v2077 = vadd.f32 %v2069, %v707
      %v2078 = vadd.f32 %v2070, %v707
      %v2079 = vadd.f32 %v2071, %v712
      %v2080 = vadd.f32 %v2072, %v712
      %v2081 = vadd.f32 %v2073, %v717
      %v2082 = vadd.f32 %v2074, %v717
      %v2083 = vmax.f32 %v2075, 0.0
      %v2084 = vmax.f32 %v2076, 0.0
      %v2085 = vmax.f32 %v2077, 0.0
      %v2086 = vmax.f32 %v2078, 0.0
      %v2087 = vmax.f32 %v2079, 0.0
      %v2088 = vmax.f32 %v2080, 0.0
      %v2089 = vmax.f32 %v2081, 0.0
      %v2090 = vmax.f32 %v2082, 0.0
      %s2091 = scalar_lea.vmem %s3, 128
      %v2092 = vld [vmem:[%s2091] sm:$0xff]
      %v2093 = vld [vmem:[%s2091 + $0x8] sm:$0xff]
      %v2094 = vld [vmem:[%s2091 + $0x10] sm:$0xff]
      %v2095 = vld [vmem:[%s2091 + $0x18] sm:$0xff]
      %v2097 = vsel %vm973, %v2092, 0
      %v2100 = vsel %vm973, %v2093, 0
      %v2103 = vsel %vm973, %v2094, 0
      %v2106 = vsel %vm973, %v2095, 0
      %2108 = vmatprep.subr.mxu0 %v2084
      %2109 = vmatpush1.msra.mxu0 %v2083
      %2110 = vmatprep.subr.mxu0 %v2086
      %2111 = vmatpush1.msra.mxu0 %v2085
      %2112 = vmatprep.subr.mxu0 %v2088
      %2113 = vmatpush1.msra.mxu0 %v2087
      %2114 = vmatprep.subr.mxu0 %v2090
      %2115 = vmatpush1.msra.mxu0 %v2089
      %2116 = vmatprep.subr.mxu0 0.0
      %2117 = vmatpush1.msra.mxu0 0.0
      %2118 = vmatprep.subr.mxu0 0.0
      %2119 = vmatpush1.msra.mxu0 0.0
      %2120 = vmatprep.subr.mxu0 0.0
      %2121 = vmatpush1.msra.mxu0 0.0
      %2122 = vmatprep.subr.mxu0 0.0
      %2123 = vmatpush1.msra.mxu0 0.0
      %2124 = vmatprep.subr.mxu0 0.0
      %2125 = vmatpush1.msra.mxu0 0.0
      %2126 = vmatprep.subr.mxu0 0.0
      %2127 = vmatpush1.msra.mxu0 0.0
      %2128 = vmatprep.subr.mxu0 0.0
      %2129 = vmatpush1.msra.mxu0 0.0
      %2130 = vmatprep.subr.mxu0 0.0
      %2131 = vmatpush1.msra.mxu0 0.0
      %2132 = vmatprep.subr.mxu0 0.0
      %2133 = vmatpush1.msra.mxu0 0.0
      %2134 = vmatprep.subr.mxu0 0.0
      %2135 = vmatpush1.msra.mxu0 0.0
      %2136 = vmatprep.subr.mxu0 0.0
      %2137 = vmatpush1.msra.mxu0 0.0
      %2138 = vmatprep.subr.mxu0 0.0
      %2139 = vmatpush1.msra.mxu0 0.0
      %2140 = vmatprep.subr.mxu0 0.0
      %2141 = vmatpush1.msra.mxu0 0.0
      %2142 = vmatprep.subr.mxu0 0.0
      %2143 = vmatpush1.msra.mxu0 0.0
      %2144 = vmatprep.subr.mxu0 0.0
      %2145 = vmatpush1.msra.mxu0 0.0
      %2146 = vmatprep.subr.mxu0 0.0
      %2147 = vmatpush1.msra.mxu0 0.0
      %2148 = vmatprep.subr.mxu0 0.0
      %2149 = vmatpush1.msra.mxu0 0.0
      %2150 = vmatprep.subr.mxu0 0.0
      %2151 = vmatpush1.msra.mxu0 0.0
      %2152 = vmatprep.subr.mxu0 0.0
      %2153 = vmatpush1.msra.mxu0 0.0
      %2154 = vmatprep.subr.mxu0 0.0
      %2155 = vmatpush1.msra.mxu0 0.0
      %2156 = vmatprep.subr.mxu0 0.0
      %2157 = vmatpush1.msra.mxu0 0.0
      %2158 = vmatprep.subr.mxu0 0.0
      %2159 = vmatpush1.msra.mxu0 0.0
      %2160 = vmatprep.subr.mxu0 0.0
      %2161 = vmatpush1.msra.mxu0 0.0
      %2162 = vmatprep.subr.mxu0 0.0
      %2163 = vmatpush1.msra.mxu0 0.0
      %2164 = vmatprep.subr.mxu0 0.0
      %2165 = vmatpush1.msra.mxu0 0.0
      %2166 = vmatprep.subr.mxu0 0.0
      %2167 = vmatpush1.msra.mxu0 0.0
      %2168 = vmatprep.subr.mxu0 0.0
      %2169 = vmatpush1.msra.mxu0 0.0
      %2170 = vmatprep.subr.mxu0 0.0
      %2171 = vmatpush1.msra.mxu0 0.0
      %2172 = vmatprep.mubr.f32.mxu0 0.0
      %2173 = vmatmul.mubr.f32.gmra.mrb[0].mxu0 %v2097
      %v2174 = vpop.f32.mrb[0].mxu0
      %v2175 = vadd.f32 0.0, %v2174
      %v2176 = vpop.f32.mrb[0].mxu0
      %v2177 = vadd.f32 0.0, %v2176
      %2178 = vmatprep.mubr.f32.mxu0 0.0
      %2179 = vmatmul.mubr.f32.gmra.mrb[0].mxu0 %v2100
      %v2180 = vpop.f32.mrb[0].mxu0
      %v2181 = vadd.f32 0.0, %v2180
      %v2182 = vpop.f32.mrb[0].mxu0
      %v2183 = vadd.f32 0.0, %v2182
      %2184 = vmatprep.mubr.f32.mxu0 0.0
      %2185 = vmatmul.mubr.f32.gmra.mrb[0].mxu0 %v2103
      %v2186 = vpop.f32.mrb[0].mxu0
      %v2187 = vadd.f32 0.0, %v2186
      %v2188 = vpop.f32.mrb[0].mxu0
      %v2189 = vadd.f32 0.0, %v2188
      %2190 = vmatprep.mubr.f32.mxu0 0.0
      %2191 = vmatmul.mubr.f32.gmra.mrb[0].mxu0 %v2106
      %v2192 = vpop.f32.mrb[0].mxu0
      %v2193 = vadd.f32 0.0, %v2192
      %v2194 = vpop.f32.mrb[0].mxu0
      %v2195 = vadd.f32 0.0, %v2194
      %2196 = vdwg.mxu0
      %v2197 = vadd.f32 %v1854, %v2175
      %v2198 = vadd.f32 %v1855, %v2177
      %v2199 = vadd.f32 %v1856, %v2181
      %v2200 = vadd.f32 %v1857, %v2183
      %v2201 = vadd.f32 %v1858, %v2187
      %v2202 = vadd.f32 %v1859, %v2189
      %v2203 = vadd.f32 %v1860, %v2193
      %v2204 = vadd.f32 %v1861, %v2195
      %s2205 = scalar_lea.vmem %s327, 160
      %v2206 = vld [vmem:[%s2205] sm:$0xff]
      %v2207 = vld [vmem:[%s2205 + $0x8] sm:$0xff]
      %v2208 = vld [vmem:[%s2205 + $0x10] sm:$0x1]
      %v2209 = vld [vmem:[%s2205 + $0x18] sm:$0x1]
      %v2210 = vlaneseq
      %v2211 = vshrl.u32 %v2210, 7
      %v2212 = vsub.s32 0, %v2211
      %v2213 = vrot.slane %v2206, %v2212
      %v2214 = vlaneseq
      %v2215 = vshrl.u32 %v2214, 7
      %v2216 = vsub.s32 0, %v2215
      %v2217 = vrot.slane %v2207, %v2216
      %v2218 = vmul.f32 %v346, %v2213
      %v2219 = vmul.f32 %v346, %v2217
      %v2220 = vmul.f32 %v351, %v2213
      %v2221 = vmul.f32 %v351, %v2217
      %v2222 = vmul.f32 %v356, %v2213
      %v2223 = vmul.f32 %v356, %v2217
      %v2224 = vmul.f32 %v361, %v2213
      %v2225 = vmul.f32 %v361, %v2217
      %v2226 = vlaneseq
      %v2227 = vshrl.u32 %v2226, 7
      %v2228 = vsub.s32 1, %v2227
      %v2229 = vrot.slane %v2206, %v2228
      %v2230 = vlaneseq
      %v2231 = vshrl.u32 %v2230, 7
      %v2232 = vsub.s32 1, %v2231
      %v2233 = vrot.slane %v2207, %v2232
      %v2234 = vmul.f32 %v381, %v2229
      %v2235 = vmul.f32 %v381, %v2233
      %v2236 = vmul.f32 %v385, %v2229
      %v2237 = vmul.f32 %v385, %v2233
      %v2238 = vmul.f32 %v389, %v2229
      %v2239 = vmul.f32 %v389, %v2233
      %v2240 = vmul.f32 %v393, %v2229
      %v2241 = vmul.f32 %v393, %v2233
      %v2242 = vadd.f32 %v2218, %v2234
      %v2243 = vadd.f32 %v2219, %v2235
      %v2244 = vadd.f32 %v2220, %v2236
      %v2245 = vadd.f32 %v2221, %v2237
      %v2246 = vadd.f32 %v2222, %v2238
      %v2247 = vadd.f32 %v2223, %v2239
      %v2248 = vadd.f32 %v2224, %v2240
      %v2249 = vadd.f32 %v2225, %v2241
      %v2250 = vlaneseq
      %v2251 = vshrl.u32 %v2250, 7
      %v2252 = vsub.s32 2, %v2251
      %v2253 = vrot.slane %v2206, %v2252
      %v2254 = vlaneseq
      %v2255 = vshrl.u32 %v2254, 7
      %v2256 = vsub.s32 2, %v2255
      %v2257 = vrot.slane %v2207, %v2256
      %v2258 = vmul.f32 %v421, %v2253
      %v2259 = vmul.f32 %v421, %v2257
      %v2260 = vmul.f32 %v425, %v2253
      %v2261 = vmul.f32 %v425, %v2257
      %v2262 = vmul.f32 %v429, %v2253
      %v2263 = vmul.f32 %v429, %v2257
      %v2264 = vmul.f32 %v433, %v2253
      %v2265 = vmul.f32 %v433, %v2257
      %v2266 = vadd.f32 %v2242, %v2258
      %v2267 = vadd.f32 %v2243, %v2259
      %v2268 = vadd.f32 %v2244, %v2260
      %v2269 = vadd.f32 %v2245, %v2261
      %v2270 = vadd.f32 %v2246, %v2262
      %v2271 = vadd.f32 %v2247, %v2263
      %v2272 = vadd.f32 %v2248, %v2264
      %v2273 = vadd.f32 %v2249, %v2265
      %v2274 = vlaneseq
      %v2275 = vshrl.u32 %v2274, 7
      %v2276 = vsub.s32 3, %v2275
      %v2277 = vrot.slane %v2206, %v2276
      %v2278 = vlaneseq
      %v2279 = vshrl.u32 %v2278, 7
      %v2280 = vsub.s32 3, %v2279
      %v2281 = vrot.slane %v2207, %v2280
      %v2282 = vmul.f32 %v461, %v2277
      %v2283 = vmul.f32 %v461, %v2281
      %v2284 = vmul.f32 %v465, %v2277
      %v2285 = vmul.f32 %v465, %v2281
      %v2286 = vmul.f32 %v469, %v2277
      %v2287 = vmul.f32 %v469, %v2281
      %v2288 = vmul.f32 %v473, %v2277
      %v2289 = vmul.f32 %v473, %v2281
      %v2290 = vadd.f32 %v2266, %v2282
      %v2291 = vadd.f32 %v2267, %v2283
      %v2292 = vadd.f32 %v2268, %v2284
      %v2293 = vadd.f32 %v2269, %v2285
      %v2294 = vadd.f32 %v2270, %v2286
      %v2295 = vadd.f32 %v2271, %v2287
      %v2296 = vadd.f32 %v2272, %v2288
      %v2297 = vadd.f32 %v2273, %v2289
      %v2298 = vlaneseq
      %v2299 = vshrl.u32 %v2298, 7
      %v2300 = vsub.s32 4, %v2299
      %v2301 = vrot.slane %v2206, %v2300
      %v2302 = vlaneseq
      %v2303 = vshrl.u32 %v2302, 7
      %v2304 = vsub.s32 4, %v2303
      %v2305 = vrot.slane %v2207, %v2304
      %v2306 = vmul.f32 %v501, %v2301
      %v2307 = vmul.f32 %v501, %v2305
      %v2308 = vmul.f32 %v505, %v2301
      %v2309 = vmul.f32 %v505, %v2305
      %v2310 = vmul.f32 %v509, %v2301
      %v2311 = vmul.f32 %v509, %v2305
      %v2312 = vmul.f32 %v513, %v2301
      %v2313 = vmul.f32 %v513, %v2305
      %v2314 = vadd.f32 %v2290, %v2306
      %v2315 = vadd.f32 %v2291, %v2307
      %v2316 = vadd.f32 %v2292, %v2308
      %v2317 = vadd.f32 %v2293, %v2309
      %v2318 = vadd.f32 %v2294, %v2310
      %v2319 = vadd.f32 %v2295, %v2311
      %v2320 = vadd.f32 %v2296, %v2312
      %v2321 = vadd.f32 %v2297, %v2313
      %v2322 = vlaneseq
      %v2323 = vshrl.u32 %v2322, 7
      %v2324 = vsub.s32 5, %v2323
      %v2325 = vrot.slane %v2206, %v2324
      %v2326 = vlaneseq
      %v2327 = vshrl.u32 %v2326, 7
      %v2328 = vsub.s32 5, %v2327
      %v2329 = vrot.slane %v2207, %v2328
      %v2330 = vmul.f32 %v541, %v2325
      %v2331 = vmul.f32 %v541, %v2329
      %v2332 = vmul.f32 %v545, %v2325
      %v2333 = vmul.f32 %v545, %v2329
      %v2334 = vmul.f32 %v549, %v2325
      %v2335 = vmul.f32 %v549, %v2329
      %v2336 = vmul.f32 %v553, %v2325
      %v2337 = vmul.f32 %v553, %v2329
      %v2338 = vadd.f32 %v2314, %v2330
      %v2339 = vadd.f32 %v2315, %v2331
      %v2340 = vadd.f32 %v2316, %v2332
      %v2341 = vadd.f32 %v2317, %v2333
      %v2342 = vadd.f32 %v2318, %v2334
      %v2343 = vadd.f32 %v2319, %v2335
      %v2344 = vadd.f32 %v2320, %v2336
      %v2345 = vadd.f32 %v2321, %v2337
      %v2346 = vlaneseq
      %v2347 = vshrl.u32 %v2346, 7
      %v2348 = vsub.s32 6, %v2347
      %v2349 = vrot.slane %v2206, %v2348
      %v2350 = vlaneseq
      %v2351 = vshrl.u32 %v2350, 7
      %v2352 = vsub.s32 6, %v2351
      %v2353 = vrot.slane %v2207, %v2352
      %v2354 = vmul.f32 %v581, %v2349
      %v2355 = vmul.f32 %v581, %v2353
      %v2356 = vmul.f32 %v585, %v2349
      %v2357 = vmul.f32 %v585, %v2353
      %v2358 = vmul.f32 %v589, %v2349
      %v2359 = vmul.f32 %v589, %v2353
      %v2360 = vmul.f32 %v593, %v2349
      %v2361 = vmul.f32 %v593, %v2353
      %v2362 = vadd.f32 %v2338, %v2354
      %v2363 = vadd.f32 %v2339, %v2355
      %v2364 = vadd.f32 %v2340, %v2356
      %v2365 = vadd.f32 %v2341, %v2357
      %v2366 = vadd.f32 %v2342, %v2358
      %v2367 = vadd.f32 %v2343, %v2359
      %v2368 = vadd.f32 %v2344, %v2360
      %v2369 = vadd.f32 %v2345, %v2361
      %v2370 = vlaneseq
      %v2371 = vshrl.u32 %v2370, 7
      %v2372 = vsub.s32 7, %v2371
      %v2373 = vrot.slane %v2206, %v2372
      %v2374 = vlaneseq
      %v2375 = vshrl.u32 %v2374, 7
      %v2376 = vsub.s32 7, %v2375
      %v2377 = vrot.slane %v2207, %v2376
      %v2378 = vmul.f32 %v621, %v2373
      %v2379 = vmul.f32 %v621, %v2377
      %v2380 = vmul.f32 %v625, %v2373
      %v2381 = vmul.f32 %v625, %v2377
      %v2382 = vmul.f32 %v629, %v2373
      %v2383 = vmul.f32 %v629, %v2377
      %v2384 = vmul.f32 %v633, %v2373
      %v2385 = vmul.f32 %v633, %v2377
      %v2386 = vadd.f32 %v2362, %v2378
      %v2387 = vadd.f32 %v2363, %v2379
      %v2388 = vadd.f32 %v2364, %v2380
      %v2389 = vadd.f32 %v2365, %v2381
      %v2390 = vadd.f32 %v2366, %v2382
      %v2391 = vadd.f32 %v2367, %v2383
      %v2392 = vadd.f32 %v2368, %v2384
      %v2393 = vadd.f32 %v2369, %v2385
      %v2394 = vlaneseq
      %v2395 = vshrl.u32 %v2394, 7
      %v2396 = vsub.s32 0, %v2395
      %v2397 = vrot.slane %v2208, %v2396
      %v2398 = vlaneseq
      %v2399 = vshrl.u32 %v2398, 7
      %v2400 = vsub.s32 0, %v2399
      %v2401 = vrot.slane %v2209, %v2400
      %v2402 = vmul.f32 %v661, %v2397
      %v2403 = vmul.f32 %v661, %v2401
      %v2404 = vmul.f32 %v665, %v2397
      %v2405 = vmul.f32 %v665, %v2401
      %v2406 = vmul.f32 %v669, %v2397
      %v2407 = vmul.f32 %v669, %v2401
      %v2408 = vmul.f32 %v673, %v2397
      %v2409 = vmul.f32 %v673, %v2401
      %v2410 = vadd.f32 %v2386, %v2402
      %v2411 = vadd.f32 %v2387, %v2403
      %v2412 = vadd.f32 %v2388, %v2404
      %v2413 = vadd.f32 %v2389, %v2405
      %v2414 = vadd.f32 %v2390, %v2406
      %v2415 = vadd.f32 %v2391, %v2407
      %v2416 = vadd.f32 %v2392, %v2408
      %v2417 = vadd.f32 %v2393, %v2409
      %v2418 = vadd.f32 %v2410, %v702
      %v2419 = vadd.f32 %v2411, %v702
      %v2420 = vadd.f32 %v2412, %v707
      %v2421 = vadd.f32 %v2413, %v707
      %v2422 = vadd.f32 %v2414, %v712
      %v2423 = vadd.f32 %v2415, %v712
      %v2424 = vadd.f32 %v2416, %v717
      %v2425 = vadd.f32 %v2417, %v717
      %v2426 = vmax.f32 %v2418, 0.0
      %v2427 = vmax.f32 %v2419, 0.0
      %v2428 = vmax.f32 %v2420, 0.0
      %v2429 = vmax.f32 %v2421, 0.0
      %v2430 = vmax.f32 %v2422, 0.0
      %v2431 = vmax.f32 %v2423, 0.0
      %v2432 = vmax.f32 %v2424, 0.0
      %v2433 = vmax.f32 %v2425, 0.0
      %s2434 = scalar_lea.vmem %s3, 160
      %v2435 = vld [vmem:[%s2434] sm:$0xff]
      %v2436 = vld [vmem:[%s2434 + $0x8] sm:$0xff]
      %v2437 = vld [vmem:[%s2434 + $0x10] sm:$0xff]
      %v2438 = vld [vmem:[%s2434 + $0x18] sm:$0xff]
      %v2440 = vsel %vm973, %v2435, 0
      %v2443 = vsel %vm973, %v2436, 0
      %v2446 = vsel %vm973, %v2437, 0
      %v2449 = vsel %vm973, %v2438, 0
      %2451 = vmatprep.subr.mxu0 %v2427
      %2452 = vmatpush1.msra.mxu0 %v2426
      %2453 = vmatprep.subr.mxu0 %v2429
      %2454 = vmatpush1.msra.mxu0 %v2428
      %2455 = vmatprep.subr.mxu0 %v2431
      %2456 = vmatpush1.msra.mxu0 %v2430
      %2457 = vmatprep.subr.mxu0 %v2433
      %2458 = vmatpush1.msra.mxu0 %v2432
      %2459 = vmatprep.subr.mxu0 0.0
      %2460 = vmatpush1.msra.mxu0 0.0
      %2461 = vmatprep.subr.mxu0 0.0
      %2462 = vmatpush1.msra.mxu0 0.0
      %2463 = vmatprep.subr.mxu0 0.0
      %2464 = vmatpush1.msra.mxu0 0.0
      %2465 = vmatprep.subr.mxu0 0.0
      %2466 = vmatpush1.msra.mxu0 0.0
      %2467 = vmatprep.subr.mxu0 0.0
      %2468 = vmatpush1.msra.mxu0 0.0
      %2469 = vmatprep.subr.mxu0 0.0
      %2470 = vmatpush1.msra.mxu0 0.0
      %2471 = vmatprep.subr.mxu0 0.0
      %2472 = vmatpush1.msra.mxu0 0.0
      %2473 = vmatprep.subr.mxu0 0.0
      %2474 = vmatpush1.msra.mxu0 0.0
      %2475 = vmatprep.subr.mxu0 0.0
      %2476 = vmatpush1.msra.mxu0 0.0
      %2477 = vmatprep.subr.mxu0 0.0
      %2478 = vmatpush1.msra.mxu0 0.0
      %2479 = vmatprep.subr.mxu0 0.0
      %2480 = vmatpush1.msra.mxu0 0.0
      %2481 = vmatprep.subr.mxu0 0.0
      %2482 = vmatpush1.msra.mxu0 0.0
      %2483 = vmatprep.subr.mxu0 0.0
      %2484 = vmatpush1.msra.mxu0 0.0
      %2485 = vmatprep.subr.mxu0 0.0
      %2486 = vmatpush1.msra.mxu0 0.0
      %2487 = vmatprep.subr.mxu0 0.0
      %2488 = vmatpush1.msra.mxu0 0.0
      %2489 = vmatprep.subr.mxu0 0.0
      %2490 = vmatpush1.msra.mxu0 0.0
      %2491 = vmatprep.subr.mxu0 0.0
      %2492 = vmatpush1.msra.mxu0 0.0
      %2493 = vmatprep.subr.mxu0 0.0
      %2494 = vmatpush1.msra.mxu0 0.0
      %2495 = vmatprep.subr.mxu0 0.0
      %2496 = vmatpush1.msra.mxu0 0.0
      %2497 = vmatprep.subr.mxu0 0.0
      %2498 = vmatpush1.msra.mxu0 0.0
      %2499 = vmatprep.subr.mxu0 0.0
      %2500 = vmatpush1.msra.mxu0 0.0
      %2501 = vmatprep.subr.mxu0 0.0
      %2502 = vmatpush1.msra.mxu0 0.0
      %2503 = vmatprep.subr.mxu0 0.0
      %2504 = vmatpush1.msra.mxu0 0.0
      %2505 = vmatprep.subr.mxu0 0.0
      %2506 = vmatpush1.msra.mxu0 0.0
      %2507 = vmatprep.subr.mxu0 0.0
      %2508 = vmatpush1.msra.mxu0 0.0
      %2509 = vmatprep.subr.mxu0 0.0
      %2510 = vmatpush1.msra.mxu0 0.0
      %2511 = vmatprep.subr.mxu0 0.0
      %2512 = vmatpush1.msra.mxu0 0.0
      %2513 = vmatprep.subr.mxu0 0.0
      %2514 = vmatpush1.msra.mxu0 0.0
      %2515 = vmatprep.mubr.f32.mxu0 0.0
      %2516 = vmatmul.mubr.f32.gmra.mrb[0].mxu0 %v2440
      %v2517 = vpop.f32.mrb[0].mxu0
      %v2518 = vadd.f32 0.0, %v2517
      %v2519 = vpop.f32.mrb[0].mxu0
      %v2520 = vadd.f32 0.0, %v2519
      %2521 = vmatprep.mubr.f32.mxu0 0.0
      %2522 = vmatmul.mubr.f32.gmra.mrb[0].mxu0 %v2443
      %v2523 = vpop.f32.mrb[0].mxu0
      %v2524 = vadd.f32 0.0, %v2523
      %v2525 = vpop.f32.mrb[0].mxu0
      %v2526 = vadd.f32 0.0, %v2525
      %2527 = vmatprep.mubr.f32.mxu0 0.0
      %2528 = vmatmul.mubr.f32.gmra.mrb[0].mxu0 %v2446
      %v2529 = vpop.f32.mrb[0].mxu0
      %v2530 = vadd.f32 0.0, %v2529
      %v2531 = vpop.f32.mrb[0].mxu0
      %v2532 = vadd.f32 0.0, %v2531
      %2533 = vmatprep.mubr.f32.mxu0 0.0
      %2534 = vmatmul.mubr.f32.gmra.mrb[0].mxu0 %v2449
      %v2535 = vpop.f32.mrb[0].mxu0
      %v2536 = vadd.f32 0.0, %v2535
      %v2537 = vpop.f32.mrb[0].mxu0
      %v2538 = vadd.f32 0.0, %v2537
      %2539 = vdwg.mxu0
      %v2540 = vadd.f32 %v2197, %v2518
      %v2541 = vadd.f32 %v2198, %v2520
      %v2542 = vadd.f32 %v2199, %v2524
      %v2543 = vadd.f32 %v2200, %v2526
      %v2544 = vadd.f32 %v2201, %v2530
      %v2545 = vadd.f32 %v2202, %v2532
      %v2546 = vadd.f32 %v2203, %v2536
      %v2547 = vadd.f32 %v2204, %v2538
      %s2548 = scalar_lea.vmem %s327, 192
      %v2549 = vld [vmem:[%s2548] sm:$0xff]
      %v2550 = vld [vmem:[%s2548 + $0x8] sm:$0xff]
      %v2551 = vld [vmem:[%s2548 + $0x10] sm:$0x1]
      %v2552 = vld [vmem:[%s2548 + $0x18] sm:$0x1]
      %v2553 = vlaneseq
      %v2554 = vshrl.u32 %v2553, 7
      %v2555 = vsub.s32 0, %v2554
      %v2556 = vrot.slane %v2549, %v2555
      %v2557 = vlaneseq
      %v2558 = vshrl.u32 %v2557, 7
      %v2559 = vsub.s32 0, %v2558
      %v2560 = vrot.slane %v2550, %v2559
      %v2561 = vmul.f32 %v346, %v2556
      %v2562 = vmul.f32 %v346, %v2560
      %v2563 = vmul.f32 %v351, %v2556
      %v2564 = vmul.f32 %v351, %v2560
      %v2565 = vmul.f32 %v356, %v2556
      %v2566 = vmul.f32 %v356, %v2560
      %v2567 = vmul.f32 %v361, %v2556
      %v2568 = vmul.f32 %v361, %v2560
      %v2569 = vlaneseq
      %v2570 = vshrl.u32 %v2569, 7
      %v2571 = vsub.s32 1, %v2570
      %v2572 = vrot.slane %v2549, %v2571
      %v2573 = vlaneseq
      %v2574 = vshrl.u32 %v2573, 7
      %v2575 = vsub.s32 1, %v2574
      %v2576 = vrot.slane %v2550, %v2575
      %v2577 = vmul.f32 %v381, %v2572
      %v2578 = vmul.f32 %v381, %v2576
      %v2579 = vmul.f32 %v385, %v2572
      %v2580 = vmul.f32 %v385, %v2576
      %v2581 = vmul.f32 %v389, %v2572
      %v2582 = vmul.f32 %v389, %v2576
      %v2583 = vmul.f32 %v393, %v2572
      %v2584 = vmul.f32 %v393, %v2576
      %v2585 = vadd.f32 %v2561, %v2577
      %v2586 = vadd.f32 %v2562, %v2578
      %v2587 = vadd.f32 %v2563, %v2579
      %v2588 = vadd.f32 %v2564, %v2580
      %v2589 = vadd.f32 %v2565, %v2581
      %v2590 = vadd.f32 %v2566, %v2582
      %v2591 = vadd.f32 %v2567, %v2583
      %v2592 = vadd.f32 %v2568, %v2584
      %v2593 = vlaneseq
      %v2594 = vshrl.u32 %v2593, 7
      %v2595 = vsub.s32 2, %v2594
      %v2596 = vrot.slane %v2549, %v2595
      %v2597 = vlaneseq
      %v2598 = vshrl.u32 %v2597, 7
      %v2599 = vsub.s32 2, %v2598
      %v2600 = vrot.slane %v2550, %v2599
      %v2601 = vmul.f32 %v421, %v2596
      %v2602 = vmul.f32 %v421, %v2600
      %v2603 = vmul.f32 %v425, %v2596
      %v2604 = vmul.f32 %v425, %v2600
      %v2605 = vmul.f32 %v429, %v2596
      %v2606 = vmul.f32 %v429, %v2600
      %v2607 = vmul.f32 %v433, %v2596
      %v2608 = vmul.f32 %v433, %v2600
      %v2609 = vadd.f32 %v2585, %v2601
      %v2610 = vadd.f32 %v2586, %v2602
      %v2611 = vadd.f32 %v2587, %v2603
      %v2612 = vadd.f32 %v2588, %v2604
      %v2613 = vadd.f32 %v2589, %v2605
      %v2614 = vadd.f32 %v2590, %v2606
      %v2615 = vadd.f32 %v2591, %v2607
      %v2616 = vadd.f32 %v2592, %v2608
      %v2617 = vlaneseq
      %v2618 = vshrl.u32 %v2617, 7
      %v2619 = vsub.s32 3, %v2618
      %v2620 = vrot.slane %v2549, %v2619
      %v2621 = vlaneseq
      %v2622 = vshrl.u32 %v2621, 7
      %v2623 = vsub.s32 3, %v2622
      %v2624 = vrot.slane %v2550, %v2623
      %v2625 = vmul.f32 %v461, %v2620
      %v2626 = vmul.f32 %v461, %v2624
      %v2627 = vmul.f32 %v465, %v2620
      %v2628 = vmul.f32 %v465, %v2624
      %v2629 = vmul.f32 %v469, %v2620
      %v2630 = vmul.f32 %v469, %v2624
      %v2631 = vmul.f32 %v473, %v2620
      %v2632 = vmul.f32 %v473, %v2624
      %v2633 = vadd.f32 %v2609, %v2625
      %v2634 = vadd.f32 %v2610, %v2626
      %v2635 = vadd.f32 %v2611, %v2627
      %v2636 = vadd.f32 %v2612, %v2628
      %v2637 = vadd.f32 %v2613, %v2629
      %v2638 = vadd.f32 %v2614, %v2630
      %v2639 = vadd.f32 %v2615, %v2631
      %v2640 = vadd.f32 %v2616, %v2632
      %v2641 = vlaneseq
      %v2642 = vshrl.u32 %v2641, 7
      %v2643 = vsub.s32 4, %v2642
      %v2644 = vrot.slane %v2549, %v2643
      %v2645 = vlaneseq
      %v2646 = vshrl.u32 %v2645, 7
      %v2647 = vsub.s32 4, %v2646
      %v2648 = vrot.slane %v2550, %v2647
      %v2649 = vmul.f32 %v501, %v2644
      %v2650 = vmul.f32 %v501, %v2648
      %v2651 = vmul.f32 %v505, %v2644
      %v2652 = vmul.f32 %v505, %v2648
      %v2653 = vmul.f32 %v509, %v2644
      %v2654 = vmul.f32 %v509, %v2648
      %v2655 = vmul.f32 %v513, %v2644
      %v2656 = vmul.f32 %v513, %v2648
      %v2657 = vadd.f32 %v2633, %v2649
      %v2658 = vadd.f32 %v2634, %v2650
      %v2659 = vadd.f32 %v2635, %v2651
      %v2660 = vadd.f32 %v2636, %v2652
      %v2661 = vadd.f32 %v2637, %v2653
      %v2662 = vadd.f32 %v2638, %v2654
      %v2663 = vadd.f32 %v2639, %v2655
      %v2664 = vadd.f32 %v2640, %v2656
      %v2665 = vlaneseq
      %v2666 = vshrl.u32 %v2665, 7
      %v2667 = vsub.s32 5, %v2666
      %v2668 = vrot.slane %v2549, %v2667
      %v2669 = vlaneseq
      %v2670 = vshrl.u32 %v2669, 7
      %v2671 = vsub.s32 5, %v2670
      %v2672 = vrot.slane %v2550, %v2671
      %v2673 = vmul.f32 %v541, %v2668
      %v2674 = vmul.f32 %v541, %v2672
      %v2675 = vmul.f32 %v545, %v2668
      %v2676 = vmul.f32 %v545, %v2672
      %v2677 = vmul.f32 %v549, %v2668
      %v2678 = vmul.f32 %v549, %v2672
      %v2679 = vmul.f32 %v553, %v2668
      %v2680 = vmul.f32 %v553, %v2672
      %v2681 = vadd.f32 %v2657, %v2673
      %v2682 = vadd.f32 %v2658, %v2674
      %v2683 = vadd.f32 %v2659, %v2675
      %v2684 = vadd.f32 %v2660, %v2676
      %v2685 = vadd.f32 %v2661, %v2677
      %v2686 = vadd.f32 %v2662, %v2678
      %v2687 = vadd.f32 %v2663, %v2679
      %v2688 = vadd.f32 %v2664, %v2680
      %v2689 = vlaneseq
      %v2690 = vshrl.u32 %v2689, 7
      %v2691 = vsub.s32 6, %v2690
      %v2692 = vrot.slane %v2549, %v2691
      %v2693 = vlaneseq
      %v2694 = vshrl.u32 %v2693, 7
      %v2695 = vsub.s32 6, %v2694
      %v2696 = vrot.slane %v2550, %v2695
      %v2697 = vmul.f32 %v581, %v2692
      %v2698 = vmul.f32 %v581, %v2696
      %v2699 = vmul.f32 %v585, %v2692
      %v2700 = vmul.f32 %v585, %v2696
      %v2701 = vmul.f32 %v589, %v2692
      %v2702 = vmul.f32 %v589, %v2696
      %v2703 = vmul.f32 %v593, %v2692
      %v2704 = vmul.f32 %v593, %v2696
      %v2705 = vadd.f32 %v2681, %v2697
      %v2706 = vadd.f32 %v2682, %v2698
      %v2707 = vadd.f32 %v2683, %v2699
      %v2708 = vadd.f32 %v2684, %v2700
      %v2709 = vadd.f32 %v2685, %v2701
      %v2710 = vadd.f32 %v2686, %v2702
      %v2711 = vadd.f32 %v2687, %v2703
      %v2712 = vadd.f32 %v2688, %v2704
      %v2713 = vlaneseq
      %v2714 = vshrl.u32 %v2713, 7
      %v2715 = vsub.s32 7, %v2714
      %v2716 = vrot.slane %v2549, %v2715
      %v2717 = vlaneseq
      %v2718 = vshrl.u32 %v2717, 7
      %v2719 = vsub.s32 7, %v2718
      %v2720 = vrot.slane %v2550, %v2719
      %v2721 = vmul.f32 %v621, %v2716
      %v2722 = vmul.f32 %v621, %v2720
      %v2723 = vmul.f32 %v625, %v2716
      %v2724 = vmul.f32 %v625, %v2720
      %v2725 = vmul.f32 %v629, %v2716
      %v2726 = vmul.f32 %v629, %v2720
      %v2727 = vmul.f32 %v633, %v2716
      %v2728 = vmul.f32 %v633, %v2720
      %v2729 = vadd.f32 %v2705, %v2721
      %v2730 = vadd.f32 %v2706, %v2722
      %v2731 = vadd.f32 %v2707, %v2723
      %v2732 = vadd.f32 %v2708, %v2724
      %v2733 = vadd.f32 %v2709, %v2725
      %v2734 = vadd.f32 %v2710, %v2726
      %v2735 = vadd.f32 %v2711, %v2727
      %v2736 = vadd.f32 %v2712, %v2728
      %v2737 = vlaneseq
      %v2738 = vshrl.u32 %v2737, 7
      %v2739 = vsub.s32 0, %v2738
      %v2740 = vrot.slane %v2551, %v2739
      %v2741 = vlaneseq
      %v2742 = vshrl.u32 %v2741, 7
      %v2743 = vsub.s32 0, %v2742
      %v2744 = vrot.slane %v2552, %v2743
      %v2745 = vmul.f32 %v661, %v2740
      %v2746 = vmul.f32 %v661, %v2744
      %v2747 = vmul.f32 %v665, %v2740
      %v2748 = vmul.f32 %v665, %v2744
      %v2749 = vmul.f32 %v669, %v2740
      %v2750 = vmul.f32 %v669, %v2744
      %v2751 = vmul.f32 %v673, %v2740
      %v2752 = vmul.f32 %v673, %v2744
      %v2753 = vadd.f32 %v2729, %v2745
      %v2754 = vadd.f32 %v2730, %v2746
      %v2755 = vadd.f32 %v2731, %v2747
      %v2756 = vadd.f32 %v2732, %v2748
      %v2757 = vadd.f32 %v2733, %v2749
      %v2758 = vadd.f32 %v2734, %v2750
      %v2759 = vadd.f32 %v2735, %v2751
      %v2760 = vadd.f32 %v2736, %v2752
      %v2761 = vadd.f32 %v2753, %v702
      %v2762 = vadd.f32 %v2754, %v702
      %v2763 = vadd.f32 %v2755, %v707
      %v2764 = vadd.f32 %v2756, %v707
      %v2765 = vadd.f32 %v2757, %v712
      %v2766 = vadd.f32 %v2758, %v712
      %v2767 = vadd.f32 %v2759, %v717
      %v2768 = vadd.f32 %v2760, %v717
      %v2769 = vmax.f32 %v2761, 0.0
      %v2770 = vmax.f32 %v2762, 0.0
      %v2771 = vmax.f32 %v2763, 0.0
      %v2772 = vmax.f32 %v2764, 0.0
      %v2773 = vmax.f32 %v2765, 0.0
      %v2774 = vmax.f32 %v2766, 0.0
      %v2775 = vmax.f32 %v2767, 0.0
      %v2776 = vmax.f32 %v2768, 0.0
      %s2777 = scalar_lea.vmem %s3, 192
      %v2778 = vld [vmem:[%s2777] sm:$0xff]
      %v2779 = vld [vmem:[%s2777 + $0x8] sm:$0xff]
      %v2780 = vld [vmem:[%s2777 + $0x10] sm:$0xff]
      %v2781 = vld [vmem:[%s2777 + $0x18] sm:$0xff]
      %v2783 = vsel %vm973, %v2778, 0
      %v2786 = vsel %vm973, %v2779, 0
      %v2789 = vsel %vm973, %v2780, 0
      %v2792 = vsel %vm973, %v2781, 0
      %2794 = vmatprep.subr.mxu0 %v2770
      %2795 = vmatpush1.msra.mxu0 %v2769
      %2796 = vmatprep.subr.mxu0 %v2772
      %2797 = vmatpush1.msra.mxu0 %v2771
      %2798 = vmatprep.subr.mxu0 %v2774
      %2799 = vmatpush1.msra.mxu0 %v2773
      %2800 = vmatprep.subr.mxu0 %v2776
      %2801 = vmatpush1.msra.mxu0 %v2775
      %2802 = vmatprep.subr.mxu0 0.0
      %2803 = vmatpush1.msra.mxu0 0.0
      %2804 = vmatprep.subr.mxu0 0.0
      %2805 = vmatpush1.msra.mxu0 0.0
      %2806 = vmatprep.subr.mxu0 0.0
      %2807 = vmatpush1.msra.mxu0 0.0
      %2808 = vmatprep.subr.mxu0 0.0
      %2809 = vmatpush1.msra.mxu0 0.0
      %2810 = vmatprep.subr.mxu0 0.0
      %2811 = vmatpush1.msra.mxu0 0.0
      %2812 = vmatprep.subr.mxu0 0.0
      %2813 = vmatpush1.msra.mxu0 0.0
      %2814 = vmatprep.subr.mxu0 0.0
      %2815 = vmatpush1.msra.mxu0 0.0
      %2816 = vmatprep.subr.mxu0 0.0
      %2817 = vmatpush1.msra.mxu0 0.0
      %2818 = vmatprep.subr.mxu0 0.0
      %2819 = vmatpush1.msra.mxu0 0.0
      %2820 = vmatprep.subr.mxu0 0.0
      %2821 = vmatpush1.msra.mxu0 0.0
      %2822 = vmatprep.subr.mxu0 0.0
      %2823 = vmatpush1.msra.mxu0 0.0
      %2824 = vmatprep.subr.mxu0 0.0
      %2825 = vmatpush1.msra.mxu0 0.0
      %2826 = vmatprep.subr.mxu0 0.0
      %2827 = vmatpush1.msra.mxu0 0.0
      %2828 = vmatprep.subr.mxu0 0.0
      %2829 = vmatpush1.msra.mxu0 0.0
      %2830 = vmatprep.subr.mxu0 0.0
      %2831 = vmatpush1.msra.mxu0 0.0
      %2832 = vmatprep.subr.mxu0 0.0
      %2833 = vmatpush1.msra.mxu0 0.0
      %2834 = vmatprep.subr.mxu0 0.0
      %2835 = vmatpush1.msra.mxu0 0.0
      %2836 = vmatprep.subr.mxu0 0.0
      %2837 = vmatpush1.msra.mxu0 0.0
      %2838 = vmatprep.subr.mxu0 0.0
      %2839 = vmatpush1.msra.mxu0 0.0
      %2840 = vmatprep.subr.mxu0 0.0
      %2841 = vmatpush1.msra.mxu0 0.0
      %2842 = vmatprep.subr.mxu0 0.0
      %2843 = vmatpush1.msra.mxu0 0.0
      %2844 = vmatprep.subr.mxu0 0.0
      %2845 = vmatpush1.msra.mxu0 0.0
      %2846 = vmatprep.subr.mxu0 0.0
      %2847 = vmatpush1.msra.mxu0 0.0
      %2848 = vmatprep.subr.mxu0 0.0
      %2849 = vmatpush1.msra.mxu0 0.0
      %2850 = vmatprep.subr.mxu0 0.0
      %2851 = vmatpush1.msra.mxu0 0.0
      %2852 = vmatprep.subr.mxu0 0.0
      %2853 = vmatpush1.msra.mxu0 0.0
      %2854 = vmatprep.subr.mxu0 0.0
      %2855 = vmatpush1.msra.mxu0 0.0
      %2856 = vmatprep.subr.mxu0 0.0
      %2857 = vmatpush1.msra.mxu0 0.0
      %2858 = vmatprep.mubr.f32.mxu0 0.0
      %2859 = vmatmul.mubr.f32.gmra.mrb[0].mxu0 %v2783
      %v2860 = vpop.f32.mrb[0].mxu0
      %v2861 = vadd.f32 0.0, %v2860
      %v2862 = vpop.f32.mrb[0].mxu0
      %v2863 = vadd.f32 0.0, %v2862
      %2864 = vmatprep.mubr.f32.mxu0 0.0
      %2865 = vmatmul.mubr.f32.gmra.mrb[0].mxu0 %v2786
      %v2866 = vpop.f32.mrb[0].mxu0
      %v2867 = vadd.f32 0.0, %v2866
      %v2868 = vpop.f32.mrb[0].mxu0
      %v2869 = vadd.f32 0.0, %v2868
      %2870 = vmatprep.mubr.f32.mxu0 0.0
      %2871 = vmatmul.mubr.f32.gmra.mrb[0].mxu0 %v2789
      %v2872 = vpop.f32.mrb[0].mxu0
      %v2873 = vadd.f32 0.0, %v2872
      %v2874 = vpop.f32.mrb[0].mxu0
      %v2875 = vadd.f32 0.0, %v2874
      %2876 = vmatprep.mubr.f32.mxu0 0.0
      %2877 = vmatmul.mubr.f32.gmra.mrb[0].mxu0 %v2792
      %v2878 = vpop.f32.mrb[0].mxu0
      %v2879 = vadd.f32 0.0, %v2878
      %v2880 = vpop.f32.mrb[0].mxu0
      %v2881 = vadd.f32 0.0, %v2880
      %2882 = vdwg.mxu0
      %v2883 = vadd.f32 %v2540, %v2861
      %v2884 = vadd.f32 %v2541, %v2863
      %v2885 = vadd.f32 %v2542, %v2867
      %v2886 = vadd.f32 %v2543, %v2869
      %v2887 = vadd.f32 %v2544, %v2873
      %v2888 = vadd.f32 %v2545, %v2875
      %v2889 = vadd.f32 %v2546, %v2879
      %v2890 = vadd.f32 %v2547, %v2881
      %s2891 = scalar_lea.vmem %s327, 224
      %v2892 = vld [vmem:[%s2891] sm:$0xff]
      %v2893 = vld [vmem:[%s2891 + $0x8] sm:$0xff]
      %v2894 = vld [vmem:[%s2891 + $0x10] sm:$0x1]
      %v2895 = vld [vmem:[%s2891 + $0x18] sm:$0x1]
      %v2896 = vlaneseq
      %v2897 = vshrl.u32 %v2896, 7
      %v2898 = vsub.s32 0, %v2897
      %v2899 = vrot.slane %v2892, %v2898
      %v2900 = vlaneseq
      %v2901 = vshrl.u32 %v2900, 7
      %v2902 = vsub.s32 0, %v2901
      %v2903 = vrot.slane %v2893, %v2902
      %v2904 = vmul.f32 %v346, %v2899
      %v2905 = vmul.f32 %v346, %v2903
      %v2906 = vmul.f32 %v351, %v2899
      %v2907 = vmul.f32 %v351, %v2903
      %v2908 = vmul.f32 %v356, %v2899
      %v2909 = vmul.f32 %v356, %v2903
      %v2910 = vmul.f32 %v361, %v2899
      %v2911 = vmul.f32 %v361, %v2903
      %v2912 = vlaneseq
      %v2913 = vshrl.u32 %v2912, 7
      %v2914 = vsub.s32 1, %v2913
      %v2915 = vrot.slane %v2892, %v2914
      %v2916 = vlaneseq
      %v2917 = vshrl.u32 %v2916, 7
      %v2918 = vsub.s32 1, %v2917
      %v2919 = vrot.slane %v2893, %v2918
      %v2920 = vmul.f32 %v381, %v2915
      %v2921 = vmul.f32 %v381, %v2919
      %v2922 = vmul.f32 %v385, %v2915
      %v2923 = vmul.f32 %v385, %v2919
      %v2924 = vmul.f32 %v389, %v2915
      %v2925 = vmul.f32 %v389, %v2919
      %v2926 = vmul.f32 %v393, %v2915
      %v2927 = vmul.f32 %v393, %v2919
      %v2928 = vadd.f32 %v2904, %v2920
      %v2929 = vadd.f32 %v2905, %v2921
      %v2930 = vadd.f32 %v2906, %v2922
      %v2931 = vadd.f32 %v2907, %v2923
      %v2932 = vadd.f32 %v2908, %v2924
      %v2933 = vadd.f32 %v2909, %v2925
      %v2934 = vadd.f32 %v2910, %v2926
      %v2935 = vadd.f32 %v2911, %v2927
      %v2936 = vlaneseq
      %v2937 = vshrl.u32 %v2936, 7
      %v2938 = vsub.s32 2, %v2937
      %v2939 = vrot.slane %v2892, %v2938
      %v2940 = vlaneseq
      %v2941 = vshrl.u32 %v2940, 7
      %v2942 = vsub.s32 2, %v2941
      %v2943 = vrot.slane %v2893, %v2942
      %v2944 = vmul.f32 %v421, %v2939
      %v2945 = vmul.f32 %v421, %v2943
      %v2946 = vmul.f32 %v425, %v2939
      %v2947 = vmul.f32 %v425, %v2943
      %v2948 = vmul.f32 %v429, %v2939
      %v2949 = vmul.f32 %v429, %v2943
      %v2950 = vmul.f32 %v433, %v2939
      %v2951 = vmul.f32 %v433, %v2943
      %v2952 = vadd.f32 %v2928, %v2944
      %v2953 = vadd.f32 %v2929, %v2945
      %v2954 = vadd.f32 %v2930, %v2946
      %v2955 = vadd.f32 %v2931, %v2947
      %v2956 = vadd.f32 %v2932, %v2948
      %v2957 = vadd.f32 %v2933, %v2949
      %v2958 = vadd.f32 %v2934, %v2950
      %v2959 = vadd.f32 %v2935, %v2951
      %v2960 = vlaneseq
      %v2961 = vshrl.u32 %v2960, 7
      %v2962 = vsub.s32 3, %v2961
      %v2963 = vrot.slane %v2892, %v2962
      %v2964 = vlaneseq
      %v2965 = vshrl.u32 %v2964, 7
      %v2966 = vsub.s32 3, %v2965
      %v2967 = vrot.slane %v2893, %v2966
      %v2968 = vmul.f32 %v461, %v2963
      %v2969 = vmul.f32 %v461, %v2967
      %v2970 = vmul.f32 %v465, %v2963
      %v2971 = vmul.f32 %v465, %v2967
      %v2972 = vmul.f32 %v469, %v2963
      %v2973 = vmul.f32 %v469, %v2967
      %v2974 = vmul.f32 %v473, %v2963
      %v2975 = vmul.f32 %v473, %v2967
      %v2976 = vadd.f32 %v2952, %v2968
      %v2977 = vadd.f32 %v2953, %v2969
      %v2978 = vadd.f32 %v2954, %v2970
      %v2979 = vadd.f32 %v2955, %v2971
      %v2980 = vadd.f32 %v2956, %v2972
      %v2981 = vadd.f32 %v2957, %v2973
      %v2982 = vadd.f32 %v2958, %v2974
      %v2983 = vadd.f32 %v2959, %v2975
      %v2984 = vlaneseq
      %v2985 = vshrl.u32 %v2984, 7
      %v2986 = vsub.s32 4, %v2985
      %v2987 = vrot.slane %v2892, %v2986
      %v2988 = vlaneseq
      %v2989 = vshrl.u32 %v2988, 7
      %v2990 = vsub.s32 4, %v2989
      %v2991 = vrot.slane %v2893, %v2990
      %v2992 = vmul.f32 %v501, %v2987
      %v2993 = vmul.f32 %v501, %v2991
      %v2994 = vmul.f32 %v505, %v2987
      %v2995 = vmul.f32 %v505, %v2991
      %v2996 = vmul.f32 %v509, %v2987
      %v2997 = vmul.f32 %v509, %v2991
      %v2998 = vmul.f32 %v513, %v2987
      %v2999 = vmul.f32 %v513, %v2991
      %v3000 = vadd.f32 %v2976, %v2992
      %v3001 = vadd.f32 %v2977, %v2993
      %v3002 = vadd.f32 %v2978, %v2994
      %v3003 = vadd.f32 %v2979, %v2995
      %v3004 = vadd.f32 %v2980, %v2996
      %v3005 = vadd.f32 %v2981, %v2997
      %v3006 = vadd.f32 %v2982, %v2998
      %v3007 = vadd.f32 %v2983, %v2999
      %v3008 = vlaneseq
      %v3009 = vshrl.u32 %v3008, 7
      %v3010 = vsub.s32 5, %v3009
      %v3011 = vrot.slane %v2892, %v3010
      %v3012 = vlaneseq
      %v3013 = vshrl.u32 %v3012, 7
      %v3014 = vsub.s32 5, %v3013
      %v3015 = vrot.slane %v2893, %v3014
      %v3016 = vmul.f32 %v541, %v3011
      %v3017 = vmul.f32 %v541, %v3015
      %v3018 = vmul.f32 %v545, %v3011
      %v3019 = vmul.f32 %v545, %v3015
      %v3020 = vmul.f32 %v549, %v3011
      %v3021 = vmul.f32 %v549, %v3015
      %v3022 = vmul.f32 %v553, %v3011
      %v3023 = vmul.f32 %v553, %v3015
      %v3024 = vadd.f32 %v3000, %v3016
      %v3025 = vadd.f32 %v3001, %v3017
      %v3026 = vadd.f32 %v3002, %v3018
      %v3027 = vadd.f32 %v3003, %v3019
      %v3028 = vadd.f32 %v3004, %v3020
      %v3029 = vadd.f32 %v3005, %v3021
      %v3030 = vadd.f32 %v3006, %v3022
      %v3031 = vadd.f32 %v3007, %v3023
      %v3032 = vlaneseq
      %v3033 = vshrl.u32 %v3032, 7
      %v3034 = vsub.s32 6, %v3033
      %v3035 = vrot.slane %v2892, %v3034
      %v3036 = vlaneseq
      %v3037 = vshrl.u32 %v3036, 7
      %v3038 = vsub.s32 6, %v3037
      %v3039 = vrot.slane %v2893, %v3038
      %v3040 = vmul.f32 %v581, %v3035
      %v3041 = vmul.f32 %v581, %v3039
      %v3042 = vmul.f32 %v585, %v3035
      %v3043 = vmul.f32 %v585, %v3039
      %v3044 = vmul.f32 %v589, %v3035
      %v3045 = vmul.f32 %v589, %v3039
      %v3046 = vmul.f32 %v593, %v3035
      %v3047 = vmul.f32 %v593, %v3039
      %v3048 = vadd.f32 %v3024, %v3040
      %v3049 = vadd.f32 %v3025, %v3041
      %v3050 = vadd.f32 %v3026, %v3042
      %v3051 = vadd.f32 %v3027, %v3043
      %v3052 = vadd.f32 %v3028, %v3044
      %v3053 = vadd.f32 %v3029, %v3045
      %v3054 = vadd.f32 %v3030, %v3046
      %v3055 = vadd.f32 %v3031, %v3047
      %v3056 = vlaneseq
      %v3057 = vshrl.u32 %v3056, 7
      %v3058 = vsub.s32 7, %v3057
      %v3059 = vrot.slane %v2892, %v3058
      %v3060 = vlaneseq
      %v3061 = vshrl.u32 %v3060, 7
      %v3062 = vsub.s32 7, %v3061
      %v3063 = vrot.slane %v2893, %v3062
      %v3064 = vmul.f32 %v621, %v3059
      %v3065 = vmul.f32 %v621, %v3063
      %v3066 = vmul.f32 %v625, %v3059
      %v3067 = vmul.f32 %v625, %v3063
      %v3068 = vmul.f32 %v629, %v3059
      %v3069 = vmul.f32 %v629, %v3063
      %v3070 = vmul.f32 %v633, %v3059
      %v3071 = vmul.f32 %v633, %v3063
      %v3072 = vadd.f32 %v3048, %v3064
      %v3073 = vadd.f32 %v3049, %v3065
      %v3074 = vadd.f32 %v3050, %v3066
      %v3075 = vadd.f32 %v3051, %v3067
      %v3076 = vadd.f32 %v3052, %v3068
      %v3077 = vadd.f32 %v3053, %v3069
      %v3078 = vadd.f32 %v3054, %v3070
      %v3079 = vadd.f32 %v3055, %v3071
      %v3080 = vlaneseq
      %v3081 = vshrl.u32 %v3080, 7
      %v3082 = vsub.s32 0, %v3081
      %v3083 = vrot.slane %v2894, %v3082
      %v3084 = vlaneseq
      %v3085 = vshrl.u32 %v3084, 7
      %v3086 = vsub.s32 0, %v3085
      %v3087 = vrot.slane %v2895, %v3086
      %v3088 = vmul.f32 %v661, %v3083
      %v3089 = vmul.f32 %v661, %v3087
      %v3090 = vmul.f32 %v665, %v3083
      %v3091 = vmul.f32 %v665, %v3087
      %v3092 = vmul.f32 %v669, %v3083
      %v3093 = vmul.f32 %v669, %v3087
      %v3094 = vmul.f32 %v673, %v3083
      %v3095 = vmul.f32 %v673, %v3087
      %v3096 = vadd.f32 %v3072, %v3088
      %v3097 = vadd.f32 %v3073, %v3089
      %v3098 = vadd.f32 %v3074, %v3090
      %v3099 = vadd.f32 %v3075, %v3091
      %v3100 = vadd.f32 %v3076, %v3092
      %v3101 = vadd.f32 %v3077, %v3093
      %v3102 = vadd.f32 %v3078, %v3094
      %v3103 = vadd.f32 %v3079, %v3095
      %v3104 = vadd.f32 %v3096, %v702
      %v3105 = vadd.f32 %v3097, %v702
      %v3106 = vadd.f32 %v3098, %v707
      %v3107 = vadd.f32 %v3099, %v707
      %v3108 = vadd.f32 %v3100, %v712
      %v3109 = vadd.f32 %v3101, %v712
      %v3110 = vadd.f32 %v3102, %v717
      %v3111 = vadd.f32 %v3103, %v717
      %v3112 = vmax.f32 %v3104, 0.0
      %v3113 = vmax.f32 %v3105, 0.0
      %v3114 = vmax.f32 %v3106, 0.0
      %v3115 = vmax.f32 %v3107, 0.0
      %v3116 = vmax.f32 %v3108, 0.0
      %v3117 = vmax.f32 %v3109, 0.0
      %v3118 = vmax.f32 %v3110, 0.0
      %v3119 = vmax.f32 %v3111, 0.0
      %s3120 = scalar_lea.vmem %s3, 224
      %v3121 = vld [vmem:[%s3120] sm:$0xff]
      %v3122 = vld [vmem:[%s3120 + $0x8] sm:$0xff]
      %v3123 = vld [vmem:[%s3120 + $0x10] sm:$0xff]
      %v3124 = vld [vmem:[%s3120 + $0x18] sm:$0xff]
      %v3126 = vsel %vm973, %v3121, 0
      %v3129 = vsel %vm973, %v3122, 0
      %v3132 = vsel %vm973, %v3123, 0
      %v3135 = vsel %vm973, %v3124, 0
      %3137 = vmatprep.subr.mxu0 %v3113
      %3138 = vmatpush1.msra.mxu0 %v3112
      %3139 = vmatprep.subr.mxu0 %v3115
      %3140 = vmatpush1.msra.mxu0 %v3114
      %3141 = vmatprep.subr.mxu0 %v3117
      %3142 = vmatpush1.msra.mxu0 %v3116
      %3143 = vmatprep.subr.mxu0 %v3119
      %3144 = vmatpush1.msra.mxu0 %v3118
      %3145 = vmatprep.subr.mxu0 0.0
      %3146 = vmatpush1.msra.mxu0 0.0
      %3147 = vmatprep.subr.mxu0 0.0
      %3148 = vmatpush1.msra.mxu0 0.0
      %3149 = vmatprep.subr.mxu0 0.0
      %3150 = vmatpush1.msra.mxu0 0.0
      %3151 = vmatprep.subr.mxu0 0.0
      %3152 = vmatpush1.msra.mxu0 0.0
      %3153 = vmatprep.subr.mxu0 0.0
      %3154 = vmatpush1.msra.mxu0 0.0
      %3155 = vmatprep.subr.mxu0 0.0
      %3156 = vmatpush1.msra.mxu0 0.0
      %3157 = vmatprep.subr.mxu0 0.0
      %3158 = vmatpush1.msra.mxu0 0.0
      %3159 = vmatprep.subr.mxu0 0.0
      %3160 = vmatpush1.msra.mxu0 0.0
      %3161 = vmatprep.subr.mxu0 0.0
      %3162 = vmatpush1.msra.mxu0 0.0
      %3163 = vmatprep.subr.mxu0 0.0
      %3164 = vmatpush1.msra.mxu0 0.0
      %3165 = vmatprep.subr.mxu0 0.0
      %3166 = vmatpush1.msra.mxu0 0.0
      %3167 = vmatprep.subr.mxu0 0.0
      %3168 = vmatpush1.msra.mxu0 0.0
      %3169 = vmatprep.subr.mxu0 0.0
      %3170 = vmatpush1.msra.mxu0 0.0
      %3171 = vmatprep.subr.mxu0 0.0
      %3172 = vmatpush1.msra.mxu0 0.0
      %3173 = vmatprep.subr.mxu0 0.0
      %3174 = vmatpush1.msra.mxu0 0.0
      %3175 = vmatprep.subr.mxu0 0.0
      %3176 = vmatpush1.msra.mxu0 0.0
      %3177 = vmatprep.subr.mxu0 0.0
      %3178 = vmatpush1.msra.mxu0 0.0
      %3179 = vmatprep.subr.mxu0 0.0
      %3180 = vmatpush1.msra.mxu0 0.0
      %3181 = vmatprep.subr.mxu0 0.0
      %3182 = vmatpush1.msra.mxu0 0.0
      %3183 = vmatprep.subr.mxu0 0.0
      %3184 = vmatpush1.msra.mxu0 0.0
      %3185 = vmatprep.subr.mxu0 0.0
      %3186 = vmatpush1.msra.mxu0 0.0
      %3187 = vmatprep.subr.mxu0 0.0
      %3188 = vmatpush1.msra.mxu0 0.0
      %3189 = vmatprep.subr.mxu0 0.0
      %3190 = vmatpush1.msra.mxu0 0.0
      %3191 = vmatprep.subr.mxu0 0.0
      %3192 = vmatpush1.msra.mxu0 0.0
      %3193 = vmatprep.subr.mxu0 0.0
      %3194 = vmatpush1.msra.mxu0 0.0
      %3195 = vmatprep.subr.mxu0 0.0
      %3196 = vmatpush1.msra.mxu0 0.0
      %3197 = vmatprep.subr.mxu0 0.0
      %3198 = vmatpush1.msra.mxu0 0.0
      %3199 = vmatprep.subr.mxu0 0.0
      %3200 = vmatpush1.msra.mxu0 0.0
      %3201 = vmatprep.mubr.f32.mxu0 0.0
      %3202 = vmatmul.mubr.f32.gmra.mrb[0].mxu0 %v3126
      %v3203 = vpop.f32.mrb[0].mxu0
      %v3204 = vadd.f32 0.0, %v3203
      %v3205 = vpop.f32.mrb[0].mxu0
      %v3206 = vadd.f32 0.0, %v3205
      %3207 = vmatprep.mubr.f32.mxu0 0.0
      %3208 = vmatmul.mubr.f32.gmra.mrb[0].mxu0 %v3129
      %v3209 = vpop.f32.mrb[0].mxu0
      %v3210 = vadd.f32 0.0, %v3209
      %v3211 = vpop.f32.mrb[0].mxu0
      %v3212 = vadd.f32 0.0, %v3211
      %3213 = vmatprep.mubr.f32.mxu0 0.0
      %3214 = vmatmul.mubr.f32.gmra.mrb[0].mxu0 %v3132
      %v3215 = vpop.f32.mrb[0].mxu0
      %v3216 = vadd.f32 0.0, %v3215
      %v3217 = vpop.f32.mrb[0].mxu0
      %v3218 = vadd.f32 0.0, %v3217
      %3219 = vmatprep.mubr.f32.mxu0 0.0
      %3220 = vmatmul.mubr.f32.gmra.mrb[0].mxu0 %v3135
      %v3221 = vpop.f32.mrb[0].mxu0
      %v3222 = vadd.f32 0.0, %v3221
      %v3223 = vpop.f32.mrb[0].mxu0
      %v3224 = vadd.f32 0.0, %v3223
      %3225 = vdwg.mxu0
      %v3226 = vadd.f32 %v2883, %v3204
      %v3227 = vadd.f32 %v2884, %v3206
      %v3228 = vadd.f32 %v2885, %v3210
      %v3229 = vadd.f32 %v2886, %v3212
      %v3230 = vadd.f32 %v2887, %v3216
      %v3231 = vadd.f32 %v2888, %v3218
      %v3232 = vadd.f32 %v2889, %v3222
      %v3233 = vadd.f32 %v2890, %v3224
      %s3234 = scalar_lea.vmem %s327, 256
      %v3235 = vld [vmem:[%s3234] sm:$0xff]
      %v3236 = vld [vmem:[%s3234 + $0x8] sm:$0xff]
      %v3237 = vld [vmem:[%s3234 + $0x10] sm:$0x1]
      %v3238 = vld [vmem:[%s3234 + $0x18] sm:$0x1]
      %v3239 = vlaneseq
      %v3240 = vshrl.u32 %v3239, 7
      %v3241 = vsub.s32 0, %v3240
      %v3242 = vrot.slane %v3235, %v3241
      %v3243 = vlaneseq
      %v3244 = vshrl.u32 %v3243, 7
      %v3245 = vsub.s32 0, %v3244
      %v3246 = vrot.slane %v3236, %v3245
      %v3247 = vmul.f32 %v346, %v3242
      %v3248 = vmul.f32 %v346, %v3246
      %v3249 = vmul.f32 %v351, %v3242
      %v3250 = vmul.f32 %v351, %v3246
      %v3251 = vmul.f32 %v356, %v3242
      %v3252 = vmul.f32 %v356, %v3246
      %v3253 = vmul.f32 %v361, %v3242
      %v3254 = vmul.f32 %v361, %v3246
      %v3255 = vlaneseq
      %v3256 = vshrl.u32 %v3255, 7
      %v3257 = vsub.s32 1, %v3256
      %v3258 = vrot.slane %v3235, %v3257
      %v3259 = vlaneseq
      %v3260 = vshrl.u32 %v3259, 7
      %v3261 = vsub.s32 1, %v3260
      %v3262 = vrot.slane %v3236, %v3261
      %v3263 = vmul.f32 %v381, %v3258
      %v3264 = vmul.f32 %v381, %v3262
      %v3265 = vmul.f32 %v385, %v3258
      %v3266 = vmul.f32 %v385, %v3262
      %v3267 = vmul.f32 %v389, %v3258
      %v3268 = vmul.f32 %v389, %v3262
      %v3269 = vmul.f32 %v393, %v3258
      %v3270 = vmul.f32 %v393, %v3262
      %v3271 = vadd.f32 %v3247, %v3263
      %v3272 = vadd.f32 %v3248, %v3264
      %v3273 = vadd.f32 %v3249, %v3265
      %v3274 = vadd.f32 %v3250, %v3266
      %v3275 = vadd.f32 %v3251, %v3267
      %v3276 = vadd.f32 %v3252, %v3268
      %v3277 = vadd.f32 %v3253, %v3269
      %v3278 = vadd.f32 %v3254, %v3270
      %v3279 = vlaneseq
      %v3280 = vshrl.u32 %v3279, 7
      %v3281 = vsub.s32 2, %v3280
      %v3282 = vrot.slane %v3235, %v3281
      %v3283 = vlaneseq
      %v3284 = vshrl.u32 %v3283, 7
      %v3285 = vsub.s32 2, %v3284
      %v3286 = vrot.slane %v3236, %v3285
      %v3287 = vmul.f32 %v421, %v3282
      %v3288 = vmul.f32 %v421, %v3286
      %v3289 = vmul.f32 %v425, %v3282
      %v3290 = vmul.f32 %v425, %v3286
      %v3291 = vmul.f32 %v429, %v3282
      %v3292 = vmul.f32 %v429, %v3286
      %v3293 = vmul.f32 %v433, %v3282
      %v3294 = vmul.f32 %v433, %v3286
      %v3295 = vadd.f32 %v3271, %v3287
      %v3296 = vadd.f32 %v3272, %v3288
      %v3297 = vadd.f32 %v3273, %v3289
      %v3298 = vadd.f32 %v3274, %v3290
      %v3299 = vadd.f32 %v3275, %v3291
      %v3300 = vadd.f32 %v3276, %v3292
      %v3301 = vadd.f32 %v3277, %v3293
      %v3302 = vadd.f32 %v3278, %v3294
      %v3303 = vlaneseq
      %v3304 = vshrl.u32 %v3303, 7
      %v3305 = vsub.s32 3, %v3304
      %v3306 = vrot.slane %v3235, %v3305
      %v3307 = vlaneseq
      %v3308 = vshrl.u32 %v3307, 7
      %v3309 = vsub.s32 3, %v3308
      %v3310 = vrot.slane %v3236, %v3309
      %v3311 = vmul.f32 %v461, %v3306
      %v3312 = vmul.f32 %v461, %v3310
      %v3313 = vmul.f32 %v465, %v3306
      %v3314 = vmul.f32 %v465, %v3310
      %v3315 = vmul.f32 %v469, %v3306
      %v3316 = vmul.f32 %v469, %v3310
      %v3317 = vmul.f32 %v473, %v3306
      %v3318 = vmul.f32 %v473, %v3310
      %v3319 = vadd.f32 %v3295, %v3311
      %v3320 = vadd.f32 %v3296, %v3312
      %v3321 = vadd.f32 %v3297, %v3313
      %v3322 = vadd.f32 %v3298, %v3314
      %v3323 = vadd.f32 %v3299, %v3315
      %v3324 = vadd.f32 %v3300, %v3316
      %v3325 = vadd.f32 %v3301, %v3317
      %v3326 = vadd.f32 %v3302, %v3318
      %v3327 = vlaneseq
      %v3328 = vshrl.u32 %v3327, 7
      %v3329 = vsub.s32 4, %v3328
      %v3330 = vrot.slane %v3235, %v3329
      %v3331 = vlaneseq
      %v3332 = vshrl.u32 %v3331, 7
      %v3333 = vsub.s32 4, %v3332
      %v3334 = vrot.slane %v3236, %v3333
      %v3335 = vmul.f32 %v501, %v3330
      %v3336 = vmul.f32 %v501, %v3334
      %v3337 = vmul.f32 %v505, %v3330
      %v3338 = vmul.f32 %v505, %v3334
      %v3339 = vmul.f32 %v509, %v3330
      %v3340 = vmul.f32 %v509, %v3334
      %v3341 = vmul.f32 %v513, %v3330
      %v3342 = vmul.f32 %v513, %v3334
      %v3343 = vadd.f32 %v3319, %v3335
      %v3344 = vadd.f32 %v3320, %v3336
      %v3345 = vadd.f32 %v3321, %v3337
      %v3346 = vadd.f32 %v3322, %v3338
      %v3347 = vadd.f32 %v3323, %v3339
      %v3348 = vadd.f32 %v3324, %v3340
      %v3349 = vadd.f32 %v3325, %v3341
      %v3350 = vadd.f32 %v3326, %v3342
      %v3351 = vlaneseq
      %v3352 = vshrl.u32 %v3351, 7
      %v3353 = vsub.s32 5, %v3352
      %v3354 = vrot.slane %v3235, %v3353
      %v3355 = vlaneseq
      %v3356 = vshrl.u32 %v3355, 7
      %v3357 = vsub.s32 5, %v3356
      %v3358 = vrot.slane %v3236, %v3357
      %v3359 = vmul.f32 %v541, %v3354
      %v3360 = vmul.f32 %v541, %v3358
      %v3361 = vmul.f32 %v545, %v3354
      %v3362 = vmul.f32 %v545, %v3358
      %v3363 = vmul.f32 %v549, %v3354
      %v3364 = vmul.f32 %v549, %v3358
      %v3365 = vmul.f32 %v553, %v3354
      %v3366 = vmul.f32 %v553, %v3358
      %v3367 = vadd.f32 %v3343, %v3359
      %v3368 = vadd.f32 %v3344, %v3360
      %v3369 = vadd.f32 %v3345, %v3361
      %v3370 = vadd.f32 %v3346, %v3362
      %v3371 = vadd.f32 %v3347, %v3363
      %v3372 = vadd.f32 %v3348, %v3364
      %v3373 = vadd.f32 %v3349, %v3365
      %v3374 = vadd.f32 %v3350, %v3366
      %v3375 = vlaneseq
      %v3376 = vshrl.u32 %v3375, 7
      %v3377 = vsub.s32 6, %v3376
      %v3378 = vrot.slane %v3235, %v3377
      %v3379 = vlaneseq
      %v3380 = vshrl.u32 %v3379, 7
      %v3381 = vsub.s32 6, %v3380
      %v3382 = vrot.slane %v3236, %v3381
      %v3383 = vmul.f32 %v581, %v3378
      %v3384 = vmul.f32 %v581, %v3382
      %v3385 = vmul.f32 %v585, %v3378
      %v3386 = vmul.f32 %v585, %v3382
      %v3387 = vmul.f32 %v589, %v3378
      %v3388 = vmul.f32 %v589, %v3382
      %v3389 = vmul.f32 %v593, %v3378
      %v3390 = vmul.f32 %v593, %v3382
      %v3391 = vadd.f32 %v3367, %v3383
      %v3392 = vadd.f32 %v3368, %v3384
      %v3393 = vadd.f32 %v3369, %v3385
      %v3394 = vadd.f32 %v3370, %v3386
      %v3395 = vadd.f32 %v3371, %v3387
      %v3396 = vadd.f32 %v3372, %v3388
      %v3397 = vadd.f32 %v3373, %v3389
      %v3398 = vadd.f32 %v3374, %v3390
      %v3399 = vlaneseq
      %v3400 = vshrl.u32 %v3399, 7
      %v3401 = vsub.s32 7, %v3400
      %v3402 = vrot.slane %v3235, %v3401
      %v3403 = vlaneseq
      %v3404 = vshrl.u32 %v3403, 7
      %v3405 = vsub.s32 7, %v3404
      %v3406 = vrot.slane %v3236, %v3405
      %v3407 = vmul.f32 %v621, %v3402
      %v3408 = vmul.f32 %v621, %v3406
      %v3409 = vmul.f32 %v625, %v3402
      %v3410 = vmul.f32 %v625, %v3406
      %v3411 = vmul.f32 %v629, %v3402
      %v3412 = vmul.f32 %v629, %v3406
      %v3413 = vmul.f32 %v633, %v3402
      %v3414 = vmul.f32 %v633, %v3406
      %v3415 = vadd.f32 %v3391, %v3407
      %v3416 = vadd.f32 %v3392, %v3408
      %v3417 = vadd.f32 %v3393, %v3409
      %v3418 = vadd.f32 %v3394, %v3410
      %v3419 = vadd.f32 %v3395, %v3411
      %v3420 = vadd.f32 %v3396, %v3412
      %v3421 = vadd.f32 %v3397, %v3413
      %v3422 = vadd.f32 %v3398, %v3414
      %v3423 = vlaneseq
      %v3424 = vshrl.u32 %v3423, 7
      %v3425 = vsub.s32 0, %v3424
      %v3426 = vrot.slane %v3237, %v3425
      %v3427 = vlaneseq
      %v3428 = vshrl.u32 %v3427, 7
      %v3429 = vsub.s32 0, %v3428
      %v3430 = vrot.slane %v3238, %v3429
      %v3431 = vmul.f32 %v661, %v3426
      %v3432 = vmul.f32 %v661, %v3430
      %v3433 = vmul.f32 %v665, %v3426
      %v3434 = vmul.f32 %v665, %v3430
      %v3435 = vmul.f32 %v669, %v3426
      %v3436 = vmul.f32 %v669, %v3430
      %v3437 = vmul.f32 %v673, %v3426
      %v3438 = vmul.f32 %v673, %v3430
      %v3439 = vadd.f32 %v3415, %v3431
      %v3440 = vadd.f32 %v3416, %v3432
      %v3441 = vadd.f32 %v3417, %v3433
      %v3442 = vadd.f32 %v3418, %v3434
      %v3443 = vadd.f32 %v3419, %v3435
      %v3444 = vadd.f32 %v3420, %v3436
      %v3445 = vadd.f32 %v3421, %v3437
      %v3446 = vadd.f32 %v3422, %v3438
      %v3447 = vadd.f32 %v3439, %v702
      %v3448 = vadd.f32 %v3440, %v702
      %v3449 = vadd.f32 %v3441, %v707
      %v3450 = vadd.f32 %v3442, %v707
      %v3451 = vadd.f32 %v3443, %v712
      %v3452 = vadd.f32 %v3444, %v712
      %v3453 = vadd.f32 %v3445, %v717
      %v3454 = vadd.f32 %v3446, %v717
      %v3455 = vmax.f32 %v3447, 0.0
      %v3456 = vmax.f32 %v3448, 0.0
      %v3457 = vmax.f32 %v3449, 0.0
      %v3458 = vmax.f32 %v3450, 0.0
      %v3459 = vmax.f32 %v3451, 0.0
      %v3460 = vmax.f32 %v3452, 0.0
      %v3461 = vmax.f32 %v3453, 0.0
      %v3462 = vmax.f32 %v3454, 0.0
      %s3463 = scalar_lea.vmem %s3, 256
      %v3464 = vld [vmem:[%s3463] sm:$0xff]
      %v3465 = vld [vmem:[%s3463 + $0x8] sm:$0xff]
      %v3466 = vld [vmem:[%s3463 + $0x10] sm:$0xff]
      %v3467 = vld [vmem:[%s3463 + $0x18] sm:$0xff]
      %v3469 = vsel %vm973, %v3464, 0
      %v3472 = vsel %vm973, %v3465, 0
      %v3475 = vsel %vm973, %v3466, 0
      %v3478 = vsel %vm973, %v3467, 0
      %3480 = vmatprep.subr.mxu0 %v3456
      %3481 = vmatpush1.msra.mxu0 %v3455
      %3482 = vmatprep.subr.mxu0 %v3458
      %3483 = vmatpush1.msra.mxu0 %v3457
      %3484 = vmatprep.subr.mxu0 %v3460
      %3485 = vmatpush1.msra.mxu0 %v3459
      %3486 = vmatprep.subr.mxu0 %v3462
      %3487 = vmatpush1.msra.mxu0 %v3461
      %3488 = vmatprep.subr.mxu0 0.0
      %3489 = vmatpush1.msra.mxu0 0.0
      %3490 = vmatprep.subr.mxu0 0.0
      %3491 = vmatpush1.msra.mxu0 0.0
      %3492 = vmatprep.subr.mxu0 0.0
      %3493 = vmatpush1.msra.mxu0 0.0
      %3494 = vmatprep.subr.mxu0 0.0
      %3495 = vmatpush1.msra.mxu0 0.0
      %3496 = vmatprep.subr.mxu0 0.0
      %3497 = vmatpush1.msra.mxu0 0.0
      %3498 = vmatprep.subr.mxu0 0.0
      %3499 = vmatpush1.msra.mxu0 0.0
      %3500 = vmatprep.subr.mxu0 0.0
      %3501 = vmatpush1.msra.mxu0 0.0
      %3502 = vmatprep.subr.mxu0 0.0
      %3503 = vmatpush1.msra.mxu0 0.0
      %3504 = vmatprep.subr.mxu0 0.0
      %3505 = vmatpush1.msra.mxu0 0.0
      %3506 = vmatprep.subr.mxu0 0.0
      %3507 = vmatpush1.msra.mxu0 0.0
      %3508 = vmatprep.subr.mxu0 0.0
      %3509 = vmatpush1.msra.mxu0 0.0
      %3510 = vmatprep.subr.mxu0 0.0
      %3511 = vmatpush1.msra.mxu0 0.0
      %3512 = vmatprep.subr.mxu0 0.0
      %3513 = vmatpush1.msra.mxu0 0.0
      %3514 = vmatprep.subr.mxu0 0.0
      %3515 = vmatpush1.msra.mxu0 0.0
      %3516 = vmatprep.subr.mxu0 0.0
      %3517 = vmatpush1.msra.mxu0 0.0
      %3518 = vmatprep.subr.mxu0 0.0
      %3519 = vmatpush1.msra.mxu0 0.0
      %3520 = vmatprep.subr.mxu0 0.0
      %3521 = vmatpush1.msra.mxu0 0.0
      %3522 = vmatprep.subr.mxu0 0.0
      %3523 = vmatpush1.msra.mxu0 0.0
      %3524 = vmatprep.subr.mxu0 0.0
      %3525 = vmatpush1.msra.mxu0 0.0
      %3526 = vmatprep.subr.mxu0 0.0
      %3527 = vmatpush1.msra.mxu0 0.0
      %3528 = vmatprep.subr.mxu0 0.0
      %3529 = vmatpush1.msra.mxu0 0.0
      %3530 = vmatprep.subr.mxu0 0.0
      %3531 = vmatpush1.msra.mxu0 0.0
      %3532 = vmatprep.subr.mxu0 0.0
      %3533 = vmatpush1.msra.mxu0 0.0
      %3534 = vmatprep.subr.mxu0 0.0
      %3535 = vmatpush1.msra.mxu0 0.0
      %3536 = vmatprep.subr.mxu0 0.0
      %3537 = vmatpush1.msra.mxu0 0.0
      %3538 = vmatprep.subr.mxu0 0.0
      %3539 = vmatpush1.msra.mxu0 0.0
      %3540 = vmatprep.subr.mxu0 0.0
      %3541 = vmatpush1.msra.mxu0 0.0
      %3542 = vmatprep.subr.mxu0 0.0
      %3543 = vmatpush1.msra.mxu0 0.0
      %3544 = vmatprep.mubr.f32.mxu0 0.0
      %3545 = vmatmul.mubr.f32.gmra.mrb[0].mxu0 %v3469
      %v3546 = vpop.f32.mrb[0].mxu0
      %v3547 = vadd.f32 0.0, %v3546
      %v3548 = vpop.f32.mrb[0].mxu0
      %v3549 = vadd.f32 0.0, %v3548
      %3550 = vmatprep.mubr.f32.mxu0 0.0
      %3551 = vmatmul.mubr.f32.gmra.mrb[0].mxu0 %v3472
      %v3552 = vpop.f32.mrb[0].mxu0
      %v3553 = vadd.f32 0.0, %v3552
      %v3554 = vpop.f32.mrb[0].mxu0
      %v3555 = vadd.f32 0.0, %v3554
      %3556 = vmatprep.mubr.f32.mxu0 0.0
      %3557 = vmatmul.mubr.f32.gmra.mrb[0].mxu0 %v3475
      %v3558 = vpop.f32.mrb[0].mxu0
      %v3559 = vadd.f32 0.0, %v3558
      %v3560 = vpop.f32.mrb[0].mxu0
      %v3561 = vadd.f32 0.0, %v3560
      %3562 = vmatprep.mubr.f32.mxu0 0.0
      %3563 = vmatmul.mubr.f32.gmra.mrb[0].mxu0 %v3478
      %v3564 = vpop.f32.mrb[0].mxu0
      %v3565 = vadd.f32 0.0, %v3564
      %v3566 = vpop.f32.mrb[0].mxu0
      %v3567 = vadd.f32 0.0, %v3566
      %3568 = vdwg.mxu0
      %v3569 = vadd.f32 %v3226, %v3547
      %v3570 = vadd.f32 %v3227, %v3549
      %v3571 = vadd.f32 %v3228, %v3553
      %v3572 = vadd.f32 %v3229, %v3555
      %v3573 = vadd.f32 %v3230, %v3559
      %v3574 = vadd.f32 %v3231, %v3561
      %v3575 = vadd.f32 %v3232, %v3565
      %v3576 = vadd.f32 %v3233, %v3567
      %v3577 = vld [vmem:[%s4] sm:$0xff]
      %v3578 = vld [vmem:[%s4 + $0x8] sm:$0xff]
      %v3579 = vld [vmem:[%s4 + $0x10] sm:$0xff]
      %v3580 = vld [vmem:[%s4 + $0x18] sm:$0xff]
      %3582 = vset.pattern.permute.xlu0 0
      %3583 = vperm.xlu0 %3582, %v3577
      %v3584 = vpop.permute.xlu0 %3583
      %3587 = vset.pattern.permute.xlu0 0
      %3588 = vperm.xlu0 %3587, %v3578
      %v3589 = vpop.permute.xlu0 %3588
      %3592 = vset.pattern.permute.xlu0 0
      %3593 = vperm.xlu0 %3592, %v3579
      %v3594 = vpop.permute.xlu0 %3593
      %3597 = vset.pattern.permute.xlu0 0
      %3598 = vperm.xlu0 %3597, %v3580
      %v3599 = vpop.permute.xlu0 %3598
      %v3601 = vadd.f32 %v3569, %v3584
      %v3602 = vadd.f32 %v3570, %v3584
      %v3603 = vadd.f32 %v3571, %v3589
      %v3604 = vadd.f32 %v3572, %v3589
      %v3605 = vadd.f32 %v3573, %v3594
      %v3606 = vadd.f32 %v3574, %v3594
      %v3607 = vadd.f32 %v3575, %v3599
      %v3608 = vadd.f32 %v3576, %v3599
      %v3609 = vmax.f32 %v3601, 0.0
      %v3610 = vmax.f32 %v3602, 0.0
      %v3611 = vmax.f32 %v3603, 0.0
      %v3612 = vmax.f32 %v3604, 0.0
      %v3613 = vmax.f32 %v3605, 0.0
      %v3614 = vmax.f32 %v3606, 0.0
      %v3615 = vmax.f32 %v3607, 0.0
      %v3616 = vmax.f32 %v3608, 0.0
      %v3617 = vld [vmem:[%s5] sm:$0xff]
      %v3618 = vld [vmem:[%s5 + $0x8] sm:$0xff]
      %v3619 = vld [vmem:[%s5 + $0x10] sm:$0xff]
      %v3620 = vld [vmem:[%s5 + $0x18] sm:$0xff]
      %v3621 = vld [vmem:[%s5 + $0x20] sm:$0xff]
      %v3622 = vld [vmem:[%s5 + $0x28] sm:$0xff]
      %v3623 = vld [vmem:[%s5 + $0x30] sm:$0xff]
      %v3624 = vld [vmem:[%s5 + $0x38] sm:$0xff]
      %s3625 = scalar_lea.vmem %s5, 64
      %v3626 = vld [vmem:[%s3625] sm:$0xff]
      %v3627 = vld [vmem:[%s3625 + $0x8] sm:$0xff]
      %v3628 = vld [vmem:[%s3625 + $0x10] sm:$0xff]
      %v3629 = vld [vmem:[%s3625 + $0x18] sm:$0xff]
      %v3630 = vld [vmem:[%s3625 + $0x20] sm:$0xff]
      %v3631 = vld [vmem:[%s3625 + $0x28] sm:$0xff]
      %v3632 = vld [vmem:[%s3625 + $0x30] sm:$0xff]
      %v3633 = vld [vmem:[%s3625 + $0x38] sm:$0xff]
      %3638 = vrot.lane.b32.xlu0 %v3609, 103
      %v3639 = vpop.permute.xlu0 %3638
      %3640 = vrot.lane.b32.xlu0 %v3611, 103
      %v3641 = vpop.permute.xlu0 %3640
      %3642 = vrot.lane.b32.xlu0 %v3613, 103
      %v3643 = vpop.permute.xlu0 %3642
      %3644 = vrot.lane.b32.xlu0 %v3615, 103
      %v3645 = vpop.permute.xlu0 %3644
      %v3651 = vsel %vm973, %v3626, 0
      %v3654 = vsel %vm973, %v3627, 0
      %v3657 = vsel %vm973, %v3628, 0
      %v3660 = vsel %vm973, %v3629, 0
      %v3663 = vsel %vm973, %v3630, 0
      %v3666 = vsel %vm973, %v3631, 0
      %v3669 = vsel %vm973, %v3632, 0
      %v3672 = vsel %vm973, %v3633, 0
      %3674 = vmatprep.subr.mxu0 0.0
      %3675 = vmatpush1.msra.mxu0 %v3639
      %3676 = vmatprep.subr.mxu0 0.0
      %3677 = vmatpush1.msra.mxu0 %v3641
      %3678 = vmatprep.subr.mxu0 0.0
      %3679 = vmatpush1.msra.mxu0 %v3643
      %3680 = vmatprep.subr.mxu0 0.0
      %3681 = vmatpush1.msra.mxu0 %v3645
      %3682 = vmatprep.subr.mxu0 0.0
      %3683 = vmatpush1.msra.mxu0 0.0
      %3684 = vmatprep.subr.mxu0 0.0
      %3685 = vmatpush1.msra.mxu0 0.0
      %3686 = vmatprep.subr.mxu0 0.0
      %3687 = vmatpush1.msra.mxu0 0.0
      %3688 = vmatprep.subr.mxu0 0.0
      %3689 = vmatpush1.msra.mxu0 0.0
      %3690 = vmatprep.subr.mxu0 0.0
      %3691 = vmatpush1.msra.mxu0 0.0
      %3692 = vmatprep.subr.mxu0 0.0
      %3693 = vmatpush1.msra.mxu0 0.0
      %3694 = vmatprep.subr.mxu0 0.0
      %3695 = vmatpush1.msra.mxu0 0.0
      %3696 = vmatprep.subr.mxu0 0.0
      %3697 = vmatpush1.msra.mxu0 0.0
      %3698 = vmatprep.subr.mxu0 0.0
      %3699 = vmatpush1.msra.mxu0 0.0
      %3700 = vmatprep.subr.mxu0 0.0
      %3701 = vmatpush1.msra.mxu0 0.0
      %3702 = vmatprep.subr.mxu0 0.0
      %3703 = vmatpush1.msra.mxu0 0.0
      %3704 = vmatprep.subr.mxu0 0.0
      %3705 = vmatpush1.msra.mxu0 0.0
      %3706 = vmatprep.subr.mxu0 0.0
      %3707 = vmatpush1.msra.mxu0 0.0
      %3708 = vmatprep.subr.mxu0 0.0
      %3709 = vmatpush1.msra.mxu0 0.0
      %3710 = vmatprep.subr.mxu0 0.0
      %3711 = vmatpush1.msra.mxu0 0.0
      %3712 = vmatprep.subr.mxu0 0.0
      %3713 = vmatpush1.msra.mxu0 0.0
      %3714 = vmatprep.subr.mxu0 0.0
      %3715 = vmatpush1.msra.mxu0 0.0
      %3716 = vmatprep.subr.mxu0 0.0
      %3717 = vmatpush1.msra.mxu0 0.0
      %3718 = vmatprep.subr.mxu0 0.0
      %3719 = vmatpush1.msra.mxu0 0.0
      %3720 = vmatprep.subr.mxu0 0.0
      %3721 = vmatpush1.msra.mxu0 0.0
      %3722 = vmatprep.subr.mxu0 0.0
      %3723 = vmatpush1.msra.mxu0 0.0
      %3724 = vmatprep.subr.mxu0 0.0
      %3725 = vmatpush1.msra.mxu0 0.0
      %3726 = vmatprep.subr.mxu0 0.0
      %3727 = vmatpush1.msra.mxu0 0.0
      %3728 = vmatprep.subr.mxu0 0.0
      %3729 = vmatpush1.msra.mxu0 0.0
      %3730 = vmatprep.subr.mxu0 0.0
      %3731 = vmatpush1.msra.mxu0 0.0
      %3732 = vmatprep.subr.mxu0 0.0
      %3733 = vmatpush1.msra.mxu0 0.0
      %3734 = vmatprep.subr.mxu0 0.0
      %3735 = vmatpush1.msra.mxu0 0.0
      %3736 = vmatprep.subr.mxu0 0.0
      %3737 = vmatpush1.msra.mxu0 0.0
      %3738 = vmatprep.mubr.f32.mxu0 0.0
      %3739 = vmatmul.mubr.f32.gmra.mrb[0].mxu0 %v3651
      %v3740 = vpop.f32.mrb[0].mxu0
      %v3741 = vadd.f32 0.0, %v3740
      %v3742 = vpop.f32.mrb[0].mxu0
      %3743 = vmatprep.mubr.f32.mxu0 0.0
      %3744 = vmatmul.mubr.f32.gmra.mrb[0].mxu0 %v3654
      %v3745 = vpop.f32.mrb[0].mxu0
      %v3746 = vadd.f32 0.0, %v3745
      %v3747 = vpop.f32.mrb[0].mxu0
      %3748 = vmatprep.mubr.f32.mxu0 0.0
      %3749 = vmatmul.mubr.f32.gmra.mrb[0].mxu0 %v3657
      %v3750 = vpop.f32.mrb[0].mxu0
      %v3751 = vadd.f32 0.0, %v3750
      %v3752 = vpop.f32.mrb[0].mxu0
      %3753 = vmatprep.mubr.f32.mxu0 0.0
      %3754 = vmatmul.mubr.f32.gmra.mrb[0].mxu0 %v3660
      %v3755 = vpop.f32.mrb[0].mxu0
      %v3756 = vadd.f32 0.0, %v3755
      %v3757 = vpop.f32.mrb[0].mxu0
      %3758 = vmatprep.mubr.f32.mxu0 0.0
      %3759 = vmatmul.mubr.f32.gmra.mrb[0].mxu0 %v3663
      %v3760 = vpop.f32.mrb[0].mxu0
      %v3761 = vadd.f32 0.0, %v3760
      %v3762 = vpop.f32.mrb[0].mxu0
      %3763 = vmatprep.mubr.f32.mxu0 0.0
      %3764 = vmatmul.mubr.f32.gmra.mrb[0].mxu0 %v3666
      %v3765 = vpop.f32.mrb[0].mxu0
      %v3766 = vadd.f32 0.0, %v3765
      %v3767 = vpop.f32.mrb[0].mxu0
      %3768 = vmatprep.mubr.f32.mxu0 0.0
      %3769 = vmatmul.mubr.f32.gmra.mrb[0].mxu0 %v3669
      %v3770 = vpop.f32.mrb[0].mxu0
      %v3771 = vadd.f32 0.0, %v3770
      %v3772 = vpop.f32.mrb[0].mxu0
      %3773 = vmatprep.mubr.f32.mxu0 0.0
      %3774 = vmatmul.mubr.f32.gmra.mrb[0].mxu0 %v3672
      %v3775 = vpop.f32.mrb[0].mxu0
      %v3776 = vadd.f32 0.0, %v3775
      %v3777 = vpop.f32.mrb[0].mxu0
      %3778 = vdwg.mxu0
      %v3780 = vsel %vm973, %v3617, 0
      %v3783 = vsel %vm973, %v3618, 0
      %v3786 = vsel %vm973, %v3619, 0
      %v3789 = vsel %vm973, %v3620, 0
      %v3792 = vsel %vm973, %v3621, 0
      %v3795 = vsel %vm973, %v3622, 0
      %v3798 = vsel %vm973, %v3623, 0
      %v3801 = vsel %vm973, %v3624, 0
      %3803 = vmatprep.subr.mxu0 0.0
      %3804 = vmatpush1.msra.mxu0 %v3609
      %3805 = vmatprep.subr.mxu0 0.0
      %3806 = vmatpush1.msra.mxu0 %v3611
      %3807 = vmatprep.subr.mxu0 0.0
      %3808 = vmatpush1.msra.mxu0 %v3613
      %3809 = vmatprep.subr.mxu0 0.0
      %3810 = vmatpush1.msra.mxu0 %v3615
      %3811 = vmatprep.subr.mxu0 0.0
      %3812 = vmatpush1.msra.mxu0 0.0
      %3813 = vmatprep.subr.mxu0 0.0
      %3814 = vmatpush1.msra.mxu0 0.0
      %3815 = vmatprep.subr.mxu0 0.0
      %3816 = vmatpush1.msra.mxu0 0.0
      %3817 = vmatprep.subr.mxu0 0.0
      %3818 = vmatpush1.msra.mxu0 0.0
      %3819 = vmatprep.subr.mxu0 0.0
      %3820 = vmatpush1.msra.mxu0 0.0
      %3821 = vmatprep.subr.mxu0 0.0
      %3822 = vmatpush1.msra.mxu0 0.0
      %3823 = vmatprep.subr.mxu0 0.0
      %3824 = vmatpush1.msra.mxu0 0.0
      %3825 = vmatprep.subr.mxu0 0.0
      %3826 = vmatpush1.msra.mxu0 0.0
      %3827 = vmatprep.subr.mxu0 0.0
      %3828 = vmatpush1.msra.mxu0 0.0
      %3829 = vmatprep.subr.mxu0 0.0
      %3830 = vmatpush1.msra.mxu0 0.0
      %3831 = vmatprep.subr.mxu0 0.0
      %3832 = vmatpush1.msra.mxu0 0.0
      %3833 = vmatprep.subr.mxu0 0.0
      %3834 = vmatpush1.msra.mxu0 0.0
      %3835 = vmatprep.subr.mxu0 0.0
      %3836 = vmatpush1.msra.mxu0 0.0
      %3837 = vmatprep.subr.mxu0 0.0
      %3838 = vmatpush1.msra.mxu0 0.0
      %3839 = vmatprep.subr.mxu0 0.0
      %3840 = vmatpush1.msra.mxu0 0.0
      %3841 = vmatprep.subr.mxu0 0.0
      %3842 = vmatpush1.msra.mxu0 0.0
      %3843 = vmatprep.subr.mxu0 0.0
      %3844 = vmatpush1.msra.mxu0 0.0
      %3845 = vmatprep.subr.mxu0 0.0
      %3846 = vmatpush1.msra.mxu0 0.0
      %3847 = vmatprep.subr.mxu0 0.0
      %3848 = vmatpush1.msra.mxu0 0.0
      %3849 = vmatprep.subr.mxu0 0.0
      %3850 = vmatpush1.msra.mxu0 0.0
      %3851 = vmatprep.subr.mxu0 0.0
      %3852 = vmatpush1.msra.mxu0 0.0
      %3853 = vmatprep.subr.mxu0 0.0
      %3854 = vmatpush1.msra.mxu0 0.0
      %3855 = vmatprep.subr.mxu0 0.0
      %3856 = vmatpush1.msra.mxu0 0.0
      %3857 = vmatprep.subr.mxu0 0.0
      %3858 = vmatpush1.msra.mxu0 0.0
      %3859 = vmatprep.subr.mxu0 0.0
      %3860 = vmatpush1.msra.mxu0 0.0
      %3861 = vmatprep.subr.mxu0 0.0
      %3862 = vmatpush1.msra.mxu0 0.0
      %3863 = vmatprep.subr.mxu0 0.0
      %3864 = vmatpush1.msra.mxu0 0.0
      %3865 = vmatprep.subr.mxu0 0.0
      %3866 = vmatpush1.msra.mxu0 0.0
      %3867 = vmatprep.mubr.f32.mxu0 0.0
      %3868 = vmatmul.mubr.f32.gmra.mrb[0].mxu0 %v3780
      %v3869 = vpop.f32.mrb[0].mxu0
      %v3870 = vadd.f32 %v3741, %v3869
      %v3871 = vpop.f32.mrb[0].mxu0
      %3872 = vmatprep.mubr.f32.mxu0 0.0
      %3873 = vmatmul.mubr.f32.gmra.mrb[0].mxu0 %v3783
      %v3874 = vpop.f32.mrb[0].mxu0
      %v3875 = vadd.f32 %v3746, %v3874
      %v3876 = vpop.f32.mrb[0].mxu0
      %3877 = vmatprep.mubr.f32.mxu0 0.0
      %3878 = vmatmul.mubr.f32.gmra.mrb[0].mxu0 %v3786
      %v3879 = vpop.f32.mrb[0].mxu0
      %v3880 = vadd.f32 %v3751, %v3879
      %v3881 = vpop.f32.mrb[0].mxu0
      %3882 = vmatprep.mubr.f32.mxu0 0.0
      %3883 = vmatmul.mubr.f32.gmra.mrb[0].mxu0 %v3789
      %v3884 = vpop.f32.mrb[0].mxu0
      %v3885 = vadd.f32 %v3756, %v3884
      %v3886 = vpop.f32.mrb[0].mxu0
      %3887 = vmatprep.mubr.f32.mxu0 0.0
      %3888 = vmatmul.mubr.f32.gmra.mrb[0].mxu0 %v3792
      %v3889 = vpop.f32.mrb[0].mxu0
      %v3890 = vadd.f32 %v3761, %v3889
      %v3891 = vpop.f32.mrb[0].mxu0
      %3892 = vmatprep.mubr.f32.mxu0 0.0
      %3893 = vmatmul.mubr.f32.gmra.mrb[0].mxu0 %v3795
      %v3894 = vpop.f32.mrb[0].mxu0
      %v3895 = vadd.f32 %v3766, %v3894
      %v3896 = vpop.f32.mrb[0].mxu0
      %3897 = vmatprep.mubr.f32.mxu0 0.0
      %3898 = vmatmul.mubr.f32.gmra.mrb[0].mxu0 %v3798
      %v3899 = vpop.f32.mrb[0].mxu0
      %v3900 = vadd.f32 %v3771, %v3899
      %v3901 = vpop.f32.mrb[0].mxu0
      %3902 = vmatprep.mubr.f32.mxu0 0.0
      %3903 = vmatmul.mubr.f32.gmra.mrb[0].mxu0 %v3801
      %v3904 = vpop.f32.mrb[0].mxu0
      %v3905 = vadd.f32 %v3776, %v3904
      %v3906 = vpop.f32.mrb[0].mxu0
      %3907 = vdwg.mxu0
      %s3908 = scalar_lea.vmem %s5, 128
      %v3909 = vld [vmem:[%s3908] sm:$0xff]
      %v3910 = vld [vmem:[%s3908 + $0x8] sm:$0xff]
      %v3911 = vld [vmem:[%s3908 + $0x10] sm:$0xff]
      %v3912 = vld [vmem:[%s3908 + $0x18] sm:$0xff]
      %v3913 = vld [vmem:[%s3908 + $0x20] sm:$0xff]
      %v3914 = vld [vmem:[%s3908 + $0x28] sm:$0xff]
      %v3915 = vld [vmem:[%s3908 + $0x30] sm:$0xff]
      %v3916 = vld [vmem:[%s3908 + $0x38] sm:$0xff]
      %3917 = vrot.lane.b32.xlu0 %v3609, 78
      %v3918 = vpop.permute.xlu0 %3917
      %3919 = vrot.lane.b32.xlu0 %v3611, 78
      %v3920 = vpop.permute.xlu0 %3919
      %3921 = vrot.lane.b32.xlu0 %v3613, 78
      %v3922 = vpop.permute.xlu0 %3921
      %3923 = vrot.lane.b32.xlu0 %v3615, 78
      %v3924 = vpop.permute.xlu0 %3923
      %v3930 = vsel %vm973, %v3909, 0
      %v3933 = vsel %vm973, %v3910, 0
      %v3936 = vsel %vm973, %v3911, 0
      %v3939 = vsel %vm973, %v3912, 0
      %v3942 = vsel %vm973, %v3913, 0
      %v3945 = vsel %vm973, %v3914, 0
      %v3948 = vsel %vm973, %v3915, 0
      %v3951 = vsel %vm973, %v3916, 0
      %3953 = vmatprep.subr.mxu0 0.0
      %3954 = vmatpush1.msra.mxu0 %v3918
      %3955 = vmatprep.subr.mxu0 0.0
      %3956 = vmatpush1.msra.mxu0 %v3920
      %3957 = vmatprep.subr.mxu0 0.0
      %3958 = vmatpush1.msra.mxu0 %v3922
      %3959 = vmatprep.subr.mxu0 0.0
      %3960 = vmatpush1.msra.mxu0 %v3924
      %3961 = vmatprep.subr.mxu0 0.0
      %3962 = vmatpush1.msra.mxu0 0.0
      %3963 = vmatprep.subr.mxu0 0.0
      %3964 = vmatpush1.msra.mxu0 0.0
      %3965 = vmatprep.subr.mxu0 0.0
      %3966 = vmatpush1.msra.mxu0 0.0
      %3967 = vmatprep.subr.mxu0 0.0
      %3968 = vmatpush1.msra.mxu0 0.0
      %3969 = vmatprep.subr.mxu0 0.0
      %3970 = vmatpush1.msra.mxu0 0.0
      %3971 = vmatprep.subr.mxu0 0.0
      %3972 = vmatpush1.msra.mxu0 0.0
      %3973 = vmatprep.subr.mxu0 0.0
      %3974 = vmatpush1.msra.mxu0 0.0
      %3975 = vmatprep.subr.mxu0 0.0
      %3976 = vmatpush1.msra.mxu0 0.0
      %3977 = vmatprep.subr.mxu0 0.0
      %3978 = vmatpush1.msra.mxu0 0.0
      %3979 = vmatprep.subr.mxu0 0.0
      %3980 = vmatpush1.msra.mxu0 0.0
      %3981 = vmatprep.subr.mxu0 0.0
      %3982 = vmatpush1.msra.mxu0 0.0
      %3983 = vmatprep.subr.mxu0 0.0
      %3984 = vmatpush1.msra.mxu0 0.0
      %3985 = vmatprep.subr.mxu0 0.0
      %3986 = vmatpush1.msra.mxu0 0.0
      %3987 = vmatprep.subr.mxu0 0.0
      %3988 = vmatpush1.msra.mxu0 0.0
      %3989 = vmatprep.subr.mxu0 0.0
      %3990 = vmatpush1.msra.mxu0 0.0
      %3991 = vmatprep.subr.mxu0 0.0
      %3992 = vmatpush1.msra.mxu0 0.0
      %3993 = vmatprep.subr.mxu0 0.0
      %3994 = vmatpush1.msra.mxu0 0.0
      %3995 = vmatprep.subr.mxu0 0.0
      %3996 = vmatpush1.msra.mxu0 0.0
      %3997 = vmatprep.subr.mxu0 0.0
      %3998 = vmatpush1.msra.mxu0 0.0
      %3999 = vmatprep.subr.mxu0 0.0
      %4000 = vmatpush1.msra.mxu0 0.0
      %4001 = vmatprep.subr.mxu0 0.0
      %4002 = vmatpush1.msra.mxu0 0.0
      %4003 = vmatprep.subr.mxu0 0.0
      %4004 = vmatpush1.msra.mxu0 0.0
      %4005 = vmatprep.subr.mxu0 0.0
      %4006 = vmatpush1.msra.mxu0 0.0
      %4007 = vmatprep.subr.mxu0 0.0
      %4008 = vmatpush1.msra.mxu0 0.0
      %4009 = vmatprep.subr.mxu0 0.0
      %4010 = vmatpush1.msra.mxu0 0.0
      %4011 = vmatprep.subr.mxu0 0.0
      %4012 = vmatpush1.msra.mxu0 0.0
      %4013 = vmatprep.subr.mxu0 0.0
      %4014 = vmatpush1.msra.mxu0 0.0
      %4015 = vmatprep.subr.mxu0 0.0
      %4016 = vmatpush1.msra.mxu0 0.0
      %4017 = vmatprep.mubr.f32.mxu0 0.0
      %4018 = vmatmul.mubr.f32.gmra.mrb[0].mxu0 %v3930
      %v4019 = vpop.f32.mrb[0].mxu0
      %v4020 = vadd.f32 0.0, %v4019
      %v4021 = vpop.f32.mrb[0].mxu0
      %4022 = vmatprep.mubr.f32.mxu0 0.0
      %4023 = vmatmul.mubr.f32.gmra.mrb[0].mxu0 %v3933
      %v4024 = vpop.f32.mrb[0].mxu0
      %v4025 = vadd.f32 0.0, %v4024
      %v4026 = vpop.f32.mrb[0].mxu0
      %4027 = vmatprep.mubr.f32.mxu0 0.0
      %4028 = vmatmul.mubr.f32.gmra.mrb[0].mxu0 %v3936
      %v4029 = vpop.f32.mrb[0].mxu0
      %v4030 = vadd.f32 0.0, %v4029
      %v4031 = vpop.f32.mrb[0].mxu0
      %4032 = vmatprep.mubr.f32.mxu0 0.0
      %4033 = vmatmul.mubr.f32.gmra.mrb[0].mxu0 %v3939
      %v4034 = vpop.f32.mrb[0].mxu0
      %v4035 = vadd.f32 0.0, %v4034
      %v4036 = vpop.f32.mrb[0].mxu0
      %4037 = vmatprep.mubr.f32.mxu0 0.0
      %4038 = vmatmul.mubr.f32.gmra.mrb[0].mxu0 %v3942
      %v4039 = vpop.f32.mrb[0].mxu0
      %v4040 = vadd.f32 0.0, %v4039
      %v4041 = vpop.f32.mrb[0].mxu0
      %4042 = vmatprep.mubr.f32.mxu0 0.0
      %4043 = vmatmul.mubr.f32.gmra.mrb[0].mxu0 %v3945
      %v4044 = vpop.f32.mrb[0].mxu0
      %v4045 = vadd.f32 0.0, %v4044
      %v4046 = vpop.f32.mrb[0].mxu0
      %4047 = vmatprep.mubr.f32.mxu0 0.0
      %4048 = vmatmul.mubr.f32.gmra.mrb[0].mxu0 %v3948
      %v4049 = vpop.f32.mrb[0].mxu0
      %v4050 = vadd.f32 0.0, %v4049
      %v4051 = vpop.f32.mrb[0].mxu0
      %4052 = vmatprep.mubr.f32.mxu0 0.0
      %4053 = vmatmul.mubr.f32.gmra.mrb[0].mxu0 %v3951
      %v4054 = vpop.f32.mrb[0].mxu0
      %v4055 = vadd.f32 0.0, %v4054
      %v4056 = vpop.f32.mrb[0].mxu0
      %4057 = vdwg.mxu0
      %v4058 = vadd.f32 %v3870, %v4020
      %v4059 = vadd.f32 %v3875, %v4025
      %v4060 = vadd.f32 %v3880, %v4030
      %v4061 = vadd.f32 %v3885, %v4035
      %v4062 = vadd.f32 %v3890, %v4040
      %v4063 = vadd.f32 %v3895, %v4045
      %v4064 = vadd.f32 %v3900, %v4050
      %v4065 = vadd.f32 %v3905, %v4055
      %s4066 = scalar_lea.vmem %s5, 192
      %v4067 = vld [vmem:[%s4066] sm:$0xff]
      %v4068 = vld [vmem:[%s4066 + $0x8] sm:$0xff]
      %v4069 = vld [vmem:[%s4066 + $0x10] sm:$0xff]
      %v4070 = vld [vmem:[%s4066 + $0x18] sm:$0xff]
      %v4071 = vld [vmem:[%s4066 + $0x20] sm:$0xff]
      %v4072 = vld [vmem:[%s4066 + $0x28] sm:$0xff]
      %v4073 = vld [vmem:[%s4066 + $0x30] sm:$0xff]
      %v4074 = vld [vmem:[%s4066 + $0x38] sm:$0xff]
      %4075 = vrot.lane.b32.xlu0 %v3609, 53
      %v4076 = vpop.permute.xlu0 %4075
      %4077 = vrot.lane.b32.xlu0 %v3611, 53
      %v4078 = vpop.permute.xlu0 %4077
      %4079 = vrot.lane.b32.xlu0 %v3613, 53
      %v4080 = vpop.permute.xlu0 %4079
      %4081 = vrot.lane.b32.xlu0 %v3615, 53
      %v4082 = vpop.permute.xlu0 %4081
      %v4088 = vsel %vm973, %v4067, 0
      %v4091 = vsel %vm973, %v4068, 0
      %v4094 = vsel %vm973, %v4069, 0
      %v4097 = vsel %vm973, %v4070, 0
      %v4100 = vsel %vm973, %v4071, 0
      %v4103 = vsel %vm973, %v4072, 0
      %v4106 = vsel %vm973, %v4073, 0
      %v4109 = vsel %vm973, %v4074, 0
      %4111 = vmatprep.subr.mxu0 0.0
      %4112 = vmatpush1.msra.mxu0 %v4076
      %4113 = vmatprep.subr.mxu0 0.0
      %4114 = vmatpush1.msra.mxu0 %v4078
      %4115 = vmatprep.subr.mxu0 0.0
      %4116 = vmatpush1.msra.mxu0 %v4080
      %4117 = vmatprep.subr.mxu0 0.0
      %4118 = vmatpush1.msra.mxu0 %v4082
      %4119 = vmatprep.subr.mxu0 0.0
      %4120 = vmatpush1.msra.mxu0 0.0
      %4121 = vmatprep.subr.mxu0 0.0
      %4122 = vmatpush1.msra.mxu0 0.0
      %4123 = vmatprep.subr.mxu0 0.0
      %4124 = vmatpush1.msra.mxu0 0.0
      %4125 = vmatprep.subr.mxu0 0.0
      %4126 = vmatpush1.msra.mxu0 0.0
      %4127 = vmatprep.subr.mxu0 0.0
      %4128 = vmatpush1.msra.mxu0 0.0
      %4129 = vmatprep.subr.mxu0 0.0
      %4130 = vmatpush1.msra.mxu0 0.0
      %4131 = vmatprep.subr.mxu0 0.0
      %4132 = vmatpush1.msra.mxu0 0.0
      %4133 = vmatprep.subr.mxu0 0.0
      %4134 = vmatpush1.msra.mxu0 0.0
      %4135 = vmatprep.subr.mxu0 0.0
      %4136 = vmatpush1.msra.mxu0 0.0
      %4137 = vmatprep.subr.mxu0 0.0
      %4138 = vmatpush1.msra.mxu0 0.0
      %4139 = vmatprep.subr.mxu0 0.0
      %4140 = vmatpush1.msra.mxu0 0.0
      %4141 = vmatprep.subr.mxu0 0.0
      %4142 = vmatpush1.msra.mxu0 0.0
      %4143 = vmatprep.subr.mxu0 0.0
      %4144 = vmatpush1.msra.mxu0 0.0
      %4145 = vmatprep.subr.mxu0 0.0
      %4146 = vmatpush1.msra.mxu0 0.0
      %4147 = vmatprep.subr.mxu0 0.0
      %4148 = vmatpush1.msra.mxu0 0.0
      %4149 = vmatprep.subr.mxu0 0.0
      %4150 = vmatpush1.msra.mxu0 0.0
      %4151 = vmatprep.subr.mxu0 0.0
      %4152 = vmatpush1.msra.mxu0 0.0
      %4153 = vmatprep.subr.mxu0 0.0
      %4154 = vmatpush1.msra.mxu0 0.0
      %4155 = vmatprep.subr.mxu0 0.0
      %4156 = vmatpush1.msra.mxu0 0.0
      %4157 = vmatprep.subr.mxu0 0.0
      %4158 = vmatpush1.msra.mxu0 0.0
      %4159 = vmatprep.subr.mxu0 0.0
      %4160 = vmatpush1.msra.mxu0 0.0
      %4161 = vmatprep.subr.mxu0 0.0
      %4162 = vmatpush1.msra.mxu0 0.0
      %4163 = vmatprep.subr.mxu0 0.0
      %4164 = vmatpush1.msra.mxu0 0.0
      %4165 = vmatprep.subr.mxu0 0.0
      %4166 = vmatpush1.msra.mxu0 0.0
      %4167 = vmatprep.subr.mxu0 0.0
      %4168 = vmatpush1.msra.mxu0 0.0
      %4169 = vmatprep.subr.mxu0 0.0
      %4170 = vmatpush1.msra.mxu0 0.0
      %4171 = vmatprep.subr.mxu0 0.0
      %4172 = vmatpush1.msra.mxu0 0.0
      %4173 = vmatprep.subr.mxu0 0.0
      %4174 = vmatpush1.msra.mxu0 0.0
      %4175 = vmatprep.mubr.f32.mxu0 0.0
      %4176 = vmatmul.mubr.f32.gmra.mrb[0].mxu0 %v4088
      %v4177 = vpop.f32.mrb[0].mxu0
      %v4178 = vadd.f32 0.0, %v4177
      %v4179 = vpop.f32.mrb[0].mxu0
      %4180 = vmatprep.mubr.f32.mxu0 0.0
      %4181 = vmatmul.mubr.f32.gmra.mrb[0].mxu0 %v4091
      %v4182 = vpop.f32.mrb[0].mxu0
      %v4183 = vadd.f32 0.0, %v4182
      %v4184 = vpop.f32.mrb[0].mxu0
      %4185 = vmatprep.mubr.f32.mxu0 0.0
      %4186 = vmatmul.mubr.f32.gmra.mrb[0].mxu0 %v4094
      %v4187 = vpop.f32.mrb[0].mxu0
      %v4188 = vadd.f32 0.0, %v4187
      %v4189 = vpop.f32.mrb[0].mxu0
      %4190 = vmatprep.mubr.f32.mxu0 0.0
      %4191 = vmatmul.mubr.f32.gmra.mrb[0].mxu0 %v4097
      %v4192 = vpop.f32.mrb[0].mxu0
      %v4193 = vadd.f32 0.0, %v4192
      %v4194 = vpop.f32.mrb[0].mxu0
      %4195 = vmatprep.mubr.f32.mxu0 0.0
      %4196 = vmatmul.mubr.f32.gmra.mrb[0].mxu0 %v4100
      %v4197 = vpop.f32.mrb[0].mxu0
      %v4198 = vadd.f32 0.0, %v4197
      %v4199 = vpop.f32.mrb[0].mxu0
      %4200 = vmatprep.mubr.f32.mxu0 0.0
      %4201 = vmatmul.mubr.f32.gmra.mrb[0].mxu0 %v4103
      %v4202 = vpop.f32.mrb[0].mxu0
      %v4203 = vadd.f32 0.0, %v4202
      %v4204 = vpop.f32.mrb[0].mxu0
      %4205 = vmatprep.mubr.f32.mxu0 0.0
      %4206 = vmatmul.mubr.f32.gmra.mrb[0].mxu0 %v4106
      %v4207 = vpop.f32.mrb[0].mxu0
      %v4208 = vadd.f32 0.0, %v4207
      %v4209 = vpop.f32.mrb[0].mxu0
      %4210 = vmatprep.mubr.f32.mxu0 0.0
      %4211 = vmatmul.mubr.f32.gmra.mrb[0].mxu0 %v4109
      %v4212 = vpop.f32.mrb[0].mxu0
      %v4213 = vadd.f32 0.0, %v4212
      %v4214 = vpop.f32.mrb[0].mxu0
      %4215 = vdwg.mxu0
      %v4216 = vadd.f32 %v4058, %v4178
      %v4217 = vadd.f32 %v4059, %v4183
      %v4218 = vadd.f32 %v4060, %v4188
      %v4219 = vadd.f32 %v4061, %v4193
      %v4220 = vadd.f32 %v4062, %v4198
      %v4221 = vadd.f32 %v4063, %v4203
      %v4222 = vadd.f32 %v4064, %v4208
      %v4223 = vadd.f32 %v4065, %v4213
      %s4224 = scalar_lea.vmem %s5, 256
      %v4225 = vld [vmem:[%s4224] sm:$0xff]
      %v4226 = vld [vmem:[%s4224 + $0x8] sm:$0xff]
      %v4227 = vld [vmem:[%s4224 + $0x10] sm:$0xff]
      %v4228 = vld [vmem:[%s4224 + $0x18] sm:$0xff]
      %v4229 = vld [vmem:[%s4224 + $0x20] sm:$0xff]
      %v4230 = vld [vmem:[%s4224 + $0x28] sm:$0xff]
      %v4231 = vld [vmem:[%s4224 + $0x30] sm:$0xff]
      %v4232 = vld [vmem:[%s4224 + $0x38] sm:$0xff]
      %4233 = vrot.lane.b32.xlu0 %v3609, 28
      %v4234 = vpop.permute.xlu0 %4233
      %4235 = vrot.lane.b32.xlu0 %v3611, 28
      %v4236 = vpop.permute.xlu0 %4235
      %4237 = vrot.lane.b32.xlu0 %v3613, 28
      %v4238 = vpop.permute.xlu0 %4237
      %4239 = vrot.lane.b32.xlu0 %v3615, 28
      %v4240 = vpop.permute.xlu0 %4239
      %v4246 = vsel %vm973, %v4225, 0
      %v4249 = vsel %vm973, %v4226, 0
      %v4252 = vsel %vm973, %v4227, 0
      %v4255 = vsel %vm973, %v4228, 0
      %v4258 = vsel %vm973, %v4229, 0
      %v4261 = vsel %vm973, %v4230, 0
      %v4264 = vsel %vm973, %v4231, 0
      %v4267 = vsel %vm973, %v4232, 0
      %4269 = vmatprep.subr.mxu0 0.0
      %4270 = vmatpush1.msra.mxu0 %v4234
      %4271 = vmatprep.subr.mxu0 0.0
      %4272 = vmatpush1.msra.mxu0 %v4236
      %4273 = vmatprep.subr.mxu0 0.0
      %4274 = vmatpush1.msra.mxu0 %v4238
      %4275 = vmatprep.subr.mxu0 0.0
      %4276 = vmatpush1.msra.mxu0 %v4240
      %4277 = vmatprep.subr.mxu0 0.0
      %4278 = vmatpush1.msra.mxu0 0.0
      %4279 = vmatprep.subr.mxu0 0.0
      %4280 = vmatpush1.msra.mxu0 0.0
      %4281 = vmatprep.subr.mxu0 0.0
      %4282 = vmatpush1.msra.mxu0 0.0
      %4283 = vmatprep.subr.mxu0 0.0
      %4284 = vmatpush1.msra.mxu0 0.0
      %4285 = vmatprep.subr.mxu0 0.0
      %4286 = vmatpush1.msra.mxu0 0.0
      %4287 = vmatprep.subr.mxu0 0.0
      %4288 = vmatpush1.msra.mxu0 0.0
      %4289 = vmatprep.subr.mxu0 0.0
      %4290 = vmatpush1.msra.mxu0 0.0
      %4291 = vmatprep.subr.mxu0 0.0
      %4292 = vmatpush1.msra.mxu0 0.0
      %4293 = vmatprep.subr.mxu0 0.0
      %4294 = vmatpush1.msra.mxu0 0.0
      %4295 = vmatprep.subr.mxu0 0.0
      %4296 = vmatpush1.msra.mxu0 0.0
      %4297 = vmatprep.subr.mxu0 0.0
      %4298 = vmatpush1.msra.mxu0 0.0
      %4299 = vmatprep.subr.mxu0 0.0
      %4300 = vmatpush1.msra.mxu0 0.0
      %4301 = vmatprep.subr.mxu0 0.0
      %4302 = vmatpush1.msra.mxu0 0.0
      %4303 = vmatprep.subr.mxu0 0.0
      %4304 = vmatpush1.msra.mxu0 0.0
      %4305 = vmatprep.subr.mxu0 0.0
      %4306 = vmatpush1.msra.mxu0 0.0
      %4307 = vmatprep.subr.mxu0 0.0
      %4308 = vmatpush1.msra.mxu0 0.0
      %4309 = vmatprep.subr.mxu0 0.0
      %4310 = vmatpush1.msra.mxu0 0.0
      %4311 = vmatprep.subr.mxu0 0.0
      %4312 = vmatpush1.msra.mxu0 0.0
      %4313 = vmatprep.subr.mxu0 0.0
      %4314 = vmatpush1.msra.mxu0 0.0
      %4315 = vmatprep.subr.mxu0 0.0
      %4316 = vmatpush1.msra.mxu0 0.0
      %4317 = vmatprep.subr.mxu0 0.0
      %4318 = vmatpush1.msra.mxu0 0.0
      %4319 = vmatprep.subr.mxu0 0.0
      %4320 = vmatpush1.msra.mxu0 0.0
      %4321 = vmatprep.subr.mxu0 0.0
      %4322 = vmatpush1.msra.mxu0 0.0
      %4323 = vmatprep.subr.mxu0 0.0
      %4324 = vmatpush1.msra.mxu0 0.0
      %4325 = vmatprep.subr.mxu0 0.0
      %4326 = vmatpush1.msra.mxu0 0.0
      %4327 = vmatprep.subr.mxu0 0.0
      %4328 = vmatpush1.msra.mxu0 0.0
      %4329 = vmatprep.subr.mxu0 0.0
      %4330 = vmatpush1.msra.mxu0 0.0
      %4331 = vmatprep.subr.mxu0 0.0
      %4332 = vmatpush1.msra.mxu0 0.0
      %4333 = vmatprep.mubr.f32.mxu0 0.0
      %4334 = vmatmul.mubr.f32.gmra.mrb[0].mxu0 %v4246
      %v4335 = vpop.f32.mrb[0].mxu0
      %v4336 = vadd.f32 0.0, %v4335
      %v4337 = vpop.f32.mrb[0].mxu0
      %4338 = vmatprep.mubr.f32.mxu0 0.0
      %4339 = vmatmul.mubr.f32.gmra.mrb[0].mxu0 %v4249
      %v4340 = vpop.f32.mrb[0].mxu0
      %v4341 = vadd.f32 0.0, %v4340
      %v4342 = vpop.f32.mrb[0].mxu0
      %4343 = vmatprep.mubr.f32.mxu0 0.0
      %4344 = vmatmul.mubr.f32.gmra.mrb[0].mxu0 %v4252
      %v4345 = vpop.f32.mrb[0].mxu0
      %v4346 = vadd.f32 0.0, %v4345
      %v4347 = vpop.f32.mrb[0].mxu0
      %4348 = vmatprep.mubr.f32.mxu0 0.0
      %4349 = vmatmul.mubr.f32.gmra.mrb[0].mxu0 %v4255
      %v4350 = vpop.f32.mrb[0].mxu0
      %v4351 = vadd.f32 0.0, %v4350
      %v4352 = vpop.f32.mrb[0].mxu0
      %4353 = vmatprep.mubr.f32.mxu0 0.0
      %4354 = vmatmul.mubr.f32.gmra.mrb[0].mxu0 %v4258
      %v4355 = vpop.f32.mrb[0].mxu0
      %v4356 = vadd.f32 0.0, %v4355
      %v4357 = vpop.f32.mrb[0].mxu0
      %4358 = vmatprep.mubr.f32.mxu0 0.0
      %4359 = vmatmul.mubr.f32.gmra.mrb[0].mxu0 %v4261
      %v4360 = vpop.f32.mrb[0].mxu0
      %v4361 = vadd.f32 0.0, %v4360
      %v4362 = vpop.f32.mrb[0].mxu0
      %4363 = vmatprep.mubr.f32.mxu0 0.0
      %4364 = vmatmul.mubr.f32.gmra.mrb[0].mxu0 %v4264
      %v4365 = vpop.f32.mrb[0].mxu0
      %v4366 = vadd.f32 0.0, %v4365
      %v4367 = vpop.f32.mrb[0].mxu0
      %4368 = vmatprep.mubr.f32.mxu0 0.0
      %4369 = vmatmul.mubr.f32.gmra.mrb[0].mxu0 %v4267
      %v4370 = vpop.f32.mrb[0].mxu0
      %v4371 = vadd.f32 0.0, %v4370
      %v4372 = vpop.f32.mrb[0].mxu0
      %4373 = vdwg.mxu0
      %v4374 = vadd.f32 %v4216, %v4336
      %v4375 = vadd.f32 %v4217, %v4341
      %v4376 = vadd.f32 %v4218, %v4346
      %v4377 = vadd.f32 %v4219, %v4351
      %v4378 = vadd.f32 %v4220, %v4356
      %v4379 = vadd.f32 %v4221, %v4361
      %v4380 = vadd.f32 %v4222, %v4366
      %v4381 = vadd.f32 %v4223, %v4371
      %s4382 = scalar_lea.vmem %s5, 320
      %v4383 = vld [vmem:[%s4382] sm:$0xff]
      %v4384 = vld [vmem:[%s4382 + $0x8] sm:$0xff]
      %v4385 = vld [vmem:[%s4382 + $0x10] sm:$0xff]
      %v4386 = vld [vmem:[%s4382 + $0x18] sm:$0xff]
      %v4387 = vld [vmem:[%s4382 + $0x20] sm:$0xff]
      %v4388 = vld [vmem:[%s4382 + $0x28] sm:$0xff]
      %v4389 = vld [vmem:[%s4382 + $0x30] sm:$0xff]
      %v4390 = vld [vmem:[%s4382 + $0x38] sm:$0xff]
      %4395 = vrot.lane.b32.xlu0 %v3609, 3
      %v4396 = vpop.permute.xlu0 %4395
      %4397 = vrot.lane.b32.xlu0 %v3610, 3
      %v4398 = vpop.permute.xlu0 %4397
      %4399 = vrot.lane.b32.xlu0 %v3611, 3
      %v4400 = vpop.permute.xlu0 %4399
      %4401 = vrot.lane.b32.xlu0 %v3612, 3
      %v4402 = vpop.permute.xlu0 %4401
      %4403 = vrot.lane.b32.xlu0 %v3613, 3
      %v4404 = vpop.permute.xlu0 %4403
      %4405 = vrot.lane.b32.xlu0 %v3614, 3
      %v4406 = vpop.permute.xlu0 %4405
      %4407 = vrot.lane.b32.xlu0 %v3615, 3
      %v4408 = vpop.permute.xlu0 %4407
      %4409 = vrot.lane.b32.xlu0 %v3616, 3
      %v4410 = vpop.permute.xlu0 %4409
      %vm4411 = vcmask 23552
      %v4412 = vsel %vm4411, %v4396, %v4398
      %v4413 = vsel %vm4411, %v4400, %v4402
      %v4414 = vsel %vm4411, %v4404, %v4406
      %v4415 = vsel %vm4411, %v4408, %v4410
      %v4421 = vsel %vm973, %v4383, 0
      %v4424 = vsel %vm973, %v4384, 0
      %v4427 = vsel %vm973, %v4385, 0
      %v4430 = vsel %vm973, %v4386, 0
      %v4433 = vsel %vm973, %v4387, 0
      %v4436 = vsel %vm973, %v4388, 0
      %v4439 = vsel %vm973, %v4389, 0
      %v4442 = vsel %vm973, %v4390, 0
      %4444 = vmatprep.subr.mxu0 0.0
      %4445 = vmatpush1.msra.mxu0 %v4412
      %4446 = vmatprep.subr.mxu0 0.0
      %4447 = vmatpush1.msra.mxu0 %v4413
      %4448 = vmatprep.subr.mxu0 0.0
      %4449 = vmatpush1.msra.mxu0 %v4414
      %4450 = vmatprep.subr.mxu0 0.0
      %4451 = vmatpush1.msra.mxu0 %v4415
      %4452 = vmatprep.subr.mxu0 0.0
      %4453 = vmatpush1.msra.mxu0 0.0
      %4454 = vmatprep.subr.mxu0 0.0
      %4455 = vmatpush1.msra.mxu0 0.0
      %4456 = vmatprep.subr.mxu0 0.0
      %4457 = vmatpush1.msra.mxu0 0.0
      %4458 = vmatprep.subr.mxu0 0.0
      %4459 = vmatpush1.msra.mxu0 0.0
      %4460 = vmatprep.subr.mxu0 0.0
      %4461 = vmatpush1.msra.mxu0 0.0
      %4462 = vmatprep.subr.mxu0 0.0
      %4463 = vmatpush1.msra.mxu0 0.0
      %4464 = vmatprep.subr.mxu0 0.0
      %4465 = vmatpush1.msra.mxu0 0.0
      %4466 = vmatprep.subr.mxu0 0.0
      %4467 = vmatpush1.msra.mxu0 0.0
      %4468 = vmatprep.subr.mxu0 0.0
      %4469 = vmatpush1.msra.mxu0 0.0
      %4470 = vmatprep.subr.mxu0 0.0
      %4471 = vmatpush1.msra.mxu0 0.0
      %4472 = vmatprep.subr.mxu0 0.0
      %4473 = vmatpush1.msra.mxu0 0.0
      %4474 = vmatprep.subr.mxu0 0.0
      %4475 = vmatpush1.msra.mxu0 0.0
      %4476 = vmatprep.subr.mxu0 0.0
      %4477 = vmatpush1.msra.mxu0 0.0
      %4478 = vmatprep.subr.mxu0 0.0
      %4479 = vmatpush1.msra.mxu0 0.0
      %4480 = vmatprep.subr.mxu0 0.0
      %4481 = vmatpush1.msra.mxu0 0.0
      %4482 = vmatprep.subr.mxu0 0.0
      %4483 = vmatpush1.msra.mxu0 0.0
      %4484 = vmatprep.subr.mxu0 0.0
      %4485 = vmatpush1.msra.mxu0 0.0
      %4486 = vmatprep.subr.mxu0 0.0
      %4487 = vmatpush1.msra.mxu0 0.0
      %4488 = vmatprep.subr.mxu0 0.0
      %4489 = vmatpush1.msra.mxu0 0.0
      %4490 = vmatprep.subr.mxu0 0.0
      %4491 = vmatpush1.msra.mxu0 0.0
      %4492 = vmatprep.subr.mxu0 0.0
      %4493 = vmatpush1.msra.mxu0 0.0
      %4494 = vmatprep.subr.mxu0 0.0
      %4495 = vmatpush1.msra.mxu0 0.0
      %4496 = vmatprep.subr.mxu0 0.0
      %4497 = vmatpush1.msra.mxu0 0.0
      %4498 = vmatprep.subr.mxu0 0.0
      %4499 = vmatpush1.msra.mxu0 0.0
      %4500 = vmatprep.subr.mxu0 0.0
      %4501 = vmatpush1.msra.mxu0 0.0
      %4502 = vmatprep.subr.mxu0 0.0
      %4503 = vmatpush1.msra.mxu0 0.0
      %4504 = vmatprep.subr.mxu0 0.0
      %4505 = vmatpush1.msra.mxu0 0.0
      %4506 = vmatprep.subr.mxu0 0.0
      %4507 = vmatpush1.msra.mxu0 0.0
      %4508 = vmatprep.mubr.f32.mxu0 0.0
      %4509 = vmatmul.mubr.f32.gmra.mrb[0].mxu0 %v4421
      %v4510 = vpop.f32.mrb[0].mxu0
      %v4511 = vadd.f32 0.0, %v4510
      %v4512 = vpop.f32.mrb[0].mxu0
      %4513 = vmatprep.mubr.f32.mxu0 0.0
      %4514 = vmatmul.mubr.f32.gmra.mrb[0].mxu0 %v4424
      %v4515 = vpop.f32.mrb[0].mxu0
      %v4516 = vadd.f32 0.0, %v4515
      %v4517 = vpop.f32.mrb[0].mxu0
      %4518 = vmatprep.mubr.f32.mxu0 0.0
      %4519 = vmatmul.mubr.f32.gmra.mrb[0].mxu0 %v4427
      %v4520 = vpop.f32.mrb[0].mxu0
      %v4521 = vadd.f32 0.0, %v4520
      %v4522 = vpop.f32.mrb[0].mxu0
      %4523 = vmatprep.mubr.f32.mxu0 0.0
      %4524 = vmatmul.mubr.f32.gmra.mrb[0].mxu0 %v4430
      %v4525 = vpop.f32.mrb[0].mxu0
      %v4526 = vadd.f32 0.0, %v4525
      %v4527 = vpop.f32.mrb[0].mxu0
      %4528 = vmatprep.mubr.f32.mxu0 0.0
      %4529 = vmatmul.mubr.f32.gmra.mrb[0].mxu0 %v4433
      %v4530 = vpop.f32.mrb[0].mxu0
      %v4531 = vadd.f32 0.0, %v4530
      %v4532 = vpop.f32.mrb[0].mxu0
      %4533 = vmatprep.mubr.f32.mxu0 0.0
      %4534 = vmatmul.mubr.f32.gmra.mrb[0].mxu0 %v4436
      %v4535 = vpop.f32.mrb[0].mxu0
      %v4536 = vadd.f32 0.0, %v4535
      %v4537 = vpop.f32.mrb[0].mxu0
      %4538 = vmatprep.mubr.f32.mxu0 0.0
      %4539 = vmatmul.mubr.f32.gmra.mrb[0].mxu0 %v4439
      %v4540 = vpop.f32.mrb[0].mxu0
      %v4541 = vadd.f32 0.0, %v4540
      %v4542 = vpop.f32.mrb[0].mxu0
      %4543 = vmatprep.mubr.f32.mxu0 0.0
      %4544 = vmatmul.mubr.f32.gmra.mrb[0].mxu0 %v4442
      %v4545 = vpop.f32.mrb[0].mxu0
      %v4546 = vadd.f32 0.0, %v4545
      %v4547 = vpop.f32.mrb[0].mxu0
      %4548 = vdwg.mxu0
      %v4549 = vadd.f32 %v4374, %v4511
      %v4550 = vadd.f32 %v4375, %v4516
      %v4551 = vadd.f32 %v4376, %v4521
      %v4552 = vadd.f32 %v4377, %v4526
      %v4553 = vadd.f32 %v4378, %v4531
      %v4554 = vadd.f32 %v4379, %v4536
      %v4555 = vadd.f32 %v4380, %v4541
      %v4556 = vadd.f32 %v4381, %v4546
      %s4557 = scalar_lea.vmem %s5, 384
      %v4558 = vld [vmem:[%s4557] sm:$0xff]
      %v4559 = vld [vmem:[%s4557 + $0x8] sm:$0xff]
      %v4560 = vld [vmem:[%s4557 + $0x10] sm:$0xff]
      %v4561 = vld [vmem:[%s4557 + $0x18] sm:$0xff]
      %v4562 = vld [vmem:[%s4557 + $0x20] sm:$0xff]
      %v4563 = vld [vmem:[%s4557 + $0x28] sm:$0xff]
      %v4564 = vld [vmem:[%s4557 + $0x30] sm:$0xff]
      %v4565 = vld [vmem:[%s4557 + $0x38] sm:$0xff]
      %4566 = vrot.lane.b32.xlu0 %v3610, 106
      %v4567 = vpop.permute.xlu0 %4566
      %4568 = vrot.lane.b32.xlu0 %v3612, 106
      %v4569 = vpop.permute.xlu0 %4568
      %4570 = vrot.lane.b32.xlu0 %v3614, 106
      %v4571 = vpop.permute.xlu0 %4570
      %4572 = vrot.lane.b32.xlu0 %v3616, 106
      %v4573 = vpop.permute.xlu0 %4572
      %v4579 = vsel %vm973, %v4558, 0
      %v4582 = vsel %vm973, %v4559, 0
      %v4585 = vsel %vm973, %v4560, 0
      %v4588 = vsel %vm973, %v4561, 0
      %v4591 = vsel %vm973, %v4562, 0
      %v4594 = vsel %vm973, %v4563, 0
      %v4597 = vsel %vm973, %v4564, 0
      %v4600 = vsel %vm973, %v4565, 0
      %4602 = vmatprep.subr.mxu0 0.0
      %4603 = vmatpush1.msra.mxu0 %v4567
      %4604 = vmatprep.subr.mxu0 0.0
      %4605 = vmatpush1.msra.mxu0 %v4569
      %4606 = vmatprep.subr.mxu0 0.0
      %4607 = vmatpush1.msra.mxu0 %v4571
      %4608 = vmatprep.subr.mxu0 0.0
      %4609 = vmatpush1.msra.mxu0 %v4573
      %4610 = vmatprep.subr.mxu0 0.0
      %4611 = vmatpush1.msra.mxu0 0.0
      %4612 = vmatprep.subr.mxu0 0.0
      %4613 = vmatpush1.msra.mxu0 0.0
      %4614 = vmatprep.subr.mxu0 0.0
      %4615 = vmatpush1.msra.mxu0 0.0
      %4616 = vmatprep.subr.mxu0 0.0
      %4617 = vmatpush1.msra.mxu0 0.0
      %4618 = vmatprep.subr.mxu0 0.0
      %4619 = vmatpush1.msra.mxu0 0.0
      %4620 = vmatprep.subr.mxu0 0.0
      %4621 = vmatpush1.msra.mxu0 0.0
      %4622 = vmatprep.subr.mxu0 0.0
      %4623 = vmatpush1.msra.mxu0 0.0
      %4624 = vmatprep.subr.mxu0 0.0
      %4625 = vmatpush1.msra.mxu0 0.0
      %4626 = vmatprep.subr.mxu0 0.0
      %4627 = vmatpush1.msra.mxu0 0.0
      %4628 = vmatprep.subr.mxu0 0.0
      %4629 = vmatpush1.msra.mxu0 0.0
      %4630 = vmatprep.subr.mxu0 0.0
      %4631 = vmatpush1.msra.mxu0 0.0
      %4632 = vmatprep.subr.mxu0 0.0
      %4633 = vmatpush1.msra.mxu0 0.0
      %4634 = vmatprep.subr.mxu0 0.0
      %4635 = vmatpush1.msra.mxu0 0.0
      %4636 = vmatprep.subr.mxu0 0.0
      %4637 = vmatpush1.msra.mxu0 0.0
      %4638 = vmatprep.subr.mxu0 0.0
      %4639 = vmatpush1.msra.mxu0 0.0
      %4640 = vmatprep.subr.mxu0 0.0
      %4641 = vmatpush1.msra.mxu0 0.0
      %4642 = vmatprep.subr.mxu0 0.0
      %4643 = vmatpush1.msra.mxu0 0.0
      %4644 = vmatprep.subr.mxu0 0.0
      %4645 = vmatpush1.msra.mxu0 0.0
      %4646 = vmatprep.subr.mxu0 0.0
      %4647 = vmatpush1.msra.mxu0 0.0
      %4648 = vmatprep.subr.mxu0 0.0
      %4649 = vmatpush1.msra.mxu0 0.0
      %4650 = vmatprep.subr.mxu0 0.0
      %4651 = vmatpush1.msra.mxu0 0.0
      %4652 = vmatprep.subr.mxu0 0.0
      %4653 = vmatpush1.msra.mxu0 0.0
      %4654 = vmatprep.subr.mxu0 0.0
      %4655 = vmatpush1.msra.mxu0 0.0
      %4656 = vmatprep.subr.mxu0 0.0
      %4657 = vmatpush1.msra.mxu0 0.0
      %4658 = vmatprep.subr.mxu0 0.0
      %4659 = vmatpush1.msra.mxu0 0.0
      %4660 = vmatprep.subr.mxu0 0.0
      %4661 = vmatpush1.msra.mxu0 0.0
      %4662 = vmatprep.subr.mxu0 0.0
      %4663 = vmatpush1.msra.mxu0 0.0
      %4664 = vmatprep.subr.mxu0 0.0
      %4665 = vmatpush1.msra.mxu0 0.0
      %4666 = vmatprep.mubr.f32.mxu0 0.0
      %4667 = vmatmul.mubr.f32.gmra.mrb[0].mxu0 %v4579
      %v4668 = vpop.f32.mrb[0].mxu0
      %v4669 = vadd.f32 0.0, %v4668
      %v4670 = vpop.f32.mrb[0].mxu0
      %4671 = vmatprep.mubr.f32.mxu0 0.0
      %4672 = vmatmul.mubr.f32.gmra.mrb[0].mxu0 %v4582
      %v4673 = vpop.f32.mrb[0].mxu0
      %v4674 = vadd.f32 0.0, %v4673
      %v4675 = vpop.f32.mrb[0].mxu0
      %4676 = vmatprep.mubr.f32.mxu0 0.0
      %4677 = vmatmul.mubr.f32.gmra.mrb[0].mxu0 %v4585
      %v4678 = vpop.f32.mrb[0].mxu0
      %v4679 = vadd.f32 0.0, %v4678
      %v4680 = vpop.f32.mrb[0].mxu0
      %4681 = vmatprep.mubr.f32.mxu0 0.0
      %4682 = vmatmul.mubr.f32.gmra.mrb[0].mxu0 %v4588
      %v4683 = vpop.f32.mrb[0].mxu0
      %v4684 = vadd.f32 0.0, %v4683
      %v4685 = vpop.f32.mrb[0].mxu0
      %4686 = vmatprep.mubr.f32.mxu0 0.0
      %4687 = vmatmul.mubr.f32.gmra.mrb[0].mxu0 %v4591
      %v4688 = vpop.f32.mrb[0].mxu0
      %v4689 = vadd.f32 0.0, %v4688
      %v4690 = vpop.f32.mrb[0].mxu0
      %4691 = vmatprep.mubr.f32.mxu0 0.0
      %4692 = vmatmul.mubr.f32.gmra.mrb[0].mxu0 %v4594
      %v4693 = vpop.f32.mrb[0].mxu0
      %v4694 = vadd.f32 0.0, %v4693
      %v4695 = vpop.f32.mrb[0].mxu0
      %4696 = vmatprep.mubr.f32.mxu0 0.0
      %4697 = vmatmul.mubr.f32.gmra.mrb[0].mxu0 %v4597
      %v4698 = vpop.f32.mrb[0].mxu0
      %v4699 = vadd.f32 0.0, %v4698
      %v4700 = vpop.f32.mrb[0].mxu0
      %4701 = vmatprep.mubr.f32.mxu0 0.0
      %4702 = vmatmul.mubr.f32.gmra.mrb[0].mxu0 %v4600
      %v4703 = vpop.f32.mrb[0].mxu0
      %v4704 = vadd.f32 0.0, %v4703
      %v4705 = vpop.f32.mrb[0].mxu0
      %4706 = vdwg.mxu0
      %v4707 = vadd.f32 %v4549, %v4669
      %v4708 = vadd.f32 %v4550, %v4674
      %v4709 = vadd.f32 %v4551, %v4679
      %v4710 = vadd.f32 %v4552, %v4684
      %v4711 = vadd.f32 %v4553, %v4689
      %v4712 = vadd.f32 %v4554, %v4694
      %v4713 = vadd.f32 %v4555, %v4699
      %v4714 = vadd.f32 %v4556, %v4704
      %s4715 = scalar_lea.vmem %s5, 448
      %v4716 = vld [vmem:[%s4715] sm:$0xff]
      %v4717 = vld [vmem:[%s4715 + $0x8] sm:$0xff]
      %v4718 = vld [vmem:[%s4715 + $0x10] sm:$0xff]
      %v4719 = vld [vmem:[%s4715 + $0x18] sm:$0xff]
      %v4720 = vld [vmem:[%s4715 + $0x20] sm:$0xff]
      %v4721 = vld [vmem:[%s4715 + $0x28] sm:$0xff]
      %v4722 = vld [vmem:[%s4715 + $0x30] sm:$0xff]
      %v4723 = vld [vmem:[%s4715 + $0x38] sm:$0xff]
      %4724 = vrot.lane.b32.xlu0 %v3610, 81
      %v4725 = vpop.permute.xlu0 %4724
      %4726 = vrot.lane.b32.xlu0 %v3612, 81
      %v4727 = vpop.permute.xlu0 %4726
      %4728 = vrot.lane.b32.xlu0 %v3614, 81
      %v4729 = vpop.permute.xlu0 %4728
      %4730 = vrot.lane.b32.xlu0 %v3616, 81
      %v4731 = vpop.permute.xlu0 %4730
      %v4737 = vsel %vm973, %v4716, 0
      %v4740 = vsel %vm973, %v4717, 0
      %v4743 = vsel %vm973, %v4718, 0
      %v4746 = vsel %vm973, %v4719, 0
      %v4749 = vsel %vm973, %v4720, 0
      %v4752 = vsel %vm973, %v4721, 0
      %v4755 = vsel %vm973, %v4722, 0
      %v4758 = vsel %vm973, %v4723, 0
      %4760 = vmatprep.subr.mxu0 0.0
      %4761 = vmatpush1.msra.mxu0 %v4725
      %4762 = vmatprep.subr.mxu0 0.0
      %4763 = vmatpush1.msra.mxu0 %v4727
      %4764 = vmatprep.subr.mxu0 0.0
      %4765 = vmatpush1.msra.mxu0 %v4729
      %4766 = vmatprep.subr.mxu0 0.0
      %4767 = vmatpush1.msra.mxu0 %v4731
      %4768 = vmatprep.subr.mxu0 0.0
      %4769 = vmatpush1.msra.mxu0 0.0
      %4770 = vmatprep.subr.mxu0 0.0
      %4771 = vmatpush1.msra.mxu0 0.0
      %4772 = vmatprep.subr.mxu0 0.0
      %4773 = vmatpush1.msra.mxu0 0.0
      %4774 = vmatprep.subr.mxu0 0.0
      %4775 = vmatpush1.msra.mxu0 0.0
      %4776 = vmatprep.subr.mxu0 0.0
      %4777 = vmatpush1.msra.mxu0 0.0
      %4778 = vmatprep.subr.mxu0 0.0
      %4779 = vmatpush1.msra.mxu0 0.0
      %4780 = vmatprep.subr.mxu0 0.0
      %4781 = vmatpush1.msra.mxu0 0.0
      %4782 = vmatprep.subr.mxu0 0.0
      %4783 = vmatpush1.msra.mxu0 0.0
      %4784 = vmatprep.subr.mxu0 0.0
      %4785 = vmatpush1.msra.mxu0 0.0
      %4786 = vmatprep.subr.mxu0 0.0
      %4787 = vmatpush1.msra.mxu0 0.0
      %4788 = vmatprep.subr.mxu0 0.0
      %4789 = vmatpush1.msra.mxu0 0.0
      %4790 = vmatprep.subr.mxu0 0.0
      %4791 = vmatpush1.msra.mxu0 0.0
      %4792 = vmatprep.subr.mxu0 0.0
      %4793 = vmatpush1.msra.mxu0 0.0
      %4794 = vmatprep.subr.mxu0 0.0
      %4795 = vmatpush1.msra.mxu0 0.0
      %4796 = vmatprep.subr.mxu0 0.0
      %4797 = vmatpush1.msra.mxu0 0.0
      %4798 = vmatprep.subr.mxu0 0.0
      %4799 = vmatpush1.msra.mxu0 0.0
      %4800 = vmatprep.subr.mxu0 0.0
      %4801 = vmatpush1.msra.mxu0 0.0
      %4802 = vmatprep.subr.mxu0 0.0
      %4803 = vmatpush1.msra.mxu0 0.0
      %4804 = vmatprep.subr.mxu0 0.0
      %4805 = vmatpush1.msra.mxu0 0.0
      %4806 = vmatprep.subr.mxu0 0.0
      %4807 = vmatpush1.msra.mxu0 0.0
      %4808 = vmatprep.subr.mxu0 0.0
      %4809 = vmatpush1.msra.mxu0 0.0
      %4810 = vmatprep.subr.mxu0 0.0
      %4811 = vmatpush1.msra.mxu0 0.0
      %4812 = vmatprep.subr.mxu0 0.0
      %4813 = vmatpush1.msra.mxu0 0.0
      %4814 = vmatprep.subr.mxu0 0.0
      %4815 = vmatpush1.msra.mxu0 0.0
      %4816 = vmatprep.subr.mxu0 0.0
      %4817 = vmatpush1.msra.mxu0 0.0
      %4818 = vmatprep.subr.mxu0 0.0
      %4819 = vmatpush1.msra.mxu0 0.0
      %4820 = vmatprep.subr.mxu0 0.0
      %4821 = vmatpush1.msra.mxu0 0.0
      %4822 = vmatprep.subr.mxu0 0.0
      %4823 = vmatpush1.msra.mxu0 0.0
      %4824 = vmatprep.mubr.f32.mxu0 0.0
      %4825 = vmatmul.mubr.f32.gmra.mrb[0].mxu0 %v4737
      %v4826 = vpop.f32.mrb[0].mxu0
      %v4827 = vadd.f32 0.0, %v4826
      %v4828 = vpop.f32.mrb[0].mxu0
      %4829 = vmatprep.mubr.f32.mxu0 0.0
      %4830 = vmatmul.mubr.f32.gmra.mrb[0].mxu0 %v4740
      %v4831 = vpop.f32.mrb[0].mxu0
      %v4832 = vadd.f32 0.0, %v4831
      %v4833 = vpop.f32.mrb[0].mxu0
      %4834 = vmatprep.mubr.f32.mxu0 0.0
      %4835 = vmatmul.mubr.f32.gmra.mrb[0].mxu0 %v4743
      %v4836 = vpop.f32.mrb[0].mxu0
      %v4837 = vadd.f32 0.0, %v4836
      %v4838 = vpop.f32.mrb[0].mxu0
      %4839 = vmatprep.mubr.f32.mxu0 0.0
      %4840 = vmatmul.mubr.f32.gmra.mrb[0].mxu0 %v4746
      %v4841 = vpop.f32.mrb[0].mxu0
      %v4842 = vadd.f32 0.0, %v4841
      %v4843 = vpop.f32.mrb[0].mxu0
      %4844 = vmatprep.mubr.f32.mxu0 0.0
      %4845 = vmatmul.mubr.f32.gmra.mrb[0].mxu0 %v4749
      %v4846 = vpop.f32.mrb[0].mxu0
      %v4847 = vadd.f32 0.0, %v4846
      %v4848 = vpop.f32.mrb[0].mxu0
      %4849 = vmatprep.mubr.f32.mxu0 0.0
      %4850 = vmatmul.mubr.f32.gmra.mrb[0].mxu0 %v4752
      %v4851 = vpop.f32.mrb[0].mxu0
      %v4852 = vadd.f32 0.0, %v4851
      %v4853 = vpop.f32.mrb[0].mxu0
      %4854 = vmatprep.mubr.f32.mxu0 0.0
      %4855 = vmatmul.mubr.f32.gmra.mrb[0].mxu0 %v4755
      %v4856 = vpop.f32.mrb[0].mxu0
      %v4857 = vadd.f32 0.0, %v4856
      %v4858 = vpop.f32.mrb[0].mxu0
      %4859 = vmatprep.mubr.f32.mxu0 0.0
      %4860 = vmatmul.mubr.f32.gmra.mrb[0].mxu0 %v4758
      %v4861 = vpop.f32.mrb[0].mxu0
      %v4862 = vadd.f32 0.0, %v4861
      %v4863 = vpop.f32.mrb[0].mxu0
      %4864 = vdwg.mxu0
      %v4865 = vadd.f32 %v4707, %v4827
      %v4866 = vadd.f32 %v4708, %v4832
      %v4867 = vadd.f32 %v4709, %v4837
      %v4868 = vadd.f32 %v4710, %v4842
      %v4869 = vadd.f32 %v4711, %v4847
      %v4870 = vadd.f32 %v4712, %v4852
      %v4871 = vadd.f32 %v4713, %v4857
      %v4872 = vadd.f32 %v4714, %v4862
      %s4873 = scalar_lea.vmem %s5, 512
      %v4874 = vld [vmem:[%s4873] sm:$0xff]
      %v4875 = vld [vmem:[%s4873 + $0x8] sm:$0xff]
      %v4876 = vld [vmem:[%s4873 + $0x10] sm:$0xff]
      %v4877 = vld [vmem:[%s4873 + $0x18] sm:$0xff]
      %v4878 = vld [vmem:[%s4873 + $0x20] sm:$0xff]
      %v4879 = vld [vmem:[%s4873 + $0x28] sm:$0xff]
      %v4880 = vld [vmem:[%s4873 + $0x30] sm:$0xff]
      %v4881 = vld [vmem:[%s4873 + $0x38] sm:$0xff]
      %4882 = vrot.lane.b32.xlu0 %v3610, 56
      %v4883 = vpop.permute.xlu0 %4882
      %4884 = vrot.lane.b32.xlu0 %v3612, 56
      %v4885 = vpop.permute.xlu0 %4884
      %4886 = vrot.lane.b32.xlu0 %v3614, 56
      %v4887 = vpop.permute.xlu0 %4886
      %4888 = vrot.lane.b32.xlu0 %v3616, 56
      %v4889 = vpop.permute.xlu0 %4888
      %v4895 = vsel %vm973, %v4874, 0
      %v4898 = vsel %vm973, %v4875, 0
      %v4901 = vsel %vm973, %v4876, 0
      %v4904 = vsel %vm973, %v4877, 0
      %v4907 = vsel %vm973, %v4878, 0
      %v4910 = vsel %vm973, %v4879, 0
      %v4913 = vsel %vm973, %v4880, 0
      %v4916 = vsel %vm973, %v4881, 0
      %4918 = vmatprep.subr.mxu0 0.0
      %4919 = vmatpush1.msra.mxu0 %v4883
      %4920 = vmatprep.subr.mxu0 0.0
      %4921 = vmatpush1.msra.mxu0 %v4885
      %4922 = vmatprep.subr.mxu0 0.0
      %4923 = vmatpush1.msra.mxu0 %v4887
      %4924 = vmatprep.subr.mxu0 0.0
      %4925 = vmatpush1.msra.mxu0 %v4889
      %4926 = vmatprep.subr.mxu0 0.0
      %4927 = vmatpush1.msra.mxu0 0.0
      %4928 = vmatprep.subr.mxu0 0.0
      %4929 = vmatpush1.msra.mxu0 0.0
      %4930 = vmatprep.subr.mxu0 0.0
      %4931 = vmatpush1.msra.mxu0 0.0
      %4932 = vmatprep.subr.mxu0 0.0
      %4933 = vmatpush1.msra.mxu0 0.0
      %4934 = vmatprep.subr.mxu0 0.0
      %4935 = vmatpush1.msra.mxu0 0.0
      %4936 = vmatprep.subr.mxu0 0.0
      %4937 = vmatpush1.msra.mxu0 0.0
      %4938 = vmatprep.subr.mxu0 0.0
      %4939 = vmatpush1.msra.mxu0 0.0
      %4940 = vmatprep.subr.mxu0 0.0
      %4941 = vmatpush1.msra.mxu0 0.0
      %4942 = vmatprep.subr.mxu0 0.0
      %4943 = vmatpush1.msra.mxu0 0.0
      %4944 = vmatprep.subr.mxu0 0.0
      %4945 = vmatpush1.msra.mxu0 0.0
      %4946 = vmatprep.subr.mxu0 0.0
      %4947 = vmatpush1.msra.mxu0 0.0
      %4948 = vmatprep.subr.mxu0 0.0
      %4949 = vmatpush1.msra.mxu0 0.0
      %4950 = vmatprep.subr.mxu0 0.0
      %4951 = vmatpush1.msra.mxu0 0.0
      %4952 = vmatprep.subr.mxu0 0.0
      %4953 = vmatpush1.msra.mxu0 0.0
      %4954 = vmatprep.subr.mxu0 0.0
      %4955 = vmatpush1.msra.mxu0 0.0
      %4956 = vmatprep.subr.mxu0 0.0
      %4957 = vmatpush1.msra.mxu0 0.0
      %4958 = vmatprep.subr.mxu0 0.0
      %4959 = vmatpush1.msra.mxu0 0.0
      %4960 = vmatprep.subr.mxu0 0.0
      %4961 = vmatpush1.msra.mxu0 0.0
      %4962 = vmatprep.subr.mxu0 0.0
      %4963 = vmatpush1.msra.mxu0 0.0
      %4964 = vmatprep.subr.mxu0 0.0
      %4965 = vmatpush1.msra.mxu0 0.0
      %4966 = vmatprep.subr.mxu0 0.0
      %4967 = vmatpush1.msra.mxu0 0.0
      %4968 = vmatprep.subr.mxu0 0.0
      %4969 = vmatpush1.msra.mxu0 0.0
      %4970 = vmatprep.subr.mxu0 0.0
      %4971 = vmatpush1.msra.mxu0 0.0
      %4972 = vmatprep.subr.mxu0 0.0
      %4973 = vmatpush1.msra.mxu0 0.0
      %4974 = vmatprep.subr.mxu0 0.0
      %4975 = vmatpush1.msra.mxu0 0.0
      %4976 = vmatprep.subr.mxu0 0.0
      %4977 = vmatpush1.msra.mxu0 0.0
      %4978 = vmatprep.subr.mxu0 0.0
      %4979 = vmatpush1.msra.mxu0 0.0
      %4980 = vmatprep.subr.mxu0 0.0
      %4981 = vmatpush1.msra.mxu0 0.0
      %4982 = vmatprep.mubr.f32.mxu0 0.0
      %4983 = vmatmul.mubr.f32.gmra.mrb[0].mxu0 %v4895
      %v4984 = vpop.f32.mrb[0].mxu0
      %v4985 = vadd.f32 0.0, %v4984
      %v4986 = vpop.f32.mrb[0].mxu0
      %4987 = vmatprep.mubr.f32.mxu0 0.0
      %4988 = vmatmul.mubr.f32.gmra.mrb[0].mxu0 %v4898
      %v4989 = vpop.f32.mrb[0].mxu0
      %v4990 = vadd.f32 0.0, %v4989
      %v4991 = vpop.f32.mrb[0].mxu0
      %4992 = vmatprep.mubr.f32.mxu0 0.0
      %4993 = vmatmul.mubr.f32.gmra.mrb[0].mxu0 %v4901
      %v4994 = vpop.f32.mrb[0].mxu0
      %v4995 = vadd.f32 0.0, %v4994
      %v4996 = vpop.f32.mrb[0].mxu0
      %4997 = vmatprep.mubr.f32.mxu0 0.0
      %4998 = vmatmul.mubr.f32.gmra.mrb[0].mxu0 %v4904
      %v4999 = vpop.f32.mrb[0].mxu0
      %v5000 = vadd.f32 0.0, %v4999
      %v5001 = vpop.f32.mrb[0].mxu0
      %5002 = vmatprep.mubr.f32.mxu0 0.0
      %5003 = vmatmul.mubr.f32.gmra.mrb[0].mxu0 %v4907
      %v5004 = vpop.f32.mrb[0].mxu0
      %v5005 = vadd.f32 0.0, %v5004
      %v5006 = vpop.f32.mrb[0].mxu0
      %5007 = vmatprep.mubr.f32.mxu0 0.0
      %5008 = vmatmul.mubr.f32.gmra.mrb[0].mxu0 %v4910
      %v5009 = vpop.f32.mrb[0].mxu0
      %v5010 = vadd.f32 0.0, %v5009
      %v5011 = vpop.f32.mrb[0].mxu0
      %5012 = vmatprep.mubr.f32.mxu0 0.0
      %5013 = vmatmul.mubr.f32.gmra.mrb[0].mxu0 %v4913
      %v5014 = vpop.f32.mrb[0].mxu0
      %v5015 = vadd.f32 0.0, %v5014
      %v5016 = vpop.f32.mrb[0].mxu0
      %5017 = vmatprep.mubr.f32.mxu0 0.0
      %5018 = vmatmul.mubr.f32.gmra.mrb[0].mxu0 %v4916
      %v5019 = vpop.f32.mrb[0].mxu0
      %v5020 = vadd.f32 0.0, %v5019
      %v5021 = vpop.f32.mrb[0].mxu0
      %5022 = vdwg.mxu0
      %v5023 = vadd.f32 %v4865, %v4985
      %v5024 = vadd.f32 %v4866, %v4990
      %v5025 = vadd.f32 %v4867, %v4995
      %v5026 = vadd.f32 %v4868, %v5000
      %v5027 = vadd.f32 %v4869, %v5005
      %v5028 = vadd.f32 %v4870, %v5010
      %v5029 = vadd.f32 %v4871, %v5015
      %v5030 = vadd.f32 %v4872, %v5020
      %v5031 = vld [vmem:[%s6] sm:$0xff]
      %v5032 = vld [vmem:[%s6 + $0x8] sm:$0xff]
      %v5033 = vld [vmem:[%s6 + $0x10] sm:$0xff]
      %v5034 = vld [vmem:[%s6 + $0x18] sm:$0xff]
      %v5035 = vld [vmem:[%s6 + $0x20] sm:$0xff]
      %v5036 = vld [vmem:[%s6 + $0x28] sm:$0xff]
      %v5037 = vld [vmem:[%s6 + $0x30] sm:$0xff]
      %v5038 = vld [vmem:[%s6 + $0x38] sm:$0xff]
      %5040 = vset.pattern.permute.xlu0 0
      %5041 = vperm.xlu0 %5040, %v5031
      %v5042 = vpop.permute.xlu0 %5041
      %5045 = vset.pattern.permute.xlu0 0
      %5046 = vperm.xlu0 %5045, %v5032
      %v5047 = vpop.permute.xlu0 %5046
      %5050 = vset.pattern.permute.xlu0 0
      %5051 = vperm.xlu0 %5050, %v5033
      %v5052 = vpop.permute.xlu0 %5051
      %5055 = vset.pattern.permute.xlu0 0
      %5056 = vperm.xlu0 %5055, %v5034
      %v5057 = vpop.permute.xlu0 %5056
      %5060 = vset.pattern.permute.xlu0 0
      %5061 = vperm.xlu0 %5060, %v5035
      %v5062 = vpop.permute.xlu0 %5061
      %5065 = vset.pattern.permute.xlu0 0
      %5066 = vperm.xlu0 %5065, %v5036
      %v5067 = vpop.permute.xlu0 %5066
      %5070 = vset.pattern.permute.xlu0 0
      %5071 = vperm.xlu0 %5070, %v5037
      %v5072 = vpop.permute.xlu0 %5071
      %5075 = vset.pattern.permute.xlu0 0
      %5076 = vperm.xlu0 %5075, %v5038
      %v5077 = vpop.permute.xlu0 %5076
      %v5079 = vadd.f32 %v5023, %v5042
      %v5080 = vadd.f32 %v5024, %v5047
      %v5081 = vadd.f32 %v5025, %v5052
      %v5082 = vadd.f32 %v5026, %v5057
      %v5083 = vadd.f32 %v5027, %v5062
      %v5084 = vadd.f32 %v5028, %v5067
      %v5085 = vadd.f32 %v5029, %v5072
      %v5086 = vadd.f32 %v5030, %v5077
      %v5087 = vmax.f32 %v5079, 0.0
      %v5088 = vmax.f32 %v5080, 0.0
      %v5089 = vmax.f32 %v5081, 0.0
      %v5090 = vmax.f32 %v5082, 0.0
      %v5091 = vmax.f32 %v5083, 0.0
      %v5092 = vmax.f32 %v5084, 0.0
      %v5093 = vmax.f32 %v5085, 0.0
      %v5094 = vmax.f32 %v5086, 0.0
      %v5095 = vld [vmem:[%s7] sm:$0xff]
      %v5096 = vld [vmem:[%s7 + $0x8] sm:$0xff]
      %v5097 = vld [vmem:[%s7 + $0x10] sm:$0xff]
      %v5098 = vld [vmem:[%s7 + $0x18] sm:$0xff]
      %v5099 = vld [vmem:[%s7 + $0x20] sm:$0xff]
      %v5100 = vld [vmem:[%s7 + $0x28] sm:$0xff]
      %v5101 = vld [vmem:[%s7 + $0x30] sm:$0xff]
      %v5102 = vld [vmem:[%s7 + $0x38] sm:$0xff]
      %v5103 = vmul.f32 %v5087, %v5095
      %v5104 = vmul.f32 %v5088, %v5096
      %v5105 = vmul.f32 %v5089, %v5097
      %v5106 = vmul.f32 %v5090, %v5098
      %v5107 = vmul.f32 %v5091, %v5099
      %v5108 = vmul.f32 %v5092, %v5100
      %v5109 = vmul.f32 %v5093, %v5101
      %v5110 = vmul.f32 %v5094, %v5102
      %vm5111 = vcmask 203776
      %v5112 = vsel %vm5111, %v5103, 0.0
      %v5113 = vsel %vm5111, %v5104, 0.0
      %v5114 = vadd.f32 %v5112, %v5113
      %v5115 = vsel %vm5111, %v5105, 0.0
      %v5116 = vadd.f32 %v5114, %v5115
      %v5117 = vsel %vm5111, %v5106, 0.0
      %v5118 = vadd.f32 %v5116, %v5117
      %v5119 = vsel %vm5111, %v5107, 0.0
      %v5120 = vadd.f32 %v5118, %v5119
      %v5121 = vsel %vm5111, %v5108, 0.0
      %v5122 = vadd.f32 %v5120, %v5121
      %v5123 = vsel %vm5111, %v5109, 0.0
      %v5124 = vadd.f32 %v5122, %v5123
      %v5125 = vsel %vm5111, %v5110, 0.0
      %v5126 = vadd.f32 %v5124, %v5125
      %5127 = vadd.xlane.f32.xlu0 %v5126
      %v5128 = vpop.xlane.xlu0 %5127
      %v5129 = vrot.slane %v5128, 4
      %v5130 = vadd.f32 %v5128, %v5129
      %v5131 = vrot.slane %v5130, 2
      %v5132 = vadd.f32 %v5130, %v5131
      %v5133 = vrot.slane %v5132, 1
      %v5134 = vadd.f32 %v5132, %v5133
      %s5135 = vtos %v5134
      %v5136 = vstv %s5135
      %v5137 = vld [vmem:[#allocation2] sm:$0x1]
      %v5138 = vadd.f32 %v5136, %v5137
      %5140 = vset.pattern.permute.xlu0 0
      %5141 = vperm.xlu0 %5140, %v5138
      %v5142 = vpop.permute.xlu0 %5141
      %v5144 = vlaneseq
      %v5145 = vshrl.u32 %v5144, 7
      %v5146 = vsub.s32 0, %v5145
      %v5147 = vrot.slane %v5142, %v5146
      %5148 = vst [vmem:[%s330] sm:$0x1] %v5147
      %p5149 = scmp.lt.s32.totalorder %s22, 3
      %s5150 = scalar_select %p5149, %s22, 3
      %s5151 = scalar_lea.vmem %s9, %s5150
      // Predicated region
      $region57: #{text_classifier2_forward.1} parent=55 // pred_check
        %p5152 = pneg %p234
      $region58: #{text_classifier2_forward.1} parent=55 // pred_check_branch
        %5154 = sbr.rel (%p5152) target = $region60
      $region59: #{text_classifier2_forward.1} parent=55 // pred_region
        _
      $region60: #{text_classifier2_forward.1} parent=55 // pred_fallthru
        _
    $region56: #{text_classifier2_forward.1} parent=5 // pred_fallthru
      _
    %p5155 = scmp.le.s32.totalorder 2, %s17
    // Predicated region
    $region61: #{text_classifier2_forward.1} parent=5 // pred_check
      %p5156 = pneg %p5155
    $region62: #{text_classifier2_forward.1} parent=5 // pred_check_branch
      %5158 = sbr.rel (%p5156) target = $region64
    $region63: #{text_classifier2_forward.1} parent=5 // pred_region
      %s5159 = ssub.s32 %s17, 2
      // Predicated region
      $region65: #{text_classifier2_forward.1} parent=63 // pred_check
        %p5160 = pneg %p240
      $region66: #{text_classifier2_forward.1} parent=63 // pred_check_branch
        %5162 = sbr.rel (%p5160) target = $region68
      $region67: #{text_classifier2_forward.1} parent=63 // pred_region
        %p5163 = scmp.lt.s32.totalorder %s23, 3
        %s5164 = scalar_select %p5163, %s23, 3
        %s5165 = scalar_lea.vmem %s9, %s5164
      $region68: #{text_classifier2_forward.1} parent=63 // pred_fallthru
        _
    $region64: #{text_classifier2_forward.1} parent=5 // pred_fallthru
      _
  $region6: #{text_classifier2_forward.1} parent=0 // loop_footer
    %s21 = sadd.s32 1, %s17
  $region7: #{text_classifier2_forward.1} parent=0 // loop_footer_branch
    %16 = sbr.rel target = $region3
  $region8: #{text_classifier2_forward.1} parent=0 // loop_exit
    _

</llo_original>
